<compile_context>
chip_gen: v7x
topology: tpu7x:2x2x1
jax: 0.10.0
libtpu: 0.0.40
codegen_flags: <defaults>
</compile_context>

<pallas_src>
import functools

import jax
import jax.numpy as jnp
from jax.experimental import pallas as pl
from jax.experimental.pallas import tpu as pltpu


def _round_up(x, m):
    return ((x + m - 1) // m) * m


def _vmem_limit_bytes():
    """Generation-aware scoped-VMEM limit: ~96 MiB on v5e/v6e (128 MiB phys),
    ~48 MiB on v7x (64 MiB phys).  Safe fallback if the query is unavailable."""
    try:
        cap = int(pltpu.get_tpu_info().vmem_capacity_bytes)
    except Exception:  # older jax / query unavailable -> conservative default
        cap = 64 * 1024 * 1024
    return min((cap * 3) // 4, 100 * 1024 * 1024)


def cbow_fused_kernel(idx_ref, emb_ref,
                      w1_ref, b1_ref,
                      w2_ref, b2_ref,
                      w3_ref, b3_ref,
                      w4_ref, b4_ref,
                      w5_ref, b5_ref,
                      out_ref):
    """Fused forward for one (TM, *) batch tile:
    one-hot embedding gather (MXU) -> 5 dense layers (bf16 x bf16 -> f32 acc)
    with ReLU -> log_softmax epilogue, all on VMEM-resident data."""
    idx = idx_ref[...]            # (TM, C) int32 batch tile of context indices
    emb = emb_ref[...]            # (V, E)  bf16, VMEM-resident table
    tm, c = idx.shape
    v = emb.shape[0]

    # --- Fused embedding gather ------------------------------------------
    # One-hot matmul gather: exact (each row selects exactly one bf16
    # embedding row), robust to lower on Mosaic, no HBM round trip.
    iota = jax.lax.broadcasted_iota(jnp.int32, (tm, v), 1)   # hoisted once
    cols = []
    for j in range(c):                                       # C is small & static
        onehot = (iota == idx[:, j:j + 1]).astype(jnp.bfloat16)       # (TM, V)
        cols.append(jnp.dot(onehot, emb,
                            preferred_element_type=jnp.float32))      # (TM, E)
    # Same row-major flattening as PyTorch's embeds.view(-1, C*E).
    x = jnp.concatenate(cols, axis=-1).astype(jnp.bfloat16)           # (TM, C*E)

    # --- 5-layer MLP: bf16 MXU operands, f32 accumulation ------------------
    def dense(x_bf16, w_ref, b_ref):
        return jnp.dot(x_bf16, w_ref[...],
                       preferred_element_type=jnp.float32) + b_ref[...]

    h = jnp.maximum(dense(x, w1_ref, b1_ref), 0.0).astype(jnp.bfloat16)
    h = jnp.maximum(dense(h, w2_ref, b2_ref), 0.0).astype(jnp.bfloat16)
    h = jnp.maximum(dense(h, w3_ref, b3_ref), 0.0).astype(jnp.bfloat16)
    h = jnp.maximum(dense(h, w4_ref, b4_ref), 0.0).astype(jnp.bfloat16)
    logits = dense(h, w5_ref, b5_ref)                                  # f32

    # --- Numerically stable log_softmax along the lane (vocab) axis, f32 ----
    # TODO(synk): for realistic vocab (tens of thousands), add a lane-dense
    #             vocab grid axis for w5/b5/out plus an online (two-pass)
    #             log_softmax with VMEM scratch; mandatory on v7x (64 MiB).
    m = jnp.max(logits, axis=-1, keepdims=True)
    shifted = logits - m
    lse = jnp.log(jnp.sum(jnp.exp(shifted), axis=-1, keepdims=True))
    out_ref[...] = (shifted - lse).astype(out_ref.dtype)


@functools.partial(jax.jit, static_argnames=("tm",))
def cbow_forward(context_idxs, params, *, tm=256):
    """Full CBOW forward in one pallas_call (gather + MLP + log_softmax)."""
    emb = params["embeddings"].astype(jnp.bfloat16)   # bf16 table: half the bytes
    B, C = context_idxs.shape
    V, E = emb.shape
    in1 = C * E
    hidden = params["w1"].shape[1]
    vocab = params["w5"].shape[1]

    # Batch tile policy (see header): multiple of 16, capped at `tm`.
    tm_eff = min(tm, _round_up(B, 16))
    b_pad = _round_up(B, tm_eff)
    idx = context_idxs.astype(jnp.int32)
    if b_pad != B:
        # Padded rows gather embedding row 0 -> finite garbage log-probs,
        # sliced off below; no shared scratch, so they cannot pollute anything.
        idx = jnp.pad(idx, ((0, b_pad - B), (0, 0)))
    num_tiles = b_pad // tm_eff

    def wbf16(name):
        return params[name].astype(jnp.bfloat16)

    def resident(shape):
        # Constant index_map -> DMA'd once, stays VMEM-resident across the
        # grid; pl.Buffered(1) single-buffers it (no point double-buffering
        # an operand whose window never changes).
        return pl.BlockSpec(shape, lambda i: (0, 0), pipeline_mode=pl.Buffered(1))

    grid_spec = pl.GridSpec(
        grid=(num_tiles,),
        in_specs=[
            pl.BlockSpec((tm_eff, C), lambda i: (i, 0)),        # context indices
            resident((V, E)),                                   # embedding table
            resident((in1, hidden)), resident((1, hidden)),     # w1, b1
            resident((hidden, hidden)), resident((1, hidden)),  # w2, b2
            resident((hidden, hidden)), resident((1, hidden)),  # w3, b3
            resident((hidden, hidden)), resident((1, hidden)),  # w4, b4
            resident((hidden, vocab)), resident((1, vocab)),    # w5, b5
        ],
        out_specs=pl.BlockSpec((tm_eff, vocab), lambda i: (i, 0)),
    )

    mm_flops = 2 * b_pad * (C * V * E                      # one-hot gather
                            + in1 * hidden + 3 * hidden * hidden + hidden * vocab)
    bytes_accessed = (
        b_pad * C * 4                                                 # indices
        + V * E * 2                                                   # emb (bf16)
        + (in1 * hidden + 3 * hidden * hidden + hidden * vocab) * 2   # weights
        + (4 * hidden + vocab) * 4                                    # biases
        + b_pad * vocab * 4                                           # out (f32)
    )
    cost = pl.CostEstimate(
        flops=mm_flops,
        transcendentals=b_pad * vocab + b_pad,   # exp + log in the epilogue
        bytes_accessed=bytes_accessed,
    )

    # TODO(synk): if the consumer is NLLLoss, fuse the per-row target gather so
    #             the kernel emits (B, 1) losses (or emit bf16 log-probs) to
    #             shrink the output HBM stream at realistic vocab sizes.
    log_probs = pl.pallas_call(
        cbow_fused_kernel,
        out_shape=jax.ShapeDtypeStruct((b_pad, vocab), jnp.float32),
        grid_spec=grid_spec,
        compiler_params=pltpu.CompilerParams(
            dimension_semantics=("parallel",),       # batch tiles -> both TCs on v7x
            vmem_limit_bytes=_vmem_limit_bytes(),
        ),
        cost_estimate=cost,
    )(idx, emb,
      wbf16("w1"), params["b1"],
      wbf16("w2"), params["b2"],
      wbf16("w3"), params["b3"],
      wbf16("w4"), params["b4"],
      wbf16("w5"), params["b5"])

    return log_probs[:B]


def cbow_reference(context_idxs, params):
    """Pure-JAX reference with the same dtype policy (bf16 operands, f32 acc)."""
    emb = params["embeddings"].astype(jnp.bfloat16)
    B, C = context_idxs.shape
    E = emb.shape[1]
    h = jnp.take(emb, context_idxs, axis=0).reshape(B, C * E)

    def dense(x, w, b):
        return jnp.dot(x, w.astype(jnp.bfloat16),
                       preferred_element_type=jnp.float32) + b

    h = jnp.maximum(dense(h, params["w1"], params["b1"]), 0.0).astype(jnp.bfloat16)
    h = jnp.maximum(dense(h, params["w2"], params["b2"]), 0.0).astype(jnp.bfloat16)
    h = jnp.maximum(dense(h, params["w3"], params["b3"]), 0.0).astype(jnp.bfloat16)
    h = jnp.maximum(dense(h, params["w4"], params["b4"]), 0.0).astype(jnp.bfloat16)
    logits = dense(h, params["w5"], params["b5"])
    return jax.nn.log_softmax(logits, axis=-1)


def init_params(key, vocab_size, embedding_dim, context_width, hidden_dim):
    """Deterministic synthetic parameters (shapes match the PyTorch module).
    Linear weights are stored pre-transposed as (in_features, out_features)."""
    in1 = context_width * 2 * embedding_dim
    ks = jax.random.split(key, 11)

    def lin(kw, kb, fan_in, fan_out):
        bound = 1.0 / jnp.sqrt(fan_in)
        w = jax.random.uniform(kw, (fan_in, fan_out), jnp.float32, -bound, bound)
        b = jax.random.uniform(kb, (1, fan_out), jnp.float32, -bound, bound)
        return w, b

    params = {}
    params["embeddings"] = jax.random.normal(ks[0], (vocab_size, embedding_dim),
                                             jnp.float32)
    params["w1"], params["b1"] = lin(ks[1], ks[2], in1, hidden_dim)
    params["w2"], params["b2"] = lin(ks[3], ks[4], hidden_dim, hidden_dim)
    params["w3"], params["b3"] = lin(ks[5], ks[6], hidden_dim, hidden_dim)
    params["w4"], params["b4"] = lin(ks[7], ks[8], hidden_dim, hidden_dim)
    params["w5"], params["b5"] = lin(ks[9], ks[10], hidden_dim, vocab_size)
    return params


if __name__ == "__main__":
    VOCAB_SIZE = 128
    EMBEDDING_DIM = 32
    CONTEXT_WIDTH = 2          # -> 2*CONTEXT_WIDTH = 4 context tokens
    HIDDEN_DIM = 128
    BATCH = 512                # 2 batch tiles of 256 -> exercises grid + megacore

    key = jax.random.PRNGKey(0)
    kp, kx = jax.random.split(key)
    params = init_params(kp, VOCAB_SIZE, EMBEDDING_DIM, CONTEXT_WIDTH, HIDDEN_DIM)

    context_idxs = jax.random.randint(
        kx, (BATCH, 2 * CONTEXT_WIDTH), 0, VOCAB_SIZE, dtype=jnp.int32)

    log_probs = cbow_forward(context_idxs, params, tm=256)
    log_probs = jax.block_until_ready(log_probs)

    assert log_probs.shape == (BATCH, VOCAB_SIZE)
    # Sanity 1: rows of exp(log_probs) sum to ~1.
    row_sums = jnp.exp(log_probs).sum(axis=1)
    assert bool(jnp.all(jnp.abs(row_sums - 1.0) < 1e-4)), "row sums off"
    # Sanity 2: matches a pure-JAX reference with the same dtype policy.
    ref = jax.block_until_ready(cbow_reference(context_idxs, params))
    assert bool(jnp.max(jnp.abs(log_probs - ref)) < 2e-3), "mismatch vs reference"

    print("KERNEL_OK")
</pallas_src>

<mosaic_0001>
module attributes {stable_mosaic.version = 11 : i64} {
  func.func @cbow_fused_kernel(%arg0: i32, %arg1: memref<256x4xi32, #tpu.memory_space<vmem>>, %arg2: memref<128x32xbf16, #tpu.memory_space<vmem>>, %arg3: memref<128x128xbf16, #tpu.memory_space<vmem>>, %arg4: memref<1x128xf32, #tpu.memory_space<vmem>>, %arg5: memref<128x128xbf16, #tpu.memory_space<vmem>>, %arg6: memref<1x128xf32, #tpu.memory_space<vmem>>, %arg7: memref<128x128xbf16, #tpu.memory_space<vmem>>, %arg8: memref<1x128xf32, #tpu.memory_space<vmem>>, %arg9: memref<128x128xbf16, #tpu.memory_space<vmem>>, %arg10: memref<1x128xf32, #tpu.memory_space<vmem>>, %arg11: memref<128x128xbf16, #tpu.memory_space<vmem>>, %arg12: memref<1x128xf32, #tpu.memory_space<vmem>>, %arg13: memref<256x128xf32, #tpu.memory_space<vmem>>) attributes {dimension_semantics = [#tpu.dimension_semantics<parallel>], iteration_bounds = array<i64: 2>, scalar_prefetch = 0 : i64, scratch_operands = 0 : i64, tpu.core_type = #tpu.core_type<tc>, window_params = [{transform_indices = @transform_0, window_bounds = array<i64: 256, 4>}, {pipeline_mode = #tpu.pipeline_mode<synchronous>, transform_indices = @transform_1, window_bounds = array<i64: 128, 32>}, {pipeline_mode = #tpu.pipeline_mode<synchronous>, transform_indices = @transform_2, window_bounds = array<i64: 128, 128>}, {pipeline_mode = #tpu.pipeline_mode<synchronous>, transform_indices = @transform_3, window_bounds = array<i64: 1, 128>}, {pipeline_mode = #tpu.pipeline_mode<synchronous>, transform_indices = @transform_4, window_bounds = array<i64: 128, 128>}, {pipeline_mode = #tpu.pipeline_mode<synchronous>, transform_indices = @transform_5, window_bounds = array<i64: 1, 128>}, {pipeline_mode = #tpu.pipeline_mode<synchronous>, transform_indices = @transform_6, window_bounds = array<i64: 128, 128>}, {pipeline_mode = #tpu.pipeline_mode<synchronous>, transform_indices = @transform_7, window_bounds = array<i64: 1, 128>}, {pipeline_mode = #tpu.pipeline_mode<synchronous>, transform_indices = @transform_8, window_bounds = array<i64: 128, 128>}, {pipeline_mode = #tpu.pipeline_mode<synchronous>, transform_indices = @transform_9, window_bounds = array<i64: 1, 128>}, {pipeline_mode = #tpu.pipeline_mode<synchronous>, transform_indices = @transform_10, window_bounds = array<i64: 128, 128>}, {pipeline_mode = #tpu.pipeline_mode<synchronous>, transform_indices = @transform_11, window_bounds = array<i64: 1, 128>}, {transform_indices = @transform_12, window_bounds = array<i64: 256, 128>}]} {
    %c0 = arith.constant 0 : index
    %c0_0 = arith.constant 0 : index
    %0 = vector.load %arg1[%c0, %c0_0] : memref<256x4xi32, #tpu.memory_space<vmem>>, vector<256x4xi32>
    %c0_1 = arith.constant 0 : index
    %c0_2 = arith.constant 0 : index
    %1 = vector.load %arg2[%c0_1, %c0_2] : memref<128x32xbf16, #tpu.memory_space<vmem>>, vector<128x32xbf16>
    %2 = tpu.iota {dimensions = array<i32: 1>} : vector<256x128xi32>
    %3 = vector.extract_strided_slice %0 {offsets = [0, 0], sizes = [256, 1], strides = [1, 1]} : vector<256x4xi32> to vector<256x1xi32>
    %4 = vector.broadcast %3 : vector<256x1xi32> to vector<256x128xi32>
    %5 = arith.cmpi eq, %2, %4 : vector<256x128xi32>
    %6 = arith.extui %5 : vector<256x128xi1> to vector<256x128xi32>
    %7 = arith.sitofp %6 : vector<256x128xi32> to vector<256x128xf32>
    %8 = arith.truncf %7 : vector<256x128xf32> to vector<256x128xbf16>
    %cst = arith.constant dense<0.000000e+00> : vector<256x32xf32>
    %9 = tpu.matmul %8, %1, %cst {dimension_numbers = #tpu.dot_dimension_numbers<[1], [0], [0], [1], [0, 0, 1, 1], [], []>} : vector<256x128xbf16>, vector<128x32xbf16>, vector<256x32xf32> -> vector<256x32xf32>
    %10 = vector.extract_strided_slice %0 {offsets = [0, 1], sizes = [256, 1], strides = [1, 1]} : vector<256x4xi32> to vector<256x1xi32>
    %11 = vector.broadcast %10 : vector<256x1xi32> to vector<256x128xi32>
    %12 = arith.cmpi eq, %2, %11 : vector<256x128xi32>
    %13 = arith.extui %12 : vector<256x128xi1> to vector<256x128xi32>
    %14 = arith.sitofp %13 : vector<256x128xi32> to vector<256x128xf32>
    %15 = arith.truncf %14 : vector<256x128xf32> to vector<256x128xbf16>
    %cst_3 = arith.constant dense<0.000000e+00> : vector<256x32xf32>
    %16 = tpu.matmul %15, %1, %cst_3 {dimension_numbers = #tpu.dot_dimension_numbers<[1], [0], [0], [1], [0, 0, 1, 1], [], []>} : vector<256x128xbf16>, vector<128x32xbf16>, vector<256x32xf32> -> vector<256x32xf32>
    %17 = vector.extract_strided_slice %0 {offsets = [0, 2], sizes = [256, 1], strides = [1, 1]} : vector<256x4xi32> to vector<256x1xi32>
    %18 = vector.broadcast %17 : vector<256x1xi32> to vector<256x128xi32>
    %19 = arith.cmpi eq, %2, %18 : vector<256x128xi32>
    %20 = arith.extui %19 : vector<256x128xi1> to vector<256x128xi32>
    %21 = arith.sitofp %20 : vector<256x128xi32> to vector<256x128xf32>
    %22 = arith.truncf %21 : vector<256x128xf32> to vector<256x128xbf16>
    %cst_4 = arith.constant dense<0.000000e+00> : vector<256x32xf32>
    %23 = tpu.matmul %22, %1, %cst_4 {dimension_numbers = #tpu.dot_dimension_numbers<[1], [0], [0], [1], [0, 0, 1, 1], [], []>} : vector<256x128xbf16>, vector<128x32xbf16>, vector<256x32xf32> -> vector<256x32xf32>
    %24 = vector.extract_strided_slice %0 {offsets = [0, 3], sizes = [256, 1], strides = [1, 1]} : vector<256x4xi32> to vector<256x1xi32>
    %25 = vector.broadcast %24 : vector<256x1xi32> to vector<256x128xi32>
    %26 = arith.cmpi eq, %2, %25 : vector<256x128xi32>
    %27 = arith.extui %26 : vector<256x128xi1> to vector<256x128xi32>
    %28 = arith.sitofp %27 : vector<256x128xi32> to vector<256x128xf32>
    %29 = arith.truncf %28 : vector<256x128xf32> to vector<256x128xbf16>
    %cst_5 = arith.constant dense<0.000000e+00> : vector<256x32xf32>
    %30 = tpu.matmul %29, %1, %cst_5 {dimension_numbers = #tpu.dot_dimension_numbers<[1], [0], [0], [1], [0, 0, 1, 1], [], []>} : vector<256x128xbf16>, vector<128x32xbf16>, vector<256x32xf32> -> vector<256x32xf32>
    %31 = tpu.concatenate %9, %16, %23, %30 in 1 : vector<256x32xf32>, vector<256x32xf32>, vector<256x32xf32>, vector<256x32xf32> -> vector<256x128xf32>
    %32 = arith.truncf %31 : vector<256x128xf32> to vector<256x128xbf16>
    %c0_6 = arith.constant 0 : index
    %c0_7 = arith.constant 0 : index
    %33 = vector.load %arg3[%c0_6, %c0_7] : memref<128x128xbf16, #tpu.memory_space<vmem>>, vector<128x128xbf16>
    %cst_8 = arith.constant dense<0.000000e+00> : vector<256x128xf32>
    %34 = tpu.matmul %32, %33, %cst_8 {dimension_numbers = #tpu.dot_dimension_numbers<[1], [0], [0], [1], [0, 0, 1, 1], [], []>} : vector<256x128xbf16>, vector<128x128xbf16>, vector<256x128xf32> -> vector<256x128xf32>
    %c0_9 = arith.constant 0 : index
    %c0_10 = arith.constant 0 : index
    %35 = vector.load %arg4[%c0_9, %c0_10] : memref<1x128xf32, #tpu.memory_space<vmem>>, vector<1x128xf32>
    %36 = vector.broadcast %35 : vector<1x128xf32> to vector<256x128xf32>
    %37 = arith.addf %34, %36 : vector<256x128xf32>
    %cst_11 = arith.constant 0.000000e+00 : f32
    %38 = vector.broadcast %cst_11 : f32 to vector<256x128xf32>
    %39 = arith.maximumf %37, %38 : vector<256x128xf32>
    %40 = arith.truncf %39 : vector<256x128xf32> to vector<256x128xbf16>
    %c0_12 = arith.constant 0 : index
    %c0_13 = arith.constant 0 : index
    %41 = vector.load %arg5[%c0_12, %c0_13] : memref<128x128xbf16, #tpu.memory_space<vmem>>, vector<128x128xbf16>
    %cst_14 = arith.constant dense<0.000000e+00> : vector<256x128xf32>
    %42 = tpu.matmul %40, %41, %cst_14 {dimension_numbers = #tpu.dot_dimension_numbers<[1], [0], [0], [1], [0, 0, 1, 1], [], []>} : vector<256x128xbf16>, vector<128x128xbf16>, vector<256x128xf32> -> vector<256x128xf32>
    %c0_15 = arith.constant 0 : index
    %c0_16 = arith.constant 0 : index
    %43 = vector.load %arg6[%c0_15, %c0_16] : memref<1x128xf32, #tpu.memory_space<vmem>>, vector<1x128xf32>
    %44 = vector.broadcast %43 : vector<1x128xf32> to vector<256x128xf32>
    %45 = arith.addf %42, %44 : vector<256x128xf32>
    %cst_17 = arith.constant 0.000000e+00 : f32
    %46 = vector.broadcast %cst_17 : f32 to vector<256x128xf32>
    %47 = arith.maximumf %45, %46 : vector<256x128xf32>
    %48 = arith.truncf %47 : vector<256x128xf32> to vector<256x128xbf16>
    %c0_18 = arith.constant 0 : index
    %c0_19 = arith.constant 0 : index
    %49 = vector.load %arg7[%c0_18, %c0_19] : memref<128x128xbf16, #tpu.memory_space<vmem>>, vector<128x128xbf16>
    %cst_20 = arith.constant dense<0.000000e+00> : vector<256x128xf32>
    %50 = tpu.matmul %48, %49, %cst_20 {dimension_numbers = #tpu.dot_dimension_numbers<[1], [0], [0], [1], [0, 0, 1, 1], [], []>} : vector<256x128xbf16>, vector<128x128xbf16>, vector<256x128xf32> -> vector<256x128xf32>
    %c0_21 = arith.constant 0 : index
    %c0_22 = arith.constant 0 : index
    %51 = vector.load %arg8[%c0_21, %c0_22] : memref<1x128xf32, #tpu.memory_space<vmem>>, vector<1x128xf32>
    %52 = vector.broadcast %51 : vector<1x128xf32> to vector<256x128xf32>
    %53 = arith.addf %50, %52 : vector<256x128xf32>
    %cst_23 = arith.constant 0.000000e+00 : f32
    %54 = vector.broadcast %cst_23 : f32 to vector<256x128xf32>
    %55 = arith.maximumf %53, %54 : vector<256x128xf32>
    %56 = arith.truncf %55 : vector<256x128xf32> to vector<256x128xbf16>
    %c0_24 = arith.constant 0 : index
    %c0_25 = arith.constant 0 : index
    %57 = vector.load %arg9[%c0_24, %c0_25] : memref<128x128xbf16, #tpu.memory_space<vmem>>, vector<128x128xbf16>
    %cst_26 = arith.constant dense<0.000000e+00> : vector<256x128xf32>
    %58 = tpu.matmul %56, %57, %cst_26 {dimension_numbers = #tpu.dot_dimension_numbers<[1], [0], [0], [1], [0, 0, 1, 1], [], []>} : vector<256x128xbf16>, vector<128x128xbf16>, vector<256x128xf32> -> vector<256x128xf32>
    %c0_27 = arith.constant 0 : index
    %c0_28 = arith.constant 0 : index
    %59 = vector.load %arg10[%c0_27, %c0_28] : memref<1x128xf32, #tpu.memory_space<vmem>>, vector<1x128xf32>
    %60 = vector.broadcast %59 : vector<1x128xf32> to vector<256x128xf32>
    %61 = arith.addf %58, %60 : vector<256x128xf32>
    %cst_29 = arith.constant 0.000000e+00 : f32
    %62 = vector.broadcast %cst_29 : f32 to vector<256x128xf32>
    %63 = arith.maximumf %61, %62 : vector<256x128xf32>
    %64 = arith.truncf %63 : vector<256x128xf32> to vector<256x128xbf16>
    %c0_30 = arith.constant 0 : index
    %c0_31 = arith.constant 0 : index
    %65 = vector.load %arg11[%c0_30, %c0_31] : memref<128x128xbf16, #tpu.memory_space<vmem>>, vector<128x128xbf16>
    %cst_32 = arith.constant dense<0.000000e+00> : vector<256x128xf32>
    %66 = tpu.matmul %64, %65, %cst_32 {dimension_numbers = #tpu.dot_dimension_numbers<[1], [0], [0], [1], [0, 0, 1, 1], [], []>} : vector<256x128xbf16>, vector<128x128xbf16>, vector<256x128xf32> -> vector<256x128xf32>
    %c0_33 = arith.constant 0 : index
    %c0_34 = arith.constant 0 : index
    %67 = vector.load %arg12[%c0_33, %c0_34] : memref<1x128xf32, #tpu.memory_space<vmem>>, vector<1x128xf32>
    %68 = vector.broadcast %67 : vector<1x128xf32> to vector<256x128xf32>
    %69 = arith.addf %66, %68 : vector<256x128xf32>
    %cst_35 = arith.constant dense<0xFF800000> : vector<256xf32>
    %70 = vector.multi_reduction <maximumf>, %69, %cst_35 [1] : vector<256x128xf32> to vector<256xf32>
    %71 = vector.shape_cast %70 : vector<256xf32> to vector<256x1xf32>
    %72 = vector.broadcast %71 : vector<256x1xf32> to vector<256x128xf32>
    %73 = arith.subf %69, %72 : vector<256x128xf32>
    %74 = math.exp %73 : vector<256x128xf32>
    %cst_36 = arith.constant dense<0.000000e+00> : vector<256xf32>
    %75 = vector.multi_reduction <add>, %74, %cst_36 [1] : vector<256x128xf32> to vector<256xf32>
    %76 = vector.shape_cast %75 : vector<256xf32> to vector<256x1xf32>
    %77 = math.log %76 : vector<256x1xf32>
    %78 = vector.broadcast %77 : vector<256x1xf32> to vector<256x128xf32>
    %79 = arith.subf %73, %78 : vector<256x128xf32>
    %c0_37 = arith.constant 0 : index
    %c0_38 = arith.constant 0 : index
    %80 = vector.load %arg13[%c0_37, %c0_38] : memref<256x128xf32, #tpu.memory_space<vmem>>, vector<256x128xf32>
    tpu.vector_store %arg13[%c0_37, %c0_38], %79 {strides = array<i32>} : memref<256x128xf32, #tpu.memory_space<vmem>>, vector<256x128xf32>,
    return
  }
  func.func @transform_0(%arg0: i32) -> (i32, i32) {
    %c0_i32 = arith.constant 0 : i32
    %c0_i32_0 = arith.constant 0 : i32
    return %arg0, %c0_i32 : i32, i32
  }
  func.func @transform_1(%arg0: i32) -> (i32, i32) {
    %c0_i32 = arith.constant 0 : i32
    %c0_i32_0 = arith.constant 0 : i32
    %c0_i32_1 = arith.constant 0 : i32
    return %c0_i32, %c0_i32_0 : i32, i32
  }
  func.func @transform_2(%arg0: i32) -> (i32, i32) {
    %c0_i32 = arith.constant 0 : i32
    %c0_i32_0 = arith.constant 0 : i32
    %c0_i32_1 = arith.constant 0 : i32
    return %c0_i32, %c0_i32_0 : i32, i32
  }
  func.func @transform_3(%arg0: i32) -> (i32, i32) {
    %c0_i32 = arith.constant 0 : i32
    %c0_i32_0 = arith.constant 0 : i32
    %c0_i32_1 = arith.constant 0 : i32
    return %c0_i32, %c0_i32_0 : i32, i32
  }
  func.func @transform_4(%arg0: i32) -> (i32, i32) {
    %c0_i32 = arith.constant 0 : i32
    %c0_i32_0 = arith.constant 0 : i32
    %c0_i32_1 = arith.constant 0 : i32
    return %c0_i32, %c0_i32_0 : i32, i32
  }
  func.func @transform_5(%arg0: i32) -> (i32, i32) {
    %c0_i32 = arith.constant 0 : i32
    %c0_i32_0 = arith.constant 0 : i32
    %c0_i32_1 = arith.constant 0 : i32
    return %c0_i32, %c0_i32_0 : i32, i32
  }
  func.func @transform_6(%arg0: i32) -> (i32, i32) {
    %c0_i32 = arith.constant 0 : i32
    %c0_i32_0 = arith.constant 0 : i32
    %c0_i32_1 = arith.constant 0 : i32
    return %c0_i32, %c0_i32_0 : i32, i32
  }
  func.func @transform_7(%arg0: i32) -> (i32, i32) {
    %c0_i32 = arith.constant 0 : i32
    %c0_i32_0 = arith.constant 0 : i32
    %c0_i32_1 = arith.constant 0 : i32
    return %c0_i32, %c0_i32_0 : i32, i32
  }
  func.func @transform_8(%arg0: i32) -> (i32, i32) {
    %c0_i32 = arith.constant 0 : i32
    %c0_i32_0 = arith.constant 0 : i32
    %c0_i32_1 = arith.constant 0 : i32
    return %c0_i32, %c0_i32_0 : i32, i32
  }
  func.func @transform_9(%arg0: i32) -> (i32, i32) {
    %c0_i32 = arith.constant 0 : i32
    %c0_i32_0 = arith.constant 0 : i32
    %c0_i32_1 = arith.constant 0 : i32
    return %c0_i32, %c0_i32_0 : i32, i32
  }
  func.func @transform_10(%arg0: i32) -> (i32, i32) {
    %c0_i32 = arith.constant 0 : i32
    %c0_i32_0 = arith.constant 0 : i32
    %c0_i32_1 = arith.constant 0 : i32
    return %c0_i32, %c0_i32_0 : i32, i32
  }
  func.func @transform_11(%arg0: i32) -> (i32, i32) {
    %c0_i32 = arith.constant 0 : i32
    %c0_i32_0 = arith.constant 0 : i32
    %c0_i32_1 = arith.constant 0 : i32
    return %c0_i32, %c0_i32_0 : i32, i32
  }
  func.func @transform_12(%arg0: i32) -> (i32, i32) {
    %c0_i32 = arith.constant 0 : i32
    %c0_i32_0 = arith.constant 0 : i32
    return %arg0, %c0_i32 : i32, i32
  }
}

</mosaic_0001>

<llo_original>
// kernel: cbow_forward.1
$region0: #{cbow_forward.1}
  #allocation0 [shape = 'u32[]', space=smem, size = 0x4, offset = 0x4, fixed_abs, tag = 'smem constant byte address 0x4 - core index']
  #allocation1 [shape = 'u32[144,128]{1,0:T(1,128)}', space=vmem, size = 0x12000, scoped, tag = 'internal scratch']
  %s0 = inlined_call_operand.vmem [shape: s32[512,4], index: 0, kind: input, shape index: {}]
  %s1 = inlined_call_operand.vmem [shape: bf16[128,32], index: 1, kind: input, shape index: {}]
  %s2 = inlined_call_operand.vmem [shape: bf16[128,128], index: 2, kind: input, shape index: {}]
  %s3 = inlined_call_operand.vmem [shape: f32[1,128], index: 3, kind: input, shape index: {}]
  %s4 = inlined_call_operand.vmem [shape: bf16[128,128], index: 4, kind: input, shape index: {}]
  %s5 = inlined_call_operand.vmem [shape: f32[1,128], index: 5, kind: input, shape index: {}]
  %s6 = inlined_call_operand.vmem [shape: bf16[128,128], index: 6, kind: input, shape index: {}]
  %s7 = inlined_call_operand.vmem [shape: f32[1,128], index: 7, kind: input, shape index: {}]
  %s8 = inlined_call_operand.vmem [shape: bf16[128,128], index: 8, kind: input, shape index: {}]
  %s9 = inlined_call_operand.vmem [shape: f32[1,128], index: 9, kind: input, shape index: {}]
  %s10 = inlined_call_operand.vmem [shape: bf16[128,128], index: 10, kind: input, shape index: {}]
  %s11 = inlined_call_operand.vmem [shape: f32[1,128], index: 11, kind: input, shape index: {}]
  %s12 = inlined_call_operand.hbm [shape: f32[512,128], index: 12, kind: output, shape index: {}]
  %s13 = sld [smem:[#allocation0]]
  $region81: #{cbow_forward.1} parent=0
    _
  %s15 = ssub.s32 1, %s13
  %s16 = scalar_select 0, %s15, %s13
  $region1: #{cbow_forward.1} parent=0
    #allocation2 [shape = 'u8[262144]{0}', space=vmem, size = 0x40000, scoped, tag = 'output window, operand 0']
    #allocation3 [shape = 's32[2]{0}', space=sflag, size = 0x8, scoped, tag = 'scoped memory for cbow_forward.1']
    %17 = vsyncpa [#allocation3], 0
    %s18 = scalar_lea.sflag [#allocation3], 1
    %19 = vsyncpa %s18, 0
    loop: start=0, step=1, limit=4
    $region2: #{cbow_forward.1} parent=1 // loop_pre_header
      _
    $region3: #{cbow_forward.1} parent=1 // loop_header
      %s21 = sphi 0, %s25
      %p22 = scmp.ge.s32.totalorder %s21, 4
      %s31 = sphi 0, %s33
      %s34 = sphi 0, %s31
      %s35 = sphi 0, %s34
      %s51 = sphi 0, %s35
      %s55 = sphi 0, %s55
      %s57 = sphi 0, %s55
      %s58 = sphi 0, %s57
      %s72 = sphi 0, %s58
      %s76 = sphi 0, %s76
      %s78 = sphi 0, %s76
      %s79 = sphi 0, %s78
      %s93 = sphi 0, %s79
      %s97 = sphi 0, %s97
      %s99 = sphi 0, %s97
      %s100 = sphi 0, %s99
      %s114 = sphi 0, %s100
      %s118 = sphi 0, %s118
      %s120 = sphi 0, %s118
      %s121 = sphi 0, %s120
      %s135 = sphi 0, %s121
      %s139 = sphi 0, %s139
      %s141 = sphi 0, %s139
      %s142 = sphi 0, %s141
      %s156 = sphi 0, %s142
      %s160 = sphi 0, %s160
      %s162 = sphi 0, %s160
      %s163 = sphi 0, %s162
      %s177 = sphi 0, %s163
      %s181 = sphi 0, %s181
      %s183 = sphi 0, %s181
      %s184 = sphi 0, %s183
      %s198 = sphi 0, %s184
      %s202 = sphi 0, %s202
      %s204 = sphi 0, %s202
      %s205 = sphi 0, %s204
      %s219 = sphi 0, %s205
      %s223 = sphi 0, %s223
      %s225 = sphi 0, %s223
      %s226 = sphi 0, %s225
      %s240 = sphi 0, %s226
      %s244 = sphi 0, %s244
      %s246 = sphi 0, %s244
      %s247 = sphi 0, %s246
      %s261 = sphi 0, %s247
      %s265 = sphi 0, %s265
      %s267 = sphi 0, %s265
      %s268 = sphi 0, %s267
      %s282 = sphi 0, %s268
      %s288 = sphi 0, %s290
      %s291 = sphi 0, %s288
      %s292 = sphi 0, %s291
      %s308 = sphi 0, %s292
    $region4: #{cbow_forward.1} parent=1 // loop_header_branch
      %24 = sbr.rel (%p22) target = $region8
    $region5: #{cbow_forward.1} parent=1 // loop_body
      %s26 = ssub.s32 %s21, 1
      %s27 = ssub.s32 %s21, 2
      %s28 = sadd.s32 %s21, 1
      %s29 = ssub.s32 %s21, %s28
      %p30 = scmp.eq.s32.totalorder %s29, 0
      %s32 = sadd.s32 %s31, 1
      %s33 = scalar_select %p30, %s31, %s32
      %p36 = pneg %p30
      %p37 = scmp.eq.s32.totalorder %s21, 1
      %p38 = por %p36, %p37
      %p39 = scmp.ne.s32.totalorder %s31, %s34
      %p40 = scmp.eq.s32.totalorder %s21, 0
      %p41 = por %p39, %p40
      %p42 = scmp.ne.s32.totalorder %s31, %s34
      %p43 = scmp.eq.s32.totalorder %s26, 1
      %p44 = por %p42, %p43
      %p45 = scmp.ne.s32.totalorder %s34, %s35
      %p46 = scmp.eq.s32.totalorder %s26, 0
      %p47 = por %p45, %p46
      %p48 = scmp.ne.s32.totalorder %s34, %s35
      %p49 = scmp.eq.s32.totalorder %s27, 1
      %p50 = por %p48, %p49
      %p52 = scmp.ne.s32.totalorder %s35, %s51
      %p53 = scmp.eq.s32.totalorder %s27, 0
      %p54 = por %p52, %p53
      %s56 = sadd.s32 %s55, 1
      %p59 = scmp.eq.s32.totalorder %s21, 1
      %p60 = scmp.ne.s32.totalorder %s55, %s57
      %p61 = scmp.eq.s32.totalorder %s21, 0
      %p62 = por %p60, %p61
      %p63 = scmp.ne.s32.totalorder %s55, %s57
      %p64 = scmp.eq.s32.totalorder %s26, 1
      %p65 = por %p63, %p64
      %p66 = scmp.ne.s32.totalorder %s57, %s58
      %p67 = scmp.eq.s32.totalorder %s26, 0
      %p68 = por %p66, %p67
      %p69 = scmp.ne.s32.totalorder %s57, %s58
      %p70 = scmp.eq.s32.totalorder %s27, 1
      %p71 = por %p69, %p70
      %p73 = scmp.ne.s32.totalorder %s58, %s72
      %p74 = scmp.eq.s32.totalorder %s27, 0
      %p75 = por %p73, %p74
      %s77 = sadd.s32 %s76, 1
      %p80 = scmp.eq.s32.totalorder %s21, 1
      %p81 = scmp.ne.s32.totalorder %s76, %s78
      %p82 = scmp.eq.s32.totalorder %s21, 0
      %p83 = por %p81, %p82
      %p84 = scmp.ne.s32.totalorder %s76, %s78
      %p85 = scmp.eq.s32.totalorder %s26, 1
      %p86 = por %p84, %p85
      %p87 = scmp.ne.s32.totalorder %s78, %s79
      %p88 = scmp.eq.s32.totalorder %s26, 0
      %p89 = por %p87, %p88
      %p90 = scmp.ne.s32.totalorder %s78, %s79
      %p91 = scmp.eq.s32.totalorder %s27, 1
      %p92 = por %p90, %p91
      %p94 = scmp.ne.s32.totalorder %s79, %s93
      %p95 = scmp.eq.s32.totalorder %s27, 0
      %p96 = por %p94, %p95
      %s98 = sadd.s32 %s97, 1
      %p101 = scmp.eq.s32.totalorder %s21, 1
      %p102 = scmp.ne.s32.totalorder %s97, %s99
      %p103 = scmp.eq.s32.totalorder %s21, 0
      %p104 = por %p102, %p103
      %p105 = scmp.ne.s32.totalorder %s97, %s99
      %p106 = scmp.eq.s32.totalorder %s26, 1
      %p107 = por %p105, %p106
      %p108 = scmp.ne.s32.totalorder %s99, %s100
      %p109 = scmp.eq.s32.totalorder %s26, 0
      %p110 = por %p108, %p109
      %p111 = scmp.ne.s32.totalorder %s99, %s100
      %p112 = scmp.eq.s32.totalorder %s27, 1
      %p113 = por %p111, %p112
      %p115 = scmp.ne.s32.totalorder %s100, %s114
      %p116 = scmp.eq.s32.totalorder %s27, 0
      %p117 = por %p115, %p116
      %s119 = sadd.s32 %s118, 1
      %p122 = scmp.eq.s32.totalorder %s21, 1
      %p123 = scmp.ne.s32.totalorder %s118, %s120
      %p124 = scmp.eq.s32.totalorder %s21, 0
      %p125 = por %p123, %p124
      %p126 = scmp.ne.s32.totalorder %s118, %s120
      %p127 = scmp.eq.s32.totalorder %s26, 1
      %p128 = por %p126, %p127
      %p129 = scmp.ne.s32.totalorder %s120, %s121
      %p130 = scmp.eq.s32.totalorder %s26, 0
      %p131 = por %p129, %p130
      %p132 = scmp.ne.s32.totalorder %s120, %s121
      %p133 = scmp.eq.s32.totalorder %s27, 1
      %p134 = por %p132, %p133
      %p136 = scmp.ne.s32.totalorder %s121, %s135
      %p137 = scmp.eq.s32.totalorder %s27, 0
      %p138 = por %p136, %p137
      %s140 = sadd.s32 %s139, 1
      %p143 = scmp.eq.s32.totalorder %s21, 1
      %p144 = scmp.ne.s32.totalorder %s139, %s141
      %p145 = scmp.eq.s32.totalorder %s21, 0
      %p146 = por %p144, %p145
      %p147 = scmp.ne.s32.totalorder %s139, %s141
      %p148 = scmp.eq.s32.totalorder %s26, 1
      %p149 = por %p147, %p148
      %p150 = scmp.ne.s32.totalorder %s141, %s142
      %p151 = scmp.eq.s32.totalorder %s26, 0
      %p152 = por %p150, %p151
      %p153 = scmp.ne.s32.totalorder %s141, %s142
      %p154 = scmp.eq.s32.totalorder %s27, 1
      %p155 = por %p153, %p154
      %p157 = scmp.ne.s32.totalorder %s142, %s156
      %p158 = scmp.eq.s32.totalorder %s27, 0
      %p159 = por %p157, %p158
      %s161 = sadd.s32 %s160, 1
      %p164 = scmp.eq.s32.totalorder %s21, 1
      %p165 = scmp.ne.s32.totalorder %s160, %s162
      %p166 = scmp.eq.s32.totalorder %s21, 0
      %p167 = por %p165, %p166
      %p168 = scmp.ne.s32.totalorder %s160, %s162
      %p169 = scmp.eq.s32.totalorder %s26, 1
      %p170 = por %p168, %p169
      %p171 = scmp.ne.s32.totalorder %s162, %s163
      %p172 = scmp.eq.s32.totalorder %s26, 0
      %p173 = por %p171, %p172
      %p174 = scmp.ne.s32.totalorder %s162, %s163
      %p175 = scmp.eq.s32.totalorder %s27, 1
      %p176 = por %p174, %p175
      %p178 = scmp.ne.s32.totalorder %s163, %s177
      %p179 = scmp.eq.s32.totalorder %s27, 0
      %p180 = por %p178, %p179
      %s182 = sadd.s32 %s181, 1
      %p185 = scmp.eq.s32.totalorder %s21, 1
      %p186 = scmp.ne.s32.totalorder %s181, %s183
      %p187 = scmp.eq.s32.totalorder %s21, 0
      %p188 = por %p186, %p187
      %p189 = scmp.ne.s32.totalorder %s181, %s183
      %p190 = scmp.eq.s32.totalorder %s26, 1
      %p191 = por %p189, %p190
      %p192 = scmp.ne.s32.totalorder %s183, %s184
      %p193 = scmp.eq.s32.totalorder %s26, 0
      %p194 = por %p192, %p193
      %p195 = scmp.ne.s32.totalorder %s183, %s184
      %p196 = scmp.eq.s32.totalorder %s27, 1
      %p197 = por %p195, %p196
      %p199 = scmp.ne.s32.totalorder %s184, %s198
      %p200 = scmp.eq.s32.totalorder %s27, 0
      %p201 = por %p199, %p200
      %s203 = sadd.s32 %s202, 1
      %p206 = scmp.eq.s32.totalorder %s21, 1
      %p207 = scmp.ne.s32.totalorder %s202, %s204
      %p208 = scmp.eq.s32.totalorder %s21, 0
      %p209 = por %p207, %p208
      %p210 = scmp.ne.s32.totalorder %s202, %s204
      %p211 = scmp.eq.s32.totalorder %s26, 1
      %p212 = por %p210, %p211
      %p213 = scmp.ne.s32.totalorder %s204, %s205
      %p214 = scmp.eq.s32.totalorder %s26, 0
      %p215 = por %p213, %p214
      %p216 = scmp.ne.s32.totalorder %s204, %s205
      %p217 = scmp.eq.s32.totalorder %s27, 1
      %p218 = por %p216, %p217
      %p220 = scmp.ne.s32.totalorder %s205, %s219
      %p221 = scmp.eq.s32.totalorder %s27, 0
      %p222 = por %p220, %p221
      %s224 = sadd.s32 %s223, 1
      %p227 = scmp.eq.s32.totalorder %s21, 1
      %p228 = scmp.ne.s32.totalorder %s223, %s225
      %p229 = scmp.eq.s32.totalorder %s21, 0
      %p230 = por %p228, %p229
      %p231 = scmp.ne.s32.totalorder %s223, %s225
      %p232 = scmp.eq.s32.totalorder %s26, 1
      %p233 = por %p231, %p232
      %p234 = scmp.ne.s32.totalorder %s225, %s226
      %p235 = scmp.eq.s32.totalorder %s26, 0
      %p236 = por %p234, %p235
      %p237 = scmp.ne.s32.totalorder %s225, %s226
      %p238 = scmp.eq.s32.totalorder %s27, 1
      %p239 = por %p237, %p238
      %p241 = scmp.ne.s32.totalorder %s226, %s240
      %p242 = scmp.eq.s32.totalorder %s27, 0
      %p243 = por %p241, %p242
      %s245 = sadd.s32 %s244, 1
      %p248 = scmp.eq.s32.totalorder %s21, 1
      %p249 = scmp.ne.s32.totalorder %s244, %s246
      %p250 = scmp.eq.s32.totalorder %s21, 0
      %p251 = por %p249, %p250
      %p252 = scmp.ne.s32.totalorder %s244, %s246
      %p253 = scmp.eq.s32.totalorder %s26, 1
      %p254 = por %p252, %p253
      %p255 = scmp.ne.s32.totalorder %s246, %s247
      %p256 = scmp.eq.s32.totalorder %s26, 0
      %p257 = por %p255, %p256
      %p258 = scmp.ne.s32.totalorder %s246, %s247
      %p259 = scmp.eq.s32.totalorder %s27, 1
      %p260 = por %p258, %p259
      %p262 = scmp.ne.s32.totalorder %s247, %s261
      %p263 = scmp.eq.s32.totalorder %s27, 0
      %p264 = por %p262, %p263
      %s266 = sadd.s32 %s265, 1
      %p269 = scmp.eq.s32.totalorder %s21, 1
      %p270 = scmp.ne.s32.totalorder %s265, %s267
      %p271 = scmp.eq.s32.totalorder %s21, 0
      %p272 = por %p270, %p271
      %p273 = scmp.ne.s32.totalorder %s265, %s267
      %p274 = scmp.eq.s32.totalorder %s26, 1
      %p275 = por %p273, %p274
      %p276 = scmp.ne.s32.totalorder %s267, %s268
      %p277 = scmp.eq.s32.totalorder %s26, 0
      %p278 = por %p276, %p277
      %p279 = scmp.ne.s32.totalorder %s267, %s268
      %p280 = scmp.eq.s32.totalorder %s27, 1
      %p281 = por %p279, %p280
      %p283 = scmp.ne.s32.totalorder %s268, %s282
      %p284 = scmp.eq.s32.totalorder %s27, 0
      %p285 = por %p283, %p284
      %s286 = ssub.s32 %s21, %s28
      %p287 = scmp.eq.s32.totalorder %s286, 0
      %s289 = sadd.s32 %s288, 1
      %s290 = scalar_select %p287, %s288, %s289
      %p293 = pneg %p287
      %p294 = scmp.eq.s32.totalorder %s21, 1
      %p295 = por %p293, %p294
      %p296 = scmp.ne.s32.totalorder %s288, %s291
      %p297 = scmp.eq.s32.totalorder %s21, 0
      %p298 = por %p296, %p297
      %p299 = scmp.ne.s32.totalorder %s288, %s291
      %p300 = scmp.eq.s32.totalorder %s26, 1
      %p301 = por %p299, %p300
      %p302 = scmp.ne.s32.totalorder %s291, %s292
      %p303 = scmp.eq.s32.totalorder %s26, 0
      %p304 = por %p302, %p303
      %p305 = scmp.ne.s32.totalorder %s291, %s292
      %p306 = scmp.eq.s32.totalorder %s27, 1
      %p307 = por %p305, %p306
      %p309 = scmp.ne.s32.totalorder %s292, %s308
      %p310 = scmp.eq.s32.totalorder %s27, 0
      %p311 = por %p309, %p310
      %p312 = scmp.le.s32.totalorder 1, %s21
      %p313 = scmp.lt.s32.totalorder %s21, 3
      %p314 = pnand %p312, %p313
      %p315 = pneg %p314
      // Predicated region
      $region9: #{cbow_forward.1} parent=5 // pred_check
        _
      $region10: #{cbow_forward.1} parent=5 // pred_check_branch
        %317 = sbr.rel (%p314) target = $region12
      $region11: #{cbow_forward.1} parent=5 // pred_region
        %s318 = ssub.s32 %s21, 1
        // Predicated region
        $region13: #{cbow_forward.1} parent=11 // pred_check
          %p319 = pneg %p68
        $region14: #{cbow_forward.1} parent=11 // pred_check_branch
          %321 = sbr.rel (%p319) target = $region16
        $region15: #{cbow_forward.1} parent=11 // pred_region
          _
        $region16: #{cbow_forward.1} parent=11 // pred_fallthru
          _
        // Predicated region
        $region17: #{cbow_forward.1} parent=11 // pred_check
          %p322 = pneg %p89
        $region18: #{cbow_forward.1} parent=11 // pred_check_branch
          %324 = sbr.rel (%p322) target = $region20
        $region19: #{cbow_forward.1} parent=11 // pred_region
          _
        $region20: #{cbow_forward.1} parent=11 // pred_fallthru
          _
        // Predicated region
        $region21: #{cbow_forward.1} parent=11 // pred_check
          %p325 = pneg %p110
        $region22: #{cbow_forward.1} parent=11 // pred_check_branch
          %327 = sbr.rel (%p325) target = $region24
        $region23: #{cbow_forward.1} parent=11 // pred_region
          _
        $region24: #{cbow_forward.1} parent=11 // pred_fallthru
          _
        // Predicated region
        $region25: #{cbow_forward.1} parent=11 // pred_check
          %p328 = pneg %p131
        $region26: #{cbow_forward.1} parent=11 // pred_check_branch
          %330 = sbr.rel (%p328) target = $region28
        $region27: #{cbow_forward.1} parent=11 // pred_region
          _
        $region28: #{cbow_forward.1} parent=11 // pred_fallthru
          _
        // Predicated region
        $region29: #{cbow_forward.1} parent=11 // pred_check
          %p331 = pneg %p152
        $region30: #{cbow_forward.1} parent=11 // pred_check_branch
          %333 = sbr.rel (%p331) target = $region32
        $region31: #{cbow_forward.1} parent=11 // pred_region
          _
        $region32: #{cbow_forward.1} parent=11 // pred_fallthru
          _
        // Predicated region
        $region33: #{cbow_forward.1} parent=11 // pred_check
          %p334 = pneg %p173
        $region34: #{cbow_forward.1} parent=11 // pred_check_branch
          %336 = sbr.rel (%p334) target = $region36
        $region35: #{cbow_forward.1} parent=11 // pred_region
          _
        $region36: #{cbow_forward.1} parent=11 // pred_fallthru
          _
        // Predicated region
        $region37: #{cbow_forward.1} parent=11 // pred_check
          %p337 = pneg %p194
        $region38: #{cbow_forward.1} parent=11 // pred_check_branch
          %339 = sbr.rel (%p337) target = $region40
        $region39: #{cbow_forward.1} parent=11 // pred_region
          _
        $region40: #{cbow_forward.1} parent=11 // pred_fallthru
          _
        // Predicated region
        $region41: #{cbow_forward.1} parent=11 // pred_check
          %p340 = pneg %p215
        $region42: #{cbow_forward.1} parent=11 // pred_check_branch
          %342 = sbr.rel (%p340) target = $region44
        $region43: #{cbow_forward.1} parent=11 // pred_region
          _
        $region44: #{cbow_forward.1} parent=11 // pred_fallthru
          _
        // Predicated region
        $region45: #{cbow_forward.1} parent=11 // pred_check
          %p343 = pneg %p236
        $region46: #{cbow_forward.1} parent=11 // pred_check_branch
          %345 = sbr.rel (%p343) target = $region48
        $region47: #{cbow_forward.1} parent=11 // pred_region
          _
        $region48: #{cbow_forward.1} parent=11 // pred_fallthru
          _
        // Predicated region
        $region49: #{cbow_forward.1} parent=11 // pred_check
          %p346 = pneg %p257
        $region50: #{cbow_forward.1} parent=11 // pred_check_branch
          %348 = sbr.rel (%p346) target = $region52
        $region51: #{cbow_forward.1} parent=11 // pred_region
          _
        $region52: #{cbow_forward.1} parent=11 // pred_fallthru
          _
        // Predicated region
        $region53: #{cbow_forward.1} parent=11 // pred_check
          %p349 = pneg %p278
        $region54: #{cbow_forward.1} parent=11 // pred_check_branch
          %351 = sbr.rel (%p349) target = $region56
        $region55: #{cbow_forward.1} parent=11 // pred_region
          _
        $region56: #{cbow_forward.1} parent=11 // pred_fallthru
          _
      $region12: #{cbow_forward.1} parent=5 // pred_fallthru
        _
      %p352 = scmp.lt.s32.totalorder %s21, 2
      // Predicated region
      $region57: #{cbow_forward.1} parent=5 // pred_check
        %p353 = pneg %p352
      $region58: #{cbow_forward.1} parent=5 // pred_check_branch
        %355 = sbr.rel (%p353) target = $region60
      $region59: #{cbow_forward.1} parent=5 // pred_region
        // Predicated region
        $region61: #{cbow_forward.1} parent=59 // pred_check
          %p356 = pneg %p41
        $region62: #{cbow_forward.1} parent=59 // pred_check_branch
          %358 = sbr.rel (%p356) target = $region64
        $region63: #{cbow_forward.1} parent=59 // pred_region
          %s359 = smul.u32 32, %s21
          %p360 = scmp.lt.s32.totalorder %s359, 63
          %s361 = scalar_select %p360, %s359, 63
          %s362 = smul.addr %s361, 8
          %s363 = scalar_lea.vmem %s0, %s362
          %s364 = smul.u32 32, %s21
        $region64: #{cbow_forward.1} parent=59 // pred_fallthru
          _
      $region60: #{cbow_forward.1} parent=5 // pred_fallthru
        _
      %p365 = scmp.le.s32.totalorder 1, %s21
      %p366 = scmp.lt.s32.totalorder %s21, 3
      %p367 = pnand %p365, %p366
      %p368 = pneg %p367
      // Predicated region
      $region65: #{cbow_forward.1} parent=5 // pred_check
        _
      $region66: #{cbow_forward.1} parent=5 // pred_check_branch
        %370 = sbr.rel (%p367) target = $region68
      $region67: #{cbow_forward.1} parent=5 // pred_region
        %s371 = ssub.s32 %s21, 1
        %s372 = smul.u32 32, %s26
        %p373 = scmp.lt.s32.totalorder %s372, 63
        %s374 = scalar_select %p373, %s372, 63
        %s375 = smul.addr %s374, 8
        %s376 = scalar_lea.vmem %s0, %s375
        %p377 = pneg %p47
        %p378 = pneg %p44
        %p379 = pneg %p68
        %p380 = pneg %p65
        %p381 = pneg %p89
        %p382 = pneg %p86
        %p383 = pneg %p110
        %p384 = pneg %p107
        %p385 = pneg %p131
        %p386 = pneg %p128
        %p387 = pneg %p152
        %p388 = pneg %p149
        %p389 = pneg %p173
        %p390 = pneg %p170
        %p391 = pneg %p194
        %p392 = pneg %p191
        %p393 = pneg %p215
        %p394 = pneg %p212
        %p395 = pneg %p236
        %p396 = pneg %p233
        %p397 = pneg %p257
        %p398 = pneg %p254
        %p399 = pneg %p278
        %p400 = pneg %p275
        %p401 = pneg %p304
        %p402 = pneg %p301
        %s403 = sand.u32 %s291, 1
        %s404 = scalar_lea.sflag [#allocation3], %s403
        %s405 = sand.u32 %s291, 1
        %s406 = smul.addr %s405, 256
        %s407 = scalar_lea.vmem [#allocation2], %s406
        %s408 = smul.u32 32, %s26
        %p409 = scmp.lt.s32.totalorder %s408, 63
        %s410 = scalar_select %p409, %s408, 63
        %s411 = smul.addr %s410, 8
        %s412 = scalar_lea.vmem %s0, %s411
        %s413 = smul.u32 32, %s26
        %s414 = smul.u32 32, %s26
        %v416 = vld [vmem:[%s412] sm:$0xff]
        %v417 = vld [vmem:[%s412 + $0x8] sm:$0xff]
        %v418 = vld [vmem:[%s412 + $0x10] sm:$0xff]
        %v419 = vld [vmem:[%s412 + $0x18] sm:$0xff]
        %v420 = vld [vmem:[%s412 + $0x20] sm:$0xff]
        %v421 = vld [vmem:[%s412 + $0x28] sm:$0xff]
        %v422 = vld [vmem:[%s412 + $0x30] sm:$0xff]
        %v423 = vld [vmem:[%s412 + $0x38] sm:$0xff]
        %v424 = vld [vmem:[%s412 + $0x40] sm:$0xff]
        %v425 = vld [vmem:[%s412 + $0x48] sm:$0xff]
        %v426 = vld [vmem:[%s412 + $0x50] sm:$0xff]
        %v427 = vld [vmem:[%s412 + $0x58] sm:$0xff]
        %v428 = vld [vmem:[%s412 + $0x60] sm:$0xff]
        %v429 = vld [vmem:[%s412 + $0x68] sm:$0xff]
        %v430 = vld [vmem:[%s412 + $0x70] sm:$0xff]
        %v431 = vld [vmem:[%s412 + $0x78] sm:$0xff]
        %v432 = vld [vmem:[%s412 + $0x80] sm:$0xff]
        %v433 = vld [vmem:[%s412 + $0x88] sm:$0xff]
        %v434 = vld [vmem:[%s412 + $0x90] sm:$0xff]
        %v435 = vld [vmem:[%s412 + $0x98] sm:$0xff]
        %v436 = vld [vmem:[%s412 + $0xa0] sm:$0xff]
        %v437 = vld [vmem:[%s412 + $0xa8] sm:$0xff]
        %v438 = vld [vmem:[%s412 + $0xb0] sm:$0xff]
        %v439 = vld [vmem:[%s412 + $0xb8] sm:$0xff]
        %v440 = vld [vmem:[%s412 + $0xc0] sm:$0xff]
        %v441 = vld [vmem:[%s412 + $0xc8] sm:$0xff]
        %v442 = vld [vmem:[%s412 + $0xd0] sm:$0xff]
        %v443 = vld [vmem:[%s412 + $0xd8] sm:$0xff]
        %v444 = vld [vmem:[%s412 + $0xe0] sm:$0xff]
        %v445 = vld [vmem:[%s412 + $0xe8] sm:$0xff]
        %v446 = vld [vmem:[%s412 + $0xf0] sm:$0xff]
        %v447 = vld [vmem:[%s412 + $0xf8] sm:$0xff]
        %v448 = vld [vmem:[%s1] sm:$0xf]
        %v449 = vld [vmem:[%s1 + $0x4] sm:$0xf]
        %v450 = vld [vmem:[%s1 + $0x8] sm:$0xf]
        %v451 = vld [vmem:[%s1 + $0xc] sm:$0xf]
        %v452 = vld [vmem:[%s1 + $0x10] sm:$0xf]
        %v453 = vld [vmem:[%s1 + $0x14] sm:$0xf]
        %v454 = vld [vmem:[%s1 + $0x18] sm:$0xf]
        %v455 = vld [vmem:[%s1 + $0x1c] sm:$0xf]
        %v456 = vld [vmem:[%s1 + $0x20] sm:$0xf]
        %v457 = vld [vmem:[%s1 + $0x24] sm:$0xf]
        %v458 = vld [vmem:[%s1 + $0x28] sm:$0xf]
        %v459 = vld [vmem:[%s1 + $0x2c] sm:$0xf]
        %v460 = vld [vmem:[%s1 + $0x30] sm:$0xf]
        %v461 = vld [vmem:[%s1 + $0x34] sm:$0xf]
        %v462 = vld [vmem:[%s1 + $0x38] sm:$0xf]
        %v463 = vld [vmem:[%s1 + $0x3c] sm:$0xf]
        %v464 = vlaneseq
        %v465 = vand.u32 %v464, 127
        %466 = vset.pattern.permute.xlu0 0
        %467 = vperm.xlu0 %466, %v416
        %v468 = vpop.permute.xlu0 %467
        %469 = vset.pattern.permute.xlu0 0
        %470 = vperm.xlu0 %469, %v417
        %v471 = vpop.permute.xlu0 %470
        %472 = vset.pattern.permute.xlu0 0
        %473 = vperm.xlu0 %472, %v418
        %v474 = vpop.permute.xlu0 %473
        %475 = vset.pattern.permute.xlu0 0
        %476 = vperm.xlu0 %475, %v419
        %v477 = vpop.permute.xlu0 %476
        %478 = vset.pattern.permute.xlu0 0
        %479 = vperm.xlu0 %478, %v420
        %v480 = vpop.permute.xlu0 %479
        %481 = vset.pattern.permute.xlu0 0
        %482 = vperm.xlu0 %481, %v421
        %v483 = vpop.permute.xlu0 %482
        %484 = vset.pattern.permute.xlu0 0
        %485 = vperm.xlu0 %484, %v422
        %v486 = vpop.permute.xlu0 %485
        %487 = vset.pattern.permute.xlu0 0
        %488 = vperm.xlu0 %487, %v423
        %v489 = vpop.permute.xlu0 %488
        %490 = vset.pattern.permute.xlu0 0
        %491 = vperm.xlu0 %490, %v424
        %v492 = vpop.permute.xlu0 %491
        %493 = vset.pattern.permute.xlu0 0
        %494 = vperm.xlu0 %493, %v425
        %v495 = vpop.permute.xlu0 %494
        %496 = vset.pattern.permute.xlu0 0
        %497 = vperm.xlu0 %496, %v426
        %v498 = vpop.permute.xlu0 %497
        %499 = vset.pattern.permute.xlu0 0
        %500 = vperm.xlu0 %499, %v427
        %v501 = vpop.permute.xlu0 %500
        %502 = vset.pattern.permute.xlu0 0
        %503 = vperm.xlu0 %502, %v428
        %v504 = vpop.permute.xlu0 %503
        %505 = vset.pattern.permute.xlu0 0
        %506 = vperm.xlu0 %505, %v429
        %v507 = vpop.permute.xlu0 %506
        %508 = vset.pattern.permute.xlu0 0
        %509 = vperm.xlu0 %508, %v430
        %v510 = vpop.permute.xlu0 %509
        %511 = vset.pattern.permute.xlu0 0
        %512 = vperm.xlu0 %511, %v431
        %v513 = vpop.permute.xlu0 %512
        %514 = vset.pattern.permute.xlu0 0
        %515 = vperm.xlu0 %514, %v432
        %v516 = vpop.permute.xlu0 %515
        %517 = vset.pattern.permute.xlu0 0
        %518 = vperm.xlu0 %517, %v433
        %v519 = vpop.permute.xlu0 %518
        %520 = vset.pattern.permute.xlu0 0
        %521 = vperm.xlu0 %520, %v434
        %v522 = vpop.permute.xlu0 %521
        %523 = vset.pattern.permute.xlu0 0
        %524 = vperm.xlu0 %523, %v435
        %v525 = vpop.permute.xlu0 %524
        %526 = vset.pattern.permute.xlu0 0
        %527 = vperm.xlu0 %526, %v436
        %v528 = vpop.permute.xlu0 %527
        %529 = vset.pattern.permute.xlu0 0
        %530 = vperm.xlu0 %529, %v437
        %v531 = vpop.permute.xlu0 %530
        %532 = vset.pattern.permute.xlu0 0
        %533 = vperm.xlu0 %532, %v438
        %v534 = vpop.permute.xlu0 %533
        %535 = vset.pattern.permute.xlu0 0
        %536 = vperm.xlu0 %535, %v439
        %v537 = vpop.permute.xlu0 %536
        %538 = vset.pattern.permute.xlu0 0
        %539 = vperm.xlu0 %538, %v440
        %v540 = vpop.permute.xlu0 %539
        %541 = vset.pattern.permute.xlu0 0
        %542 = vperm.xlu0 %541, %v441
        %v543 = vpop.permute.xlu0 %542
        %544 = vset.pattern.permute.xlu0 0
        %545 = vperm.xlu0 %544, %v442
        %v546 = vpop.permute.xlu0 %545
        %547 = vset.pattern.permute.xlu0 0
        %548 = vperm.xlu0 %547, %v443
        %v549 = vpop.permute.xlu0 %548
        %550 = vset.pattern.permute.xlu0 0
        %551 = vperm.xlu0 %550, %v444
        %v552 = vpop.permute.xlu0 %551
        %553 = vset.pattern.permute.xlu0 0
        %554 = vperm.xlu0 %553, %v445
        %v555 = vpop.permute.xlu0 %554
        %556 = vset.pattern.permute.xlu0 0
        %557 = vperm.xlu0 %556, %v446
        %v558 = vpop.permute.xlu0 %557
        %559 = vset.pattern.permute.xlu0 0
        %560 = vperm.xlu0 %559, %v447
        %v561 = vpop.permute.xlu0 %560
        %vm562 = vcmp.eq.s32.totalorder %v465, %v468
        %vm563 = vcmp.eq.s32.totalorder %v465, %v471
        %vm564 = vcmp.eq.s32.totalorder %v465, %v474
        %vm565 = vcmp.eq.s32.totalorder %v465, %v477
        %vm566 = vcmp.eq.s32.totalorder %v465, %v480
        %vm567 = vcmp.eq.s32.totalorder %v465, %v483
        %vm568 = vcmp.eq.s32.totalorder %v465, %v486
        %vm569 = vcmp.eq.s32.totalorder %v465, %v489
        %vm570 = vcmp.eq.s32.totalorder %v465, %v492
        %vm571 = vcmp.eq.s32.totalorder %v465, %v495
        %vm572 = vcmp.eq.s32.totalorder %v465, %v498
        %vm573 = vcmp.eq.s32.totalorder %v465, %v501
        %vm574 = vcmp.eq.s32.totalorder %v465, %v504
        %vm575 = vcmp.eq.s32.totalorder %v465, %v507
        %vm576 = vcmp.eq.s32.totalorder %v465, %v510
        %vm577 = vcmp.eq.s32.totalorder %v465, %v513
        %vm578 = vcmp.eq.s32.totalorder %v465, %v516
        %vm579 = vcmp.eq.s32.totalorder %v465, %v519
        %vm580 = vcmp.eq.s32.totalorder %v465, %v522
        %vm581 = vcmp.eq.s32.totalorder %v465, %v525
        %vm582 = vcmp.eq.s32.totalorder %v465, %v528
        %vm583 = vcmp.eq.s32.totalorder %v465, %v531
        %vm584 = vcmp.eq.s32.totalorder %v465, %v534
        %vm585 = vcmp.eq.s32.totalorder %v465, %v537
        %vm586 = vcmp.eq.s32.totalorder %v465, %v540
        %vm587 = vcmp.eq.s32.totalorder %v465, %v543
        %vm588 = vcmp.eq.s32.totalorder %v465, %v546
        %vm589 = vcmp.eq.s32.totalorder %v465, %v549
        %vm590 = vcmp.eq.s32.totalorder %v465, %v552
        %vm591 = vcmp.eq.s32.totalorder %v465, %v555
        %vm592 = vcmp.eq.s32.totalorder %v465, %v558
        %vm593 = vcmp.eq.s32.totalorder %v465, %v561
        %v594 = vsel %vm562, 1, 0
        %v595 = vsel %vm563, 1, 0
        %v596 = vsel %vm564, 1, 0
        %v597 = vsel %vm565, 1, 0
        %v598 = vsel %vm566, 1, 0
        %v599 = vsel %vm567, 1, 0
        %v600 = vsel %vm568, 1, 0
        %v601 = vsel %vm569, 1, 0
        %v602 = vsel %vm570, 1, 0
        %v603 = vsel %vm571, 1, 0
        %v604 = vsel %vm572, 1, 0
        %v605 = vsel %vm573, 1, 0
        %v606 = vsel %vm574, 1, 0
        %v607 = vsel %vm575, 1, 0
        %v608 = vsel %vm576, 1, 0
        %v609 = vsel %vm577, 1, 0
        %v610 = vsel %vm578, 1, 0
        %v611 = vsel %vm579, 1, 0
        %v612 = vsel %vm580, 1, 0
        %v613 = vsel %vm581, 1, 0
        %v614 = vsel %vm582, 1, 0
        %v615 = vsel %vm583, 1, 0
        %v616 = vsel %vm584, 1, 0
        %v617 = vsel %vm585, 1, 0
        %v618 = vsel %vm586, 1, 0
        %v619 = vsel %vm587, 1, 0
        %v620 = vsel %vm588, 1, 0
        %v621 = vsel %vm589, 1, 0
        %v622 = vsel %vm590, 1, 0
        %v623 = vsel %vm591, 1, 0
        %v624 = vsel %vm592, 1, 0
        %v625 = vsel %vm593, 1, 0
        %v626 = vcvt.s32.f32 %v594
        %v627 = vcvt.s32.f32 %v595
        %v628 = vcvt.s32.f32 %v596
        %v629 = vcvt.s32.f32 %v597
        %v630 = vcvt.s32.f32 %v598
        %v631 = vcvt.s32.f32 %v599
        %v632 = vcvt.s32.f32 %v600
        %v633 = vcvt.s32.f32 %v601
        %v634 = vcvt.s32.f32 %v602
        %v635 = vcvt.s32.f32 %v603
        %v636 = vcvt.s32.f32 %v604
        %v637 = vcvt.s32.f32 %v605
        %v638 = vcvt.s32.f32 %v606
        %v639 = vcvt.s32.f32 %v607
        %v640 = vcvt.s32.f32 %v608
        %v641 = vcvt.s32.f32 %v609
        %v642 = vcvt.s32.f32 %v610
        %v643 = vcvt.s32.f32 %v611
        %v644 = vcvt.s32.f32 %v612
        %v645 = vcvt.s32.f32 %v613
        %v646 = vcvt.s32.f32 %v614
        %v647 = vcvt.s32.f32 %v615
        %v648 = vcvt.s32.f32 %v616
        %v649 = vcvt.s32.f32 %v617
        %v650 = vcvt.s32.f32 %v618
        %v651 = vcvt.s32.f32 %v619
        %v652 = vcvt.s32.f32 %v620
        %v653 = vcvt.s32.f32 %v621
        %v654 = vcvt.s32.f32 %v622
        %v655 = vcvt.s32.f32 %v623
        %v656 = vcvt.s32.f32 %v624
        %v657 = vcvt.s32.f32 %v625
        %v658 = vpack.c.bf16 %v627, %v626
        %v659 = vpack.c.bf16 %v629, %v628
        %v660 = vpack.c.bf16 %v631, %v630
        %v661 = vpack.c.bf16 %v633, %v632
        %v662 = vpack.c.bf16 %v635, %v634
        %v663 = vpack.c.bf16 %v637, %v636
        %v664 = vpack.c.bf16 %v639, %v638
        %v665 = vpack.c.bf16 %v641, %v640
        %v666 = vpack.c.bf16 %v643, %v642
        %v667 = vpack.c.bf16 %v645, %v644
        %v668 = vpack.c.bf16 %v647, %v646
        %v669 = vpack.c.bf16 %v649, %v648
        %v670 = vpack.c.bf16 %v651, %v650
        %v671 = vpack.c.bf16 %v653, %v652
        %v672 = vpack.c.bf16 %v655, %v654
        %v673 = vpack.c.bf16 %v657, %v656
        %v690 = vunpack.c.l.b16 %v448
        %v691 = vunpack.c.l.b16 %v449
        %v692 = vunpack.c.l.b16 %v450
        %v693 = vunpack.c.l.b16 %v451
        %v694 = vunpack.c.l.b16 %v452
        %v695 = vunpack.c.l.b16 %v453
        %v696 = vunpack.c.l.b16 %v454
        %v697 = vunpack.c.l.b16 %v455
        %v698 = vunpack.c.l.b16 %v456
        %v699 = vunpack.c.l.b16 %v457
        %v700 = vunpack.c.l.b16 %v458
        %v701 = vunpack.c.l.b16 %v459
        %v702 = vunpack.c.l.b16 %v460
        %v703 = vunpack.c.l.b16 %v461
        %v704 = vunpack.c.l.b16 %v462
        %v705 = vunpack.c.l.b16 %v463
        %v706 = vpack.c.b16 %v691, %v690
        %v707 = vpack.c.b16 %v693, %v692
        %v708 = vpack.c.b16 %v695, %v694
        %v709 = vpack.c.b16 %v697, %v696
        %v710 = vpack.c.b16 %v699, %v698
        %v711 = vpack.c.b16 %v701, %v700
        %v712 = vpack.c.b16 %v703, %v702
        %v713 = vpack.c.b16 %v705, %v704
        %722 = vmatprep.subr.bf16.mxu0 0
        %723 = vmatpush1.bf16.msra.mxu0 %v706
        %724 = vmatprep.subr.bf16.mxu0 0
        %725 = vmatpush1.bf16.msra.mxu0 %v707
        %726 = vmatprep.subr.bf16.mxu0 0
        %727 = vmatpush1.bf16.msra.mxu0 %v708
        %728 = vmatprep.subr.bf16.mxu0 0
        %729 = vmatpush1.bf16.msra.mxu0 %v709
        %730 = vmatprep.subr.bf16.mxu0 0
        %731 = vmatpush1.bf16.msra.mxu0 %v710
        %732 = vmatprep.subr.bf16.mxu0 0
        %733 = vmatpush1.bf16.msra.mxu0 %v711
        %734 = vmatprep.subr.bf16.mxu0 0
        %735 = vmatpush1.bf16.msra.mxu0 %v712
        %736 = vmatprep.subr.bf16.mxu0 0
        %737 = vmatpush1.bf16.msra.mxu0 %v713
        %738 = vmatprep.subr.bf16.mxu0 0
        %739 = vmatpush1.bf16.msra.mxu0 0
        %740 = vmatprep.subr.bf16.mxu0 0
        %741 = vmatpush1.bf16.msra.mxu0 0
        %742 = vmatprep.subr.bf16.mxu0 0
        %743 = vmatpush1.bf16.msra.mxu0 0
        %744 = vmatprep.subr.bf16.mxu0 0
        %745 = vmatpush1.bf16.msra.mxu0 0
        %746 = vmatprep.subr.bf16.mxu0 0
        %747 = vmatpush1.bf16.msra.mxu0 0
        %748 = vmatprep.subr.bf16.mxu0 0
        %749 = vmatpush1.bf16.msra.mxu0 0
        %750 = vmatprep.subr.bf16.mxu0 0
        %751 = vmatpush1.bf16.msra.mxu0 0
        %752 = vmatprep.subr.bf16.mxu0 0
        %753 = vmatpush1.bf16.msra.mxu0 0
        %754 = vmatprep.mubr.bf16.mxu0 0
        %755 = vmatmul.mubr.bf16.gmra.mrb[0].mxu0 %v658
        %v756 = vpop.f32.mrb[0].mxu0
        %v757 = vadd.f32 0.0, %v756
        %v758 = vpop.f32.mrb[0].mxu0
        %v759 = vpop.f32.mrb[0].mxu0
        %v760 = vadd.f32 0.0, %v759
        %v761 = vpop.f32.mrb[0].mxu0
        %762 = vmatprep.mubr.bf16.mxu0 0
        %763 = vmatmul.mubr.bf16.gmra.mrb[0].mxu0 %v659
        %v764 = vpop.f32.mrb[0].mxu0
        %v765 = vadd.f32 0.0, %v764
        %v766 = vpop.f32.mrb[0].mxu0
        %v767 = vpop.f32.mrb[0].mxu0
        %v768 = vadd.f32 0.0, %v767
        %v769 = vpop.f32.mrb[0].mxu0
        %770 = vmatprep.mubr.bf16.mxu0 0
        %771 = vmatmul.mubr.bf16.gmra.mrb[0].mxu0 %v660
        %v772 = vpop.f32.mrb[0].mxu0
        %v773 = vadd.f32 0.0, %v772
        %v774 = vpop.f32.mrb[0].mxu0
        %v775 = vpop.f32.mrb[0].mxu0
        %v776 = vadd.f32 0.0, %v775
        %v777 = vpop.f32.mrb[0].mxu0
        %778 = vmatprep.mubr.bf16.mxu0 0
        %779 = vmatmul.mubr.bf16.gmra.mrb[0].mxu0 %v661
        %v780 = vpop.f32.mrb[0].mxu0
        %v781 = vadd.f32 0.0, %v780
        %v782 = vpop.f32.mrb[0].mxu0
        %v783 = vpop.f32.mrb[0].mxu0
        %v784 = vadd.f32 0.0, %v783
        %v785 = vpop.f32.mrb[0].mxu0
        %786 = vmatprep.mubr.bf16.mxu0 0
        %787 = vmatmul.mubr.bf16.gmra.mrb[0].mxu0 %v662
        %v788 = vpop.f32.mrb[0].mxu0
        %v789 = vadd.f32 0.0, %v788
        %v790 = vpop.f32.mrb[0].mxu0
        %v791 = vpop.f32.mrb[0].mxu0
        %v792 = vadd.f32 0.0, %v791
        %v793 = vpop.f32.mrb[0].mxu0
        %794 = vmatprep.mubr.bf16.mxu0 0
        %795 = vmatmul.mubr.bf16.gmra.mrb[0].mxu0 %v663
        %v796 = vpop.f32.mrb[0].mxu0
        %v797 = vadd.f32 0.0, %v796
        %v798 = vpop.f32.mrb[0].mxu0
        %v799 = vpop.f32.mrb[0].mxu0
        %v800 = vadd.f32 0.0, %v799
        %v801 = vpop.f32.mrb[0].mxu0
        %802 = vmatprep.mubr.bf16.mxu0 0
        %803 = vmatmul.mubr.bf16.gmra.mrb[0].mxu0 %v664
        %v804 = vpop.f32.mrb[0].mxu0
        %v805 = vadd.f32 0.0, %v804
        %v806 = vpop.f32.mrb[0].mxu0
        %v807 = vpop.f32.mrb[0].mxu0
        %v808 = vadd.f32 0.0, %v807
        %v809 = vpop.f32.mrb[0].mxu0
        %810 = vmatprep.mubr.bf16.mxu0 0
        %811 = vmatmul.mubr.bf16.gmra.mrb[0].mxu0 %v665
        %v812 = vpop.f32.mrb[0].mxu0
        %v813 = vadd.f32 0.0, %v812
        %v814 = vpop.f32.mrb[0].mxu0
        %v815 = vpop.f32.mrb[0].mxu0
        %v816 = vadd.f32 0.0, %v815
        %v817 = vpop.f32.mrb[0].mxu0
        %818 = vmatprep.mubr.bf16.mxu0 0
        %819 = vmatmul.mubr.bf16.gmra.mrb[0].mxu0 %v666
        %v820 = vpop.f32.mrb[0].mxu0
        %v821 = vadd.f32 0.0, %v820
        %v822 = vpop.f32.mrb[0].mxu0
        %v823 = vpop.f32.mrb[0].mxu0
        %v824 = vadd.f32 0.0, %v823
        %v825 = vpop.f32.mrb[0].mxu0
        %826 = vmatprep.mubr.bf16.mxu0 0
        %827 = vmatmul.mubr.bf16.gmra.mrb[0].mxu0 %v667
        %v828 = vpop.f32.mrb[0].mxu0
        %v829 = vadd.f32 0.0, %v828
        %v830 = vpop.f32.mrb[0].mxu0
        %v831 = vpop.f32.mrb[0].mxu0
        %v832 = vadd.f32 0.0, %v831
        %v833 = vpop.f32.mrb[0].mxu0
        %834 = vmatprep.mubr.bf16.mxu0 0
        %835 = vmatmul.mubr.bf16.gmra.mrb[0].mxu0 %v668
        %v836 = vpop.f32.mrb[0].mxu0
        %v837 = vadd.f32 0.0, %v836
        %v838 = vpop.f32.mrb[0].mxu0
        %v839 = vpop.f32.mrb[0].mxu0
        %v840 = vadd.f32 0.0, %v839
        %v841 = vpop.f32.mrb[0].mxu0
        %842 = vmatprep.mubr.bf16.mxu0 0
        %843 = vmatmul.mubr.bf16.gmra.mrb[0].mxu0 %v669
        %v844 = vpop.f32.mrb[0].mxu0
        %v845 = vadd.f32 0.0, %v844
        %v846 = vpop.f32.mrb[0].mxu0
        %v847 = vpop.f32.mrb[0].mxu0
        %v848 = vadd.f32 0.0, %v847
        %v849 = vpop.f32.mrb[0].mxu0
        %850 = vmatprep.mubr.bf16.mxu0 0
        %851 = vmatmul.mubr.bf16.gmra.mrb[0].mxu0 %v670
        %v852 = vpop.f32.mrb[0].mxu0
        %v853 = vadd.f32 0.0, %v852
        %v854 = vpop.f32.mrb[0].mxu0
        %v855 = vpop.f32.mrb[0].mxu0
        %v856 = vadd.f32 0.0, %v855
        %v857 = vpop.f32.mrb[0].mxu0
        %858 = vmatprep.mubr.bf16.mxu0 0
        %859 = vmatmul.mubr.bf16.gmra.mrb[0].mxu0 %v671
        %v860 = vpop.f32.mrb[0].mxu0
        %v861 = vadd.f32 0.0, %v860
        %v862 = vpop.f32.mrb[0].mxu0
        %v863 = vpop.f32.mrb[0].mxu0
        %v864 = vadd.f32 0.0, %v863
        %v865 = vpop.f32.mrb[0].mxu0
        %866 = vmatprep.mubr.bf16.mxu0 0
        %867 = vmatmul.mubr.bf16.gmra.mrb[0].mxu0 %v672
        %v868 = vpop.f32.mrb[0].mxu0
        %v869 = vadd.f32 0.0, %v868
        %v870 = vpop.f32.mrb[0].mxu0
        %v871 = vpop.f32.mrb[0].mxu0
        %v872 = vadd.f32 0.0, %v871
        %v873 = vpop.f32.mrb[0].mxu0
        %874 = vmatprep.mubr.bf16.mxu0 0
        %875 = vmatmul.mubr.bf16.gmra.mrb[0].mxu0 %v673
        %v876 = vpop.f32.mrb[0].mxu0
        %v877 = vadd.f32 0.0, %v876
        %v878 = vpop.f32.mrb[0].mxu0
        %v879 = vpop.f32.mrb[0].mxu0
        %v880 = vadd.f32 0.0, %v879
        %v881 = vpop.f32.mrb[0].mxu0
        %882 = vdwg.mxu0
        %883 = vset.pattern.permute.xlu0 1
        %884 = vperm.xlu0 %883, %v416
        %v885 = vpop.permute.xlu0 %884
        %886 = vset.pattern.permute.xlu0 1
        %887 = vperm.xlu0 %886, %v417
        %v888 = vpop.permute.xlu0 %887
        %889 = vset.pattern.permute.xlu0 1
        %890 = vperm.xlu0 %889, %v418
        %v891 = vpop.permute.xlu0 %890
        %892 = vset.pattern.permute.xlu0 1
        %893 = vperm.xlu0 %892, %v419
        %v894 = vpop.permute.xlu0 %893
        %895 = vset.pattern.permute.xlu0 1
        %896 = vperm.xlu0 %895, %v420
        %v897 = vpop.permute.xlu0 %896
        %898 = vset.pattern.permute.xlu0 1
        %899 = vperm.xlu0 %898, %v421
        %v900 = vpop.permute.xlu0 %899
        %901 = vset.pattern.permute.xlu0 1
        %902 = vperm.xlu0 %901, %v422
        %v903 = vpop.permute.xlu0 %902
        %904 = vset.pattern.permute.xlu0 1
        %905 = vperm.xlu0 %904, %v423
        %v906 = vpop.permute.xlu0 %905
        %907 = vset.pattern.permute.xlu0 1
        %908 = vperm.xlu0 %907, %v424
        %v909 = vpop.permute.xlu0 %908
        %910 = vset.pattern.permute.xlu0 1
        %911 = vperm.xlu0 %910, %v425
        %v912 = vpop.permute.xlu0 %911
        %913 = vset.pattern.permute.xlu0 1
        %914 = vperm.xlu0 %913, %v426
        %v915 = vpop.permute.xlu0 %914
        %916 = vset.pattern.permute.xlu0 1
        %917 = vperm.xlu0 %916, %v427
        %v918 = vpop.permute.xlu0 %917
        %919 = vset.pattern.permute.xlu0 1
        %920 = vperm.xlu0 %919, %v428
        %v921 = vpop.permute.xlu0 %920
        %922 = vset.pattern.permute.xlu0 1
        %923 = vperm.xlu0 %922, %v429
        %v924 = vpop.permute.xlu0 %923
        %925 = vset.pattern.permute.xlu0 1
        %926 = vperm.xlu0 %925, %v430
        %v927 = vpop.permute.xlu0 %926
        %928 = vset.pattern.permute.xlu0 1
        %929 = vperm.xlu0 %928, %v431
        %v930 = vpop.permute.xlu0 %929
        %931 = vset.pattern.permute.xlu0 1
        %932 = vperm.xlu0 %931, %v432
        %v933 = vpop.permute.xlu0 %932
        %934 = vset.pattern.permute.xlu0 1
        %935 = vperm.xlu0 %934, %v433
        %v936 = vpop.permute.xlu0 %935
        %937 = vset.pattern.permute.xlu0 1
        %938 = vperm.xlu0 %937, %v434
        %v939 = vpop.permute.xlu0 %938
        %940 = vset.pattern.permute.xlu0 1
        %941 = vperm.xlu0 %940, %v435
        %v942 = vpop.permute.xlu0 %941
        %943 = vset.pattern.permute.xlu0 1
        %944 = vperm.xlu0 %943, %v436
        %v945 = vpop.permute.xlu0 %944
        %946 = vset.pattern.permute.xlu0 1
        %947 = vperm.xlu0 %946, %v437
        %v948 = vpop.permute.xlu0 %947
        %949 = vset.pattern.permute.xlu0 1
        %950 = vperm.xlu0 %949, %v438
        %v951 = vpop.permute.xlu0 %950
        %952 = vset.pattern.permute.xlu0 1
        %953 = vperm.xlu0 %952, %v439
        %v954 = vpop.permute.xlu0 %953
        %955 = vset.pattern.permute.xlu0 1
        %956 = vperm.xlu0 %955, %v440
        %v957 = vpop.permute.xlu0 %956
        %958 = vset.pattern.permute.xlu0 1
        %959 = vperm.xlu0 %958, %v441
        %v960 = vpop.permute.xlu0 %959
        %961 = vset.pattern.permute.xlu0 1
        %962 = vperm.xlu0 %961, %v442
        %v963 = vpop.permute.xlu0 %962
        %964 = vset.pattern.permute.xlu0 1
        %965 = vperm.xlu0 %964, %v443
        %v966 = vpop.permute.xlu0 %965
        %967 = vset.pattern.permute.xlu0 1
        %968 = vperm.xlu0 %967, %v444
        %v969 = vpop.permute.xlu0 %968
        %970 = vset.pattern.permute.xlu0 1
        %971 = vperm.xlu0 %970, %v445
        %v972 = vpop.permute.xlu0 %971
        %973 = vset.pattern.permute.xlu0 1
        %974 = vperm.xlu0 %973, %v446
        %v975 = vpop.permute.xlu0 %974
        %976 = vset.pattern.permute.xlu0 1
        %977 = vperm.xlu0 %976, %v447
        %v978 = vpop.permute.xlu0 %977
        %vm979 = vcmp.eq.s32.totalorder %v465, %v885
        %vm980 = vcmp.eq.s32.totalorder %v465, %v888
        %vm981 = vcmp.eq.s32.totalorder %v465, %v891
        %vm982 = vcmp.eq.s32.totalorder %v465, %v894
        %vm983 = vcmp.eq.s32.totalorder %v465, %v897
        %vm984 = vcmp.eq.s32.totalorder %v465, %v900
        %vm985 = vcmp.eq.s32.totalorder %v465, %v903
        %vm986 = vcmp.eq.s32.totalorder %v465, %v906
        %vm987 = vcmp.eq.s32.totalorder %v465, %v909
        %vm988 = vcmp.eq.s32.totalorder %v465, %v912
        %vm989 = vcmp.eq.s32.totalorder %v465, %v915
        %vm990 = vcmp.eq.s32.totalorder %v465, %v918
        %vm991 = vcmp.eq.s32.totalorder %v465, %v921
        %vm992 = vcmp.eq.s32.totalorder %v465, %v924
        %vm993 = vcmp.eq.s32.totalorder %v465, %v927
        %vm994 = vcmp.eq.s32.totalorder %v465, %v930
        %vm995 = vcmp.eq.s32.totalorder %v465, %v933
        %vm996 = vcmp.eq.s32.totalorder %v465, %v936
        %vm997 = vcmp.eq.s32.totalorder %v465, %v939
        %vm998 = vcmp.eq.s32.totalorder %v465, %v942
        %vm999 = vcmp.eq.s32.totalorder %v465, %v945
        %vm1000 = vcmp.eq.s32.totalorder %v465, %v948
        %vm1001 = vcmp.eq.s32.totalorder %v465, %v951
        %vm1002 = vcmp.eq.s32.totalorder %v465, %v954
        %vm1003 = vcmp.eq.s32.totalorder %v465, %v957
        %vm1004 = vcmp.eq.s32.totalorder %v465, %v960
        %vm1005 = vcmp.eq.s32.totalorder %v465, %v963
        %vm1006 = vcmp.eq.s32.totalorder %v465, %v966
        %vm1007 = vcmp.eq.s32.totalorder %v465, %v969
        %vm1008 = vcmp.eq.s32.totalorder %v465, %v972
        %vm1009 = vcmp.eq.s32.totalorder %v465, %v975
        %vm1010 = vcmp.eq.s32.totalorder %v465, %v978
        %v1011 = vsel %vm979, 1, 0
        %v1012 = vsel %vm980, 1, 0
        %v1013 = vsel %vm981, 1, 0
        %v1014 = vsel %vm982, 1, 0
        %v1015 = vsel %vm983, 1, 0
        %v1016 = vsel %vm984, 1, 0
        %v1017 = vsel %vm985, 1, 0
        %v1018 = vsel %vm986, 1, 0
        %v1019 = vsel %vm987, 1, 0
        %v1020 = vsel %vm988, 1, 0
        %v1021 = vsel %vm989, 1, 0
        %v1022 = vsel %vm990, 1, 0
        %v1023 = vsel %vm991, 1, 0
        %v1024 = vsel %vm992, 1, 0
        %v1025 = vsel %vm993, 1, 0
        %v1026 = vsel %vm994, 1, 0
        %v1027 = vsel %vm995, 1, 0
        %v1028 = vsel %vm996, 1, 0
        %v1029 = vsel %vm997, 1, 0
        %v1030 = vsel %vm998, 1, 0
        %v1031 = vsel %vm999, 1, 0
        %v1032 = vsel %vm1000, 1, 0
        %v1033 = vsel %vm1001, 1, 0
        %v1034 = vsel %vm1002, 1, 0
        %v1035 = vsel %vm1003, 1, 0
        %v1036 = vsel %vm1004, 1, 0
        %v1037 = vsel %vm1005, 1, 0
        %v1038 = vsel %vm1006, 1, 0
        %v1039 = vsel %vm1007, 1, 0
        %v1040 = vsel %vm1008, 1, 0
        %v1041 = vsel %vm1009, 1, 0
        %v1042 = vsel %vm1010, 1, 0
        %v1043 = vcvt.s32.f32 %v1011
        %v1044 = vcvt.s32.f32 %v1012
        %v1045 = vcvt.s32.f32 %v1013
        %v1046 = vcvt.s32.f32 %v1014
        %v1047 = vcvt.s32.f32 %v1015
        %v1048 = vcvt.s32.f32 %v1016
        %v1049 = vcvt.s32.f32 %v1017
        %v1050 = vcvt.s32.f32 %v1018
        %v1051 = vcvt.s32.f32 %v1019
        %v1052 = vcvt.s32.f32 %v1020
        %v1053 = vcvt.s32.f32 %v1021
        %v1054 = vcvt.s32.f32 %v1022
        %v1055 = vcvt.s32.f32 %v1023
        %v1056 = vcvt.s32.f32 %v1024
        %v1057 = vcvt.s32.f32 %v1025
        %v1058 = vcvt.s32.f32 %v1026
        %v1059 = vcvt.s32.f32 %v1027
        %v1060 = vcvt.s32.f32 %v1028
        %v1061 = vcvt.s32.f32 %v1029
        %v1062 = vcvt.s32.f32 %v1030
        %v1063 = vcvt.s32.f32 %v1031
        %v1064 = vcvt.s32.f32 %v1032
        %v1065 = vcvt.s32.f32 %v1033
        %v1066 = vcvt.s32.f32 %v1034
        %v1067 = vcvt.s32.f32 %v1035
        %v1068 = vcvt.s32.f32 %v1036
        %v1069 = vcvt.s32.f32 %v1037
        %v1070 = vcvt.s32.f32 %v1038
        %v1071 = vcvt.s32.f32 %v1039
        %v1072 = vcvt.s32.f32 %v1040
        %v1073 = vcvt.s32.f32 %v1041
        %v1074 = vcvt.s32.f32 %v1042
        %v1075 = vpack.c.bf16 %v1044, %v1043
        %v1076 = vpack.c.bf16 %v1046, %v1045
        %v1077 = vpack.c.bf16 %v1048, %v1047
        %v1078 = vpack.c.bf16 %v1050, %v1049
        %v1079 = vpack.c.bf16 %v1052, %v1051
        %v1080 = vpack.c.bf16 %v1054, %v1053
        %v1081 = vpack.c.bf16 %v1056, %v1055
        %v1082 = vpack.c.bf16 %v1058, %v1057
        %v1083 = vpack.c.bf16 %v1060, %v1059
        %v1084 = vpack.c.bf16 %v1062, %v1061
        %v1085 = vpack.c.bf16 %v1064, %v1063
        %v1086 = vpack.c.bf16 %v1066, %v1065
        %v1087 = vpack.c.bf16 %v1068, %v1067
        %v1088 = vpack.c.bf16 %v1070, %v1069
        %v1089 = vpack.c.bf16 %v1072, %v1071
        %v1090 = vpack.c.bf16 %v1074, %v1073
        %1091 = vmatprep.subr.bf16.mxu0 0
        %1092 = vmatpush1.bf16.msra.mxu0 %v706
        %1093 = vmatprep.subr.bf16.mxu0 0
        %1094 = vmatpush1.bf16.msra.mxu0 %v707
        %1095 = vmatprep.subr.bf16.mxu0 0
        %1096 = vmatpush1.bf16.msra.mxu0 %v708
        %1097 = vmatprep.subr.bf16.mxu0 0
        %1098 = vmatpush1.bf16.msra.mxu0 %v709
        %1099 = vmatprep.subr.bf16.mxu0 0
        %1100 = vmatpush1.bf16.msra.mxu0 %v710
        %1101 = vmatprep.subr.bf16.mxu0 0
        %1102 = vmatpush1.bf16.msra.mxu0 %v711
        %1103 = vmatprep.subr.bf16.mxu0 0
        %1104 = vmatpush1.bf16.msra.mxu0 %v712
        %1105 = vmatprep.subr.bf16.mxu0 0
        %1106 = vmatpush1.bf16.msra.mxu0 %v713
        %1107 = vmatprep.subr.bf16.mxu0 0
        %1108 = vmatpush1.bf16.msra.mxu0 0
        %1109 = vmatprep.subr.bf16.mxu0 0
        %1110 = vmatpush1.bf16.msra.mxu0 0
        %1111 = vmatprep.subr.bf16.mxu0 0
        %1112 = vmatpush1.bf16.msra.mxu0 0
        %1113 = vmatprep.subr.bf16.mxu0 0
        %1114 = vmatpush1.bf16.msra.mxu0 0
        %1115 = vmatprep.subr.bf16.mxu0 0
        %1116 = vmatpush1.bf16.msra.mxu0 0
        %1117 = vmatprep.subr.bf16.mxu0 0
        %1118 = vmatpush1.bf16.msra.mxu0 0
        %1119 = vmatprep.subr.bf16.mxu0 0
        %1120 = vmatpush1.bf16.msra.mxu0 0
        %1121 = vmatprep.subr.bf16.mxu0 0
        %1122 = vmatpush1.bf16.msra.mxu0 0
        %1123 = vmatprep.mubr.bf16.mxu0 0
        %1124 = vmatmul.mubr.bf16.gmra.mrb[0].mxu0 %v1075
        %v1125 = vpop.f32.mrb[0].mxu0
        %v1126 = vadd.f32 0.0, %v1125
        %v1127 = vpop.f32.mrb[0].mxu0
        %v1128 = vpop.f32.mrb[0].mxu0
        %v1129 = vadd.f32 0.0, %v1128
        %v1130 = vpop.f32.mrb[0].mxu0
        %1131 = vmatprep.mubr.bf16.mxu0 0
        %1132 = vmatmul.mubr.bf16.gmra.mrb[0].mxu0 %v1076
        %v1133 = vpop.f32.mrb[0].mxu0
        %v1134 = vadd.f32 0.0, %v1133
        %v1135 = vpop.f32.mrb[0].mxu0
        %v1136 = vpop.f32.mrb[0].mxu0
        %v1137 = vadd.f32 0.0, %v1136
        %v1138 = vpop.f32.mrb[0].mxu0
        %1139 = vmatprep.mubr.bf16.mxu0 0
        %1140 = vmatmul.mubr.bf16.gmra.mrb[0].mxu0 %v1077
        %v1141 = vpop.f32.mrb[0].mxu0
        %v1142 = vadd.f32 0.0, %v1141
        %v1143 = vpop.f32.mrb[0].mxu0
        %v1144 = vpop.f32.mrb[0].mxu0
        %v1145 = vadd.f32 0.0, %v1144
        %v1146 = vpop.f32.mrb[0].mxu0
        %1147 = vmatprep.mubr.bf16.mxu0 0
        %1148 = vmatmul.mubr.bf16.gmra.mrb[0].mxu0 %v1078
        %v1149 = vpop.f32.mrb[0].mxu0
        %v1150 = vadd.f32 0.0, %v1149
        %v1151 = vpop.f32.mrb[0].mxu0
        %v1152 = vpop.f32.mrb[0].mxu0
        %v1153 = vadd.f32 0.0, %v1152
        %v1154 = vpop.f32.mrb[0].mxu0
        %1155 = vmatprep.mubr.bf16.mxu0 0
        %1156 = vmatmul.mubr.bf16.gmra.mrb[0].mxu0 %v1079
        %v1157 = vpop.f32.mrb[0].mxu0
        %v1158 = vadd.f32 0.0, %v1157
        %v1159 = vpop.f32.mrb[0].mxu0
        %v1160 = vpop.f32.mrb[0].mxu0
        %v1161 = vadd.f32 0.0, %v1160
        %v1162 = vpop.f32.mrb[0].mxu0
        %1163 = vmatprep.mubr.bf16.mxu0 0
        %1164 = vmatmul.mubr.bf16.gmra.mrb[0].mxu0 %v1080
        %v1165 = vpop.f32.mrb[0].mxu0
        %v1166 = vadd.f32 0.0, %v1165
        %v1167 = vpop.f32.mrb[0].mxu0
        %v1168 = vpop.f32.mrb[0].mxu0
        %v1169 = vadd.f32 0.0, %v1168
        %v1170 = vpop.f32.mrb[0].mxu0
        %1171 = vmatprep.mubr.bf16.mxu0 0
        %1172 = vmatmul.mubr.bf16.gmra.mrb[0].mxu0 %v1081
        %v1173 = vpop.f32.mrb[0].mxu0
        %v1174 = vadd.f32 0.0, %v1173
        %v1175 = vpop.f32.mrb[0].mxu0
        %v1176 = vpop.f32.mrb[0].mxu0
        %v1177 = vadd.f32 0.0, %v1176
        %v1178 = vpop.f32.mrb[0].mxu0
        %1179 = vmatprep.mubr.bf16.mxu0 0
        %1180 = vmatmul.mubr.bf16.gmra.mrb[0].mxu0 %v1082
        %v1181 = vpop.f32.mrb[0].mxu0
        %v1182 = vadd.f32 0.0, %v1181
        %v1183 = vpop.f32.mrb[0].mxu0
        %v1184 = vpop.f32.mrb[0].mxu0
        %v1185 = vadd.f32 0.0, %v1184
        %v1186 = vpop.f32.mrb[0].mxu0
        %1187 = vmatprep.mubr.bf16.mxu0 0
        %1188 = vmatmul.mubr.bf16.gmra.mrb[0].mxu0 %v1083
        %v1189 = vpop.f32.mrb[0].mxu0
        %v1190 = vadd.f32 0.0, %v1189
        %v1191 = vpop.f32.mrb[0].mxu0
        %v1192 = vpop.f32.mrb[0].mxu0
        %v1193 = vadd.f32 0.0, %v1192
        %v1194 = vpop.f32.mrb[0].mxu0
        %1195 = vmatprep.mubr.bf16.mxu0 0
        %1196 = vmatmul.mubr.bf16.gmra.mrb[0].mxu0 %v1084
        %v1197 = vpop.f32.mrb[0].mxu0
        %v1198 = vadd.f32 0.0, %v1197
        %v1199 = vpop.f32.mrb[0].mxu0
        %v1200 = vpop.f32.mrb[0].mxu0
        %v1201 = vadd.f32 0.0, %v1200
        %v1202 = vpop.f32.mrb[0].mxu0
        %1203 = vmatprep.mubr.bf16.mxu0 0
        %1204 = vmatmul.mubr.bf16.gmra.mrb[0].mxu0 %v1085
        %v1205 = vpop.f32.mrb[0].mxu0
        %v1206 = vadd.f32 0.0, %v1205
        %v1207 = vpop.f32.mrb[0].mxu0
        %v1208 = vpop.f32.mrb[0].mxu0
        %v1209 = vadd.f32 0.0, %v1208
        %v1210 = vpop.f32.mrb[0].mxu0
        %1211 = vmatprep.mubr.bf16.mxu0 0
        %1212 = vmatmul.mubr.bf16.gmra.mrb[0].mxu0 %v1086
        %v1213 = vpop.f32.mrb[0].mxu0
        %v1214 = vadd.f32 0.0, %v1213
        %v1215 = vpop.f32.mrb[0].mxu0
        %v1216 = vpop.f32.mrb[0].mxu0
        %v1217 = vadd.f32 0.0, %v1216
        %v1218 = vpop.f32.mrb[0].mxu0
        %1219 = vmatprep.mubr.bf16.mxu0 0
        %1220 = vmatmul.mubr.bf16.gmra.mrb[0].mxu0 %v1087
        %v1221 = vpop.f32.mrb[0].mxu0
        %v1222 = vadd.f32 0.0, %v1221
        %v1223 = vpop.f32.mrb[0].mxu0
        %v1224 = vpop.f32.mrb[0].mxu0
        %v1225 = vadd.f32 0.0, %v1224
        %v1226 = vpop.f32.mrb[0].mxu0
        %1227 = vmatprep.mubr.bf16.mxu0 0
        %1228 = vmatmul.mubr.bf16.gmra.mrb[0].mxu0 %v1088
        %v1229 = vpop.f32.mrb[0].mxu0
        %v1230 = vadd.f32 0.0, %v1229
        %v1231 = vpop.f32.mrb[0].mxu0
        %v1232 = vpop.f32.mrb[0].mxu0
        %v1233 = vadd.f32 0.0, %v1232
        %v1234 = vpop.f32.mrb[0].mxu0
        %1235 = vmatprep.mubr.bf16.mxu0 0
        %1236 = vmatmul.mubr.bf16.gmra.mrb[0].mxu0 %v1089
        %v1237 = vpop.f32.mrb[0].mxu0
        %v1238 = vadd.f32 0.0, %v1237
        %v1239 = vpop.f32.mrb[0].mxu0
        %v1240 = vpop.f32.mrb[0].mxu0
        %v1241 = vadd.f32 0.0, %v1240
        %v1242 = vpop.f32.mrb[0].mxu0
        %1243 = vmatprep.mubr.bf16.mxu0 0
        %1244 = vmatmul.mubr.bf16.gmra.mrb[0].mxu0 %v1090
        %v1245 = vpop.f32.mrb[0].mxu0
        %v1246 = vadd.f32 0.0, %v1245
        %v1247 = vpop.f32.mrb[0].mxu0
        %v1248 = vpop.f32.mrb[0].mxu0
        %v1249 = vadd.f32 0.0, %v1248
        %v1250 = vpop.f32.mrb[0].mxu0
        %1251 = vdwg.mxu0
        %1252 = vset.pattern.permute.xlu0 2
        %1253 = vperm.xlu0 %1252, %v416
        %v1254 = vpop.permute.xlu0 %1253
        %1255 = vset.pattern.permute.xlu0 2
        %1256 = vperm.xlu0 %1255, %v417
        %v1257 = vpop.permute.xlu0 %1256
        %1258 = vset.pattern.permute.xlu0 2
        %1259 = vperm.xlu0 %1258, %v418
        %v1260 = vpop.permute.xlu0 %1259
        %1261 = vset.pattern.permute.xlu0 2
        %1262 = vperm.xlu0 %1261, %v419
        %v1263 = vpop.permute.xlu0 %1262
        %1264 = vset.pattern.permute.xlu0 2
        %1265 = vperm.xlu0 %1264, %v420
        %v1266 = vpop.permute.xlu0 %1265
        %1267 = vset.pattern.permute.xlu0 2
        %1268 = vperm.xlu0 %1267, %v421
        %v1269 = vpop.permute.xlu0 %1268
        %1270 = vset.pattern.permute.xlu0 2
        %1271 = vperm.xlu0 %1270, %v422
        %v1272 = vpop.permute.xlu0 %1271
        %1273 = vset.pattern.permute.xlu0 2
        %1274 = vperm.xlu0 %1273, %v423
        %v1275 = vpop.permute.xlu0 %1274
        %1276 = vset.pattern.permute.xlu0 2
        %1277 = vperm.xlu0 %1276, %v424
        %v1278 = vpop.permute.xlu0 %1277
        %1279 = vset.pattern.permute.xlu0 2
        %1280 = vperm.xlu0 %1279, %v425
        %v1281 = vpop.permute.xlu0 %1280
        %1282 = vset.pattern.permute.xlu0 2
        %1283 = vperm.xlu0 %1282, %v426
        %v1284 = vpop.permute.xlu0 %1283
        %1285 = vset.pattern.permute.xlu0 2
        %1286 = vperm.xlu0 %1285, %v427
        %v1287 = vpop.permute.xlu0 %1286
        %1288 = vset.pattern.permute.xlu0 2
        %1289 = vperm.xlu0 %1288, %v428
        %v1290 = vpop.permute.xlu0 %1289
        %1291 = vset.pattern.permute.xlu0 2
        %1292 = vperm.xlu0 %1291, %v429
        %v1293 = vpop.permute.xlu0 %1292
        %1294 = vset.pattern.permute.xlu0 2
        %1295 = vperm.xlu0 %1294, %v430
        %v1296 = vpop.permute.xlu0 %1295
        %1297 = vset.pattern.permute.xlu0 2
        %1298 = vperm.xlu0 %1297, %v431
        %v1299 = vpop.permute.xlu0 %1298
        %1300 = vset.pattern.permute.xlu0 2
        %1301 = vperm.xlu0 %1300, %v432
        %v1302 = vpop.permute.xlu0 %1301
        %1303 = vset.pattern.permute.xlu0 2
        %1304 = vperm.xlu0 %1303, %v433
        %v1305 = vpop.permute.xlu0 %1304
        %1306 = vset.pattern.permute.xlu0 2
        %1307 = vperm.xlu0 %1306, %v434
        %v1308 = vpop.permute.xlu0 %1307
        %1309 = vset.pattern.permute.xlu0 2
        %1310 = vperm.xlu0 %1309, %v435
        %v1311 = vpop.permute.xlu0 %1310
        %1312 = vset.pattern.permute.xlu0 2
        %1313 = vperm.xlu0 %1312, %v436
        %v1314 = vpop.permute.xlu0 %1313
        %1315 = vset.pattern.permute.xlu0 2
        %1316 = vperm.xlu0 %1315, %v437
        %v1317 = vpop.permute.xlu0 %1316
        %1318 = vset.pattern.permute.xlu0 2
        %1319 = vperm.xlu0 %1318, %v438
        %v1320 = vpop.permute.xlu0 %1319
        %1321 = vset.pattern.permute.xlu0 2
        %1322 = vperm.xlu0 %1321, %v439
        %v1323 = vpop.permute.xlu0 %1322
        %1324 = vset.pattern.permute.xlu0 2
        %1325 = vperm.xlu0 %1324, %v440
        %v1326 = vpop.permute.xlu0 %1325
        %1327 = vset.pattern.permute.xlu0 2
        %1328 = vperm.xlu0 %1327, %v441
        %v1329 = vpop.permute.xlu0 %1328
        %1330 = vset.pattern.permute.xlu0 2
        %1331 = vperm.xlu0 %1330, %v442
        %v1332 = vpop.permute.xlu0 %1331
        %1333 = vset.pattern.permute.xlu0 2
        %1334 = vperm.xlu0 %1333, %v443
        %v1335 = vpop.permute.xlu0 %1334
        %1336 = vset.pattern.permute.xlu0 2
        %1337 = vperm.xlu0 %1336, %v444
        %v1338 = vpop.permute.xlu0 %1337
        %1339 = vset.pattern.permute.xlu0 2
        %1340 = vperm.xlu0 %1339, %v445
        %v1341 = vpop.permute.xlu0 %1340
        %1342 = vset.pattern.permute.xlu0 2
        %1343 = vperm.xlu0 %1342, %v446
        %v1344 = vpop.permute.xlu0 %1343
        %1345 = vset.pattern.permute.xlu0 2
        %1346 = vperm.xlu0 %1345, %v447
        %v1347 = vpop.permute.xlu0 %1346
        %vm1348 = vcmp.eq.s32.totalorder %v465, %v1254
        %vm1349 = vcmp.eq.s32.totalorder %v465, %v1257
        %vm1350 = vcmp.eq.s32.totalorder %v465, %v1260
        %vm1351 = vcmp.eq.s32.totalorder %v465, %v1263
        %vm1352 = vcmp.eq.s32.totalorder %v465, %v1266
        %vm1353 = vcmp.eq.s32.totalorder %v465, %v1269
        %vm1354 = vcmp.eq.s32.totalorder %v465, %v1272
        %vm1355 = vcmp.eq.s32.totalorder %v465, %v1275
        %vm1356 = vcmp.eq.s32.totalorder %v465, %v1278
        %vm1357 = vcmp.eq.s32.totalorder %v465, %v1281
        %vm1358 = vcmp.eq.s32.totalorder %v465, %v1284
        %vm1359 = vcmp.eq.s32.totalorder %v465, %v1287
        %vm1360 = vcmp.eq.s32.totalorder %v465, %v1290
        %vm1361 = vcmp.eq.s32.totalorder %v465, %v1293
        %vm1362 = vcmp.eq.s32.totalorder %v465, %v1296
        %vm1363 = vcmp.eq.s32.totalorder %v465, %v1299
        %vm1364 = vcmp.eq.s32.totalorder %v465, %v1302
        %vm1365 = vcmp.eq.s32.totalorder %v465, %v1305
        %vm1366 = vcmp.eq.s32.totalorder %v465, %v1308
        %vm1367 = vcmp.eq.s32.totalorder %v465, %v1311
        %vm1368 = vcmp.eq.s32.totalorder %v465, %v1314
        %vm1369 = vcmp.eq.s32.totalorder %v465, %v1317
        %vm1370 = vcmp.eq.s32.totalorder %v465, %v1320
        %vm1371 = vcmp.eq.s32.totalorder %v465, %v1323
        %vm1372 = vcmp.eq.s32.totalorder %v465, %v1326
        %vm1373 = vcmp.eq.s32.totalorder %v465, %v1329
        %vm1374 = vcmp.eq.s32.totalorder %v465, %v1332
        %vm1375 = vcmp.eq.s32.totalorder %v465, %v1335
        %vm1376 = vcmp.eq.s32.totalorder %v465, %v1338
        %vm1377 = vcmp.eq.s32.totalorder %v465, %v1341
        %vm1378 = vcmp.eq.s32.totalorder %v465, %v1344
        %vm1379 = vcmp.eq.s32.totalorder %v465, %v1347
        %v1380 = vsel %vm1348, 1, 0
        %v1381 = vsel %vm1349, 1, 0
        %v1382 = vsel %vm1350, 1, 0
        %v1383 = vsel %vm1351, 1, 0
        %v1384 = vsel %vm1352, 1, 0
        %v1385 = vsel %vm1353, 1, 0
        %v1386 = vsel %vm1354, 1, 0
        %v1387 = vsel %vm1355, 1, 0
        %v1388 = vsel %vm1356, 1, 0
        %v1389 = vsel %vm1357, 1, 0
        %v1390 = vsel %vm1358, 1, 0
        %v1391 = vsel %vm1359, 1, 0
        %v1392 = vsel %vm1360, 1, 0
        %v1393 = vsel %vm1361, 1, 0
        %v1394 = vsel %vm1362, 1, 0
        %v1395 = vsel %vm1363, 1, 0
        %v1396 = vsel %vm1364, 1, 0
        %v1397 = vsel %vm1365, 1, 0
        %v1398 = vsel %vm1366, 1, 0
        %v1399 = vsel %vm1367, 1, 0
        %v1400 = vsel %vm1368, 1, 0
        %v1401 = vsel %vm1369, 1, 0
        %v1402 = vsel %vm1370, 1, 0
        %v1403 = vsel %vm1371, 1, 0
        %v1404 = vsel %vm1372, 1, 0
        %v1405 = vsel %vm1373, 1, 0
        %v1406 = vsel %vm1374, 1, 0
        %v1407 = vsel %vm1375, 1, 0
        %v1408 = vsel %vm1376, 1, 0
        %v1409 = vsel %vm1377, 1, 0
        %v1410 = vsel %vm1378, 1, 0
        %v1411 = vsel %vm1379, 1, 0
        %v1412 = vcvt.s32.f32 %v1380
        %v1413 = vcvt.s32.f32 %v1381
        %v1414 = vcvt.s32.f32 %v1382
        %v1415 = vcvt.s32.f32 %v1383
        %v1416 = vcvt.s32.f32 %v1384
        %v1417 = vcvt.s32.f32 %v1385
        %v1418 = vcvt.s32.f32 %v1386
        %v1419 = vcvt.s32.f32 %v1387
        %v1420 = vcvt.s32.f32 %v1388
        %v1421 = vcvt.s32.f32 %v1389
        %v1422 = vcvt.s32.f32 %v1390
        %v1423 = vcvt.s32.f32 %v1391
        %v1424 = vcvt.s32.f32 %v1392
        %v1425 = vcvt.s32.f32 %v1393
        %v1426 = vcvt.s32.f32 %v1394
        %v1427 = vcvt.s32.f32 %v1395
        %v1428 = vcvt.s32.f32 %v1396
        %v1429 = vcvt.s32.f32 %v1397
        %v1430 = vcvt.s32.f32 %v1398
        %v1431 = vcvt.s32.f32 %v1399
        %v1432 = vcvt.s32.f32 %v1400
        %v1433 = vcvt.s32.f32 %v1401
        %v1434 = vcvt.s32.f32 %v1402
        %v1435 = vcvt.s32.f32 %v1403
        %v1436 = vcvt.s32.f32 %v1404
        %v1437 = vcvt.s32.f32 %v1405
        %v1438 = vcvt.s32.f32 %v1406
        %v1439 = vcvt.s32.f32 %v1407
        %v1440 = vcvt.s32.f32 %v1408
        %v1441 = vcvt.s32.f32 %v1409
        %v1442 = vcvt.s32.f32 %v1410
        %v1443 = vcvt.s32.f32 %v1411
        %v1444 = vpack.c.bf16 %v1413, %v1412
        %v1445 = vpack.c.bf16 %v1415, %v1414
        %v1446 = vpack.c.bf16 %v1417, %v1416
        %v1447 = vpack.c.bf16 %v1419, %v1418
        %v1448 = vpack.c.bf16 %v1421, %v1420
        %v1449 = vpack.c.bf16 %v1423, %v1422
        %v1450 = vpack.c.bf16 %v1425, %v1424
        %v1451 = vpack.c.bf16 %v1427, %v1426
        %v1452 = vpack.c.bf16 %v1429, %v1428
        %v1453 = vpack.c.bf16 %v1431, %v1430
        %v1454 = vpack.c.bf16 %v1433, %v1432
        %v1455 = vpack.c.bf16 %v1435, %v1434
        %v1456 = vpack.c.bf16 %v1437, %v1436
        %v1457 = vpack.c.bf16 %v1439, %v1438
        %v1458 = vpack.c.bf16 %v1441, %v1440
        %v1459 = vpack.c.bf16 %v1443, %v1442
        %1460 = vmatprep.subr.bf16.mxu0 0
        %1461 = vmatpush1.bf16.msra.mxu0 %v706
        %1462 = vmatprep.subr.bf16.mxu0 0
        %1463 = vmatpush1.bf16.msra.mxu0 %v707
        %1464 = vmatprep.subr.bf16.mxu0 0
        %1465 = vmatpush1.bf16.msra.mxu0 %v708
        %1466 = vmatprep.subr.bf16.mxu0 0
        %1467 = vmatpush1.bf16.msra.mxu0 %v709
        %1468 = vmatprep.subr.bf16.mxu0 0
        %1469 = vmatpush1.bf16.msra.mxu0 %v710
        %1470 = vmatprep.subr.bf16.mxu0 0
        %1471 = vmatpush1.bf16.msra.mxu0 %v711
        %1472 = vmatprep.subr.bf16.mxu0 0
        %1473 = vmatpush1.bf16.msra.mxu0 %v712
        %1474 = vmatprep.subr.bf16.mxu0 0
        %1475 = vmatpush1.bf16.msra.mxu0 %v713
        %1476 = vmatprep.subr.bf16.mxu0 0
        %1477 = vmatpush1.bf16.msra.mxu0 0
        %1478 = vmatprep.subr.bf16.mxu0 0
        %1479 = vmatpush1.bf16.msra.mxu0 0
        %1480 = vmatprep.subr.bf16.mxu0 0
        %1481 = vmatpush1.bf16.msra.mxu0 0
        %1482 = vmatprep.subr.bf16.mxu0 0
        %1483 = vmatpush1.bf16.msra.mxu0 0
        %1484 = vmatprep.subr.bf16.mxu0 0
        %1485 = vmatpush1.bf16.msra.mxu0 0
        %1486 = vmatprep.subr.bf16.mxu0 0
        %1487 = vmatpush1.bf16.msra.mxu0 0
        %1488 = vmatprep.subr.bf16.mxu0 0
        %1489 = vmatpush1.bf16.msra.mxu0 0
        %1490 = vmatprep.subr.bf16.mxu0 0
        %1491 = vmatpush1.bf16.msra.mxu0 0
        %1492 = vmatprep.mubr.bf16.mxu0 0
        %1493 = vmatmul.mubr.bf16.gmra.mrb[0].mxu0 %v1444
        %v1494 = vpop.f32.mrb[0].mxu0
        %v1495 = vadd.f32 0.0, %v1494
        %v1496 = vpop.f32.mrb[0].mxu0
        %v1497 = vpop.f32.mrb[0].mxu0
        %v1498 = vadd.f32 0.0, %v1497
        %v1499 = vpop.f32.mrb[0].mxu0
        %1500 = vmatprep.mubr.bf16.mxu0 0
        %1501 = vmatmul.mubr.bf16.gmra.mrb[0].mxu0 %v1445
        %v1502 = vpop.f32.mrb[0].mxu0
        %v1503 = vadd.f32 0.0, %v1502
        %v1504 = vpop.f32.mrb[0].mxu0
        %v1505 = vpop.f32.mrb[0].mxu0
        %v1506 = vadd.f32 0.0, %v1505
        %v1507 = vpop.f32.mrb[0].mxu0
        %1508 = vmatprep.mubr.bf16.mxu0 0
        %1509 = vmatmul.mubr.bf16.gmra.mrb[0].mxu0 %v1446
        %v1510 = vpop.f32.mrb[0].mxu0
        %v1511 = vadd.f32 0.0, %v1510
        %v1512 = vpop.f32.mrb[0].mxu0
        %v1513 = vpop.f32.mrb[0].mxu0
        %v1514 = vadd.f32 0.0, %v1513
        %v1515 = vpop.f32.mrb[0].mxu0
        %1516 = vmatprep.mubr.bf16.mxu0 0
        %1517 = vmatmul.mubr.bf16.gmra.mrb[0].mxu0 %v1447
        %v1518 = vpop.f32.mrb[0].mxu0
        %v1519 = vadd.f32 0.0, %v1518
        %v1520 = vpop.f32.mrb[0].mxu0
        %v1521 = vpop.f32.mrb[0].mxu0
        %v1522 = vadd.f32 0.0, %v1521
        %v1523 = vpop.f32.mrb[0].mxu0
        %1524 = vmatprep.mubr.bf16.mxu0 0
        %1525 = vmatmul.mubr.bf16.gmra.mrb[0].mxu0 %v1448
        %v1526 = vpop.f32.mrb[0].mxu0
        %v1527 = vadd.f32 0.0, %v1526
        %v1528 = vpop.f32.mrb[0].mxu0
        %v1529 = vpop.f32.mrb[0].mxu0
        %v1530 = vadd.f32 0.0, %v1529
        %v1531 = vpop.f32.mrb[0].mxu0
        %1532 = vmatprep.mubr.bf16.mxu0 0
        %1533 = vmatmul.mubr.bf16.gmra.mrb[0].mxu0 %v1449
        %v1534 = vpop.f32.mrb[0].mxu0
        %v1535 = vadd.f32 0.0, %v1534
        %v1536 = vpop.f32.mrb[0].mxu0
        %v1537 = vpop.f32.mrb[0].mxu0
        %v1538 = vadd.f32 0.0, %v1537
        %v1539 = vpop.f32.mrb[0].mxu0
        %1540 = vmatprep.mubr.bf16.mxu0 0
        %1541 = vmatmul.mubr.bf16.gmra.mrb[0].mxu0 %v1450
        %v1542 = vpop.f32.mrb[0].mxu0
        %v1543 = vadd.f32 0.0, %v1542
        %v1544 = vpop.f32.mrb[0].mxu0
        %v1545 = vpop.f32.mrb[0].mxu0
        %v1546 = vadd.f32 0.0, %v1545
        %v1547 = vpop.f32.mrb[0].mxu0
        %1548 = vmatprep.mubr.bf16.mxu0 0
        %1549 = vmatmul.mubr.bf16.gmra.mrb[0].mxu0 %v1451
        %v1550 = vpop.f32.mrb[0].mxu0
        %v1551 = vadd.f32 0.0, %v1550
        %v1552 = vpop.f32.mrb[0].mxu0
        %v1553 = vpop.f32.mrb[0].mxu0
        %v1554 = vadd.f32 0.0, %v1553
        %v1555 = vpop.f32.mrb[0].mxu0
        %1556 = vmatprep.mubr.bf16.mxu0 0
        %1557 = vmatmul.mubr.bf16.gmra.mrb[0].mxu0 %v1452
        %v1558 = vpop.f32.mrb[0].mxu0
        %v1559 = vadd.f32 0.0, %v1558
        %v1560 = vpop.f32.mrb[0].mxu0
        %v1561 = vpop.f32.mrb[0].mxu0
        %v1562 = vadd.f32 0.0, %v1561
        %v1563 = vpop.f32.mrb[0].mxu0
        %1564 = vmatprep.mubr.bf16.mxu0 0
        %1565 = vmatmul.mubr.bf16.gmra.mrb[0].mxu0 %v1453
        %v1566 = vpop.f32.mrb[0].mxu0
        %v1567 = vadd.f32 0.0, %v1566
        %v1568 = vpop.f32.mrb[0].mxu0
        %v1569 = vpop.f32.mrb[0].mxu0
        %v1570 = vadd.f32 0.0, %v1569
        %v1571 = vpop.f32.mrb[0].mxu0
        %1572 = vmatprep.mubr.bf16.mxu0 0
        %1573 = vmatmul.mubr.bf16.gmra.mrb[0].mxu0 %v1454
        %v1574 = vpop.f32.mrb[0].mxu0
        %v1575 = vadd.f32 0.0, %v1574
        %v1576 = vpop.f32.mrb[0].mxu0
        %v1577 = vpop.f32.mrb[0].mxu0
        %v1578 = vadd.f32 0.0, %v1577
        %v1579 = vpop.f32.mrb[0].mxu0
        %1580 = vmatprep.mubr.bf16.mxu0 0
        %1581 = vmatmul.mubr.bf16.gmra.mrb[0].mxu0 %v1455
        %v1582 = vpop.f32.mrb[0].mxu0
        %v1583 = vadd.f32 0.0, %v1582
        %v1584 = vpop.f32.mrb[0].mxu0
        %v1585 = vpop.f32.mrb[0].mxu0
        %v1586 = vadd.f32 0.0, %v1585
        %v1587 = vpop.f32.mrb[0].mxu0
        %1588 = vmatprep.mubr.bf16.mxu0 0
        %1589 = vmatmul.mubr.bf16.gmra.mrb[0].mxu0 %v1456
        %v1590 = vpop.f32.mrb[0].mxu0
        %v1591 = vadd.f32 0.0, %v1590
        %v1592 = vpop.f32.mrb[0].mxu0
        %v1593 = vpop.f32.mrb[0].mxu0
        %v1594 = vadd.f32 0.0, %v1593
        %v1595 = vpop.f32.mrb[0].mxu0
        %1596 = vmatprep.mubr.bf16.mxu0 0
        %1597 = vmatmul.mubr.bf16.gmra.mrb[0].mxu0 %v1457
        %v1598 = vpop.f32.mrb[0].mxu0
        %v1599 = vadd.f32 0.0, %v1598
        %v1600 = vpop.f32.mrb[0].mxu0
        %v1601 = vpop.f32.mrb[0].mxu0
        %v1602 = vadd.f32 0.0, %v1601
        %v1603 = vpop.f32.mrb[0].mxu0
        %1604 = vmatprep.mubr.bf16.mxu0 0
        %1605 = vmatmul.mubr.bf16.gmra.mrb[0].mxu0 %v1458
        %v1606 = vpop.f32.mrb[0].mxu0
        %v1607 = vadd.f32 0.0, %v1606
        %v1608 = vpop.f32.mrb[0].mxu0
        %v1609 = vpop.f32.mrb[0].mxu0
        %v1610 = vadd.f32 0.0, %v1609
        %v1611 = vpop.f32.mrb[0].mxu0
        %1612 = vmatprep.mubr.bf16.mxu0 0
        %1613 = vmatmul.mubr.bf16.gmra.mrb[0].mxu0 %v1459
        %v1614 = vpop.f32.mrb[0].mxu0
        %v1615 = vadd.f32 0.0, %v1614
        %v1616 = vpop.f32.mrb[0].mxu0
        %v1617 = vpop.f32.mrb[0].mxu0
        %v1618 = vadd.f32 0.0, %v1617
        %v1619 = vpop.f32.mrb[0].mxu0
        %1620 = vdwg.mxu0
        %1621 = vset.pattern.permute.xlu0 3
        %1622 = vperm.xlu0 %1621, %v416
        %v1623 = vpop.permute.xlu0 %1622
        %1624 = vset.pattern.permute.xlu0 3
        %1625 = vperm.xlu0 %1624, %v417
        %v1626 = vpop.permute.xlu0 %1625
        %1627 = vset.pattern.permute.xlu0 3
        %1628 = vperm.xlu0 %1627, %v418
        %v1629 = vpop.permute.xlu0 %1628
        %1630 = vset.pattern.permute.xlu0 3
        %1631 = vperm.xlu0 %1630, %v419
        %v1632 = vpop.permute.xlu0 %1631
        %1633 = vset.pattern.permute.xlu0 3
        %1634 = vperm.xlu0 %1633, %v420
        %v1635 = vpop.permute.xlu0 %1634
        %1636 = vset.pattern.permute.xlu0 3
        %1637 = vperm.xlu0 %1636, %v421
        %v1638 = vpop.permute.xlu0 %1637
        %1639 = vset.pattern.permute.xlu0 3
        %1640 = vperm.xlu0 %1639, %v422
        %v1641 = vpop.permute.xlu0 %1640
        %1642 = vset.pattern.permute.xlu0 3
        %1643 = vperm.xlu0 %1642, %v423
        %v1644 = vpop.permute.xlu0 %1643
        %1645 = vset.pattern.permute.xlu0 3
        %1646 = vperm.xlu0 %1645, %v424
        %v1647 = vpop.permute.xlu0 %1646
        %1648 = vset.pattern.permute.xlu0 3
        %1649 = vperm.xlu0 %1648, %v425
        %v1650 = vpop.permute.xlu0 %1649
        %1651 = vset.pattern.permute.xlu0 3
        %1652 = vperm.xlu0 %1651, %v426
        %v1653 = vpop.permute.xlu0 %1652
        %1654 = vset.pattern.permute.xlu0 3
        %1655 = vperm.xlu0 %1654, %v427
        %v1656 = vpop.permute.xlu0 %1655
        %1657 = vset.pattern.permute.xlu0 3
        %1658 = vperm.xlu0 %1657, %v428
        %v1659 = vpop.permute.xlu0 %1658
        %1660 = vset.pattern.permute.xlu0 3
        %1661 = vperm.xlu0 %1660, %v429
        %v1662 = vpop.permute.xlu0 %1661
        %1663 = vset.pattern.permute.xlu0 3
        %1664 = vperm.xlu0 %1663, %v430
        %v1665 = vpop.permute.xlu0 %1664
        %1666 = vset.pattern.permute.xlu0 3
        %1667 = vperm.xlu0 %1666, %v431
        %v1668 = vpop.permute.xlu0 %1667
        %1669 = vset.pattern.permute.xlu0 3
        %1670 = vperm.xlu0 %1669, %v432
        %v1671 = vpop.permute.xlu0 %1670
        %1672 = vset.pattern.permute.xlu0 3
        %1673 = vperm.xlu0 %1672, %v433
        %v1674 = vpop.permute.xlu0 %1673
        %1675 = vset.pattern.permute.xlu0 3
        %1676 = vperm.xlu0 %1675, %v434
        %v1677 = vpop.permute.xlu0 %1676
        %1678 = vset.pattern.permute.xlu0 3
        %1679 = vperm.xlu0 %1678, %v435
        %v1680 = vpop.permute.xlu0 %1679
        %1681 = vset.pattern.permute.xlu0 3
        %1682 = vperm.xlu0 %1681, %v436
        %v1683 = vpop.permute.xlu0 %1682
        %1684 = vset.pattern.permute.xlu0 3
        %1685 = vperm.xlu0 %1684, %v437
        %v1686 = vpop.permute.xlu0 %1685
        %1687 = vset.pattern.permute.xlu0 3
        %1688 = vperm.xlu0 %1687, %v438
        %v1689 = vpop.permute.xlu0 %1688
        %1690 = vset.pattern.permute.xlu0 3
        %1691 = vperm.xlu0 %1690, %v439
        %v1692 = vpop.permute.xlu0 %1691
        %1693 = vset.pattern.permute.xlu0 3
        %1694 = vperm.xlu0 %1693, %v440
        %v1695 = vpop.permute.xlu0 %1694
        %1696 = vset.pattern.permute.xlu0 3
        %1697 = vperm.xlu0 %1696, %v441
        %v1698 = vpop.permute.xlu0 %1697
        %1699 = vset.pattern.permute.xlu0 3
        %1700 = vperm.xlu0 %1699, %v442
        %v1701 = vpop.permute.xlu0 %1700
        %1702 = vset.pattern.permute.xlu0 3
        %1703 = vperm.xlu0 %1702, %v443
        %v1704 = vpop.permute.xlu0 %1703
        %1705 = vset.pattern.permute.xlu0 3
        %1706 = vperm.xlu0 %1705, %v444
        %v1707 = vpop.permute.xlu0 %1706
        %1708 = vset.pattern.permute.xlu0 3
        %1709 = vperm.xlu0 %1708, %v445
        %v1710 = vpop.permute.xlu0 %1709
        %1711 = vset.pattern.permute.xlu0 3
        %1712 = vperm.xlu0 %1711, %v446
        %v1713 = vpop.permute.xlu0 %1712
        %1714 = vset.pattern.permute.xlu0 3
        %1715 = vperm.xlu0 %1714, %v447
        %v1716 = vpop.permute.xlu0 %1715
        %vm1717 = vcmp.eq.s32.totalorder %v465, %v1623
        %vm1718 = vcmp.eq.s32.totalorder %v465, %v1626
        %vm1719 = vcmp.eq.s32.totalorder %v465, %v1629
        %vm1720 = vcmp.eq.s32.totalorder %v465, %v1632
        %vm1721 = vcmp.eq.s32.totalorder %v465, %v1635
        %vm1722 = vcmp.eq.s32.totalorder %v465, %v1638
        %vm1723 = vcmp.eq.s32.totalorder %v465, %v1641
        %vm1724 = vcmp.eq.s32.totalorder %v465, %v1644
        %vm1725 = vcmp.eq.s32.totalorder %v465, %v1647
        %vm1726 = vcmp.eq.s32.totalorder %v465, %v1650
        %vm1727 = vcmp.eq.s32.totalorder %v465, %v1653
        %vm1728 = vcmp.eq.s32.totalorder %v465, %v1656
        %vm1729 = vcmp.eq.s32.totalorder %v465, %v1659
        %vm1730 = vcmp.eq.s32.totalorder %v465, %v1662
        %vm1731 = vcmp.eq.s32.totalorder %v465, %v1665
        %vm1732 = vcmp.eq.s32.totalorder %v465, %v1668
        %vm1733 = vcmp.eq.s32.totalorder %v465, %v1671
        %vm1734 = vcmp.eq.s32.totalorder %v465, %v1674
        %vm1735 = vcmp.eq.s32.totalorder %v465, %v1677
        %vm1736 = vcmp.eq.s32.totalorder %v465, %v1680
        %vm1737 = vcmp.eq.s32.totalorder %v465, %v1683
        %vm1738 = vcmp.eq.s32.totalorder %v465, %v1686
        %vm1739 = vcmp.eq.s32.totalorder %v465, %v1689
        %vm1740 = vcmp.eq.s32.totalorder %v465, %v1692
        %vm1741 = vcmp.eq.s32.totalorder %v465, %v1695
        %vm1742 = vcmp.eq.s32.totalorder %v465, %v1698
        %vm1743 = vcmp.eq.s32.totalorder %v465, %v1701
        %vm1744 = vcmp.eq.s32.totalorder %v465, %v1704
        %vm1745 = vcmp.eq.s32.totalorder %v465, %v1707
        %vm1746 = vcmp.eq.s32.totalorder %v465, %v1710
        %vm1747 = vcmp.eq.s32.totalorder %v465, %v1713
        %vm1748 = vcmp.eq.s32.totalorder %v465, %v1716
        %v1749 = vsel %vm1717, 1, 0
        %v1750 = vsel %vm1718, 1, 0
        %v1751 = vsel %vm1719, 1, 0
        %v1752 = vsel %vm1720, 1, 0
        %v1753 = vsel %vm1721, 1, 0
        %v1754 = vsel %vm1722, 1, 0
        %v1755 = vsel %vm1723, 1, 0
        %v1756 = vsel %vm1724, 1, 0
        %v1757 = vsel %vm1725, 1, 0
        %v1758 = vsel %vm1726, 1, 0
        %v1759 = vsel %vm1727, 1, 0
        %v1760 = vsel %vm1728, 1, 0
        %v1761 = vsel %vm1729, 1, 0
        %v1762 = vsel %vm1730, 1, 0
        %v1763 = vsel %vm1731, 1, 0
        %v1764 = vsel %vm1732, 1, 0
        %v1765 = vsel %vm1733, 1, 0
        %v1766 = vsel %vm1734, 1, 0
        %v1767 = vsel %vm1735, 1, 0
        %v1768 = vsel %vm1736, 1, 0
        %v1769 = vsel %vm1737, 1, 0
        %v1770 = vsel %vm1738, 1, 0
        %v1771 = vsel %vm1739, 1, 0
        %v1772 = vsel %vm1740, 1, 0
        %v1773 = vsel %vm1741, 1, 0
        %v1774 = vsel %vm1742, 1, 0
        %v1775 = vsel %vm1743, 1, 0
        %v1776 = vsel %vm1744, 1, 0
        %v1777 = vsel %vm1745, 1, 0
        %v1778 = vsel %vm1746, 1, 0
        %v1779 = vsel %vm1747, 1, 0
        %v1780 = vsel %vm1748, 1, 0
        %v1781 = vcvt.s32.f32 %v1749
        %v1782 = vcvt.s32.f32 %v1750
        %v1783 = vcvt.s32.f32 %v1751
        %v1784 = vcvt.s32.f32 %v1752
        %v1785 = vcvt.s32.f32 %v1753
        %v1786 = vcvt.s32.f32 %v1754
        %v1787 = vcvt.s32.f32 %v1755
        %v1788 = vcvt.s32.f32 %v1756
        %v1789 = vcvt.s32.f32 %v1757
        %v1790 = vcvt.s32.f32 %v1758
        %v1791 = vcvt.s32.f32 %v1759
        %v1792 = vcvt.s32.f32 %v1760
        %v1793 = vcvt.s32.f32 %v1761
        %v1794 = vcvt.s32.f32 %v1762
        %v1795 = vcvt.s32.f32 %v1763
        %v1796 = vcvt.s32.f32 %v1764
        %v1797 = vcvt.s32.f32 %v1765
        %v1798 = vcvt.s32.f32 %v1766
        %v1799 = vcvt.s32.f32 %v1767
        %v1800 = vcvt.s32.f32 %v1768
        %v1801 = vcvt.s32.f32 %v1769
        %v1802 = vcvt.s32.f32 %v1770
        %v1803 = vcvt.s32.f32 %v1771
        %v1804 = vcvt.s32.f32 %v1772
        %v1805 = vcvt.s32.f32 %v1773
        %v1806 = vcvt.s32.f32 %v1774
        %v1807 = vcvt.s32.f32 %v1775
        %v1808 = vcvt.s32.f32 %v1776
        %v1809 = vcvt.s32.f32 %v1777
        %v1810 = vcvt.s32.f32 %v1778
        %v1811 = vcvt.s32.f32 %v1779
        %v1812 = vcvt.s32.f32 %v1780
        %v1813 = vpack.c.bf16 %v1782, %v1781
        %v1814 = vpack.c.bf16 %v1784, %v1783
        %v1815 = vpack.c.bf16 %v1786, %v1785
        %v1816 = vpack.c.bf16 %v1788, %v1787
        %v1817 = vpack.c.bf16 %v1790, %v1789
        %v1818 = vpack.c.bf16 %v1792, %v1791
        %v1819 = vpack.c.bf16 %v1794, %v1793
        %v1820 = vpack.c.bf16 %v1796, %v1795
        %v1821 = vpack.c.bf16 %v1798, %v1797
        %v1822 = vpack.c.bf16 %v1800, %v1799
        %v1823 = vpack.c.bf16 %v1802, %v1801
        %v1824 = vpack.c.bf16 %v1804, %v1803
        %v1825 = vpack.c.bf16 %v1806, %v1805
        %v1826 = vpack.c.bf16 %v1808, %v1807
        %v1827 = vpack.c.bf16 %v1810, %v1809
        %v1828 = vpack.c.bf16 %v1812, %v1811
        %1829 = vmatprep.subr.bf16.mxu0 0
        %1830 = vmatpush1.bf16.msra.mxu0 %v706
        %1831 = vmatprep.subr.bf16.mxu0 0
        %1832 = vmatpush1.bf16.msra.mxu0 %v707
        %1833 = vmatprep.subr.bf16.mxu0 0
        %1834 = vmatpush1.bf16.msra.mxu0 %v708
        %1835 = vmatprep.subr.bf16.mxu0 0
        %1836 = vmatpush1.bf16.msra.mxu0 %v709
        %1837 = vmatprep.subr.bf16.mxu0 0
        %1838 = vmatpush1.bf16.msra.mxu0 %v710
        %1839 = vmatprep.subr.bf16.mxu0 0
        %1840 = vmatpush1.bf16.msra.mxu0 %v711
        %1841 = vmatprep.subr.bf16.mxu0 0
        %1842 = vmatpush1.bf16.msra.mxu0 %v712
        %1843 = vmatprep.subr.bf16.mxu0 0
        %1844 = vmatpush1.bf16.msra.mxu0 %v713
        %1845 = vmatprep.subr.bf16.mxu0 0
        %1846 = vmatpush1.bf16.msra.mxu0 0
        %1847 = vmatprep.subr.bf16.mxu0 0
        %1848 = vmatpush1.bf16.msra.mxu0 0
        %1849 = vmatprep.subr.bf16.mxu0 0
        %1850 = vmatpush1.bf16.msra.mxu0 0
        %1851 = vmatprep.subr.bf16.mxu0 0
        %1852 = vmatpush1.bf16.msra.mxu0 0
        %1853 = vmatprep.subr.bf16.mxu0 0
        %1854 = vmatpush1.bf16.msra.mxu0 0
        %1855 = vmatprep.subr.bf16.mxu0 0
        %1856 = vmatpush1.bf16.msra.mxu0 0
        %1857 = vmatprep.subr.bf16.mxu0 0
        %1858 = vmatpush1.bf16.msra.mxu0 0
        %1859 = vmatprep.subr.bf16.mxu0 0
        %1860 = vmatpush1.bf16.msra.mxu0 0
        %1861 = vmatprep.mubr.bf16.mxu0 0
        %1862 = vmatmul.mubr.bf16.gmra.mrb[0].mxu0 %v1813
        %v1863 = vpop.f32.mrb[0].mxu0
        %v1864 = vadd.f32 0.0, %v1863
        %v1865 = vpop.f32.mrb[0].mxu0
        %v1866 = vpop.f32.mrb[0].mxu0
        %v1867 = vadd.f32 0.0, %v1866
        %v1868 = vpop.f32.mrb[0].mxu0
        %1869 = vmatprep.mubr.bf16.mxu0 0
        %1870 = vmatmul.mubr.bf16.gmra.mrb[0].mxu0 %v1814
        %v1871 = vpop.f32.mrb[0].mxu0
        %v1872 = vadd.f32 0.0, %v1871
        %v1873 = vpop.f32.mrb[0].mxu0
        %v1874 = vpop.f32.mrb[0].mxu0
        %v1875 = vadd.f32 0.0, %v1874
        %v1876 = vpop.f32.mrb[0].mxu0
        %1877 = vmatprep.mubr.bf16.mxu0 0
        %1878 = vmatmul.mubr.bf16.gmra.mrb[0].mxu0 %v1815
        %v1879 = vpop.f32.mrb[0].mxu0
        %v1880 = vadd.f32 0.0, %v1879
        %v1881 = vpop.f32.mrb[0].mxu0
        %v1882 = vpop.f32.mrb[0].mxu0
        %v1883 = vadd.f32 0.0, %v1882
        %v1884 = vpop.f32.mrb[0].mxu0
        %1885 = vmatprep.mubr.bf16.mxu0 0
        %1886 = vmatmul.mubr.bf16.gmra.mrb[0].mxu0 %v1816
        %v1887 = vpop.f32.mrb[0].mxu0
        %v1888 = vadd.f32 0.0, %v1887
        %v1889 = vpop.f32.mrb[0].mxu0
        %v1890 = vpop.f32.mrb[0].mxu0
        %v1891 = vadd.f32 0.0, %v1890
        %v1892 = vpop.f32.mrb[0].mxu0
        %1893 = vmatprep.mubr.bf16.mxu0 0
        %1894 = vmatmul.mubr.bf16.gmra.mrb[0].mxu0 %v1817
        %v1895 = vpop.f32.mrb[0].mxu0
        %v1896 = vadd.f32 0.0, %v1895
        %v1897 = vpop.f32.mrb[0].mxu0
        %v1898 = vpop.f32.mrb[0].mxu0
        %v1899 = vadd.f32 0.0, %v1898
        %v1900 = vpop.f32.mrb[0].mxu0
        %1901 = vmatprep.mubr.bf16.mxu0 0
        %1902 = vmatmul.mubr.bf16.gmra.mrb[0].mxu0 %v1818
        %v1903 = vpop.f32.mrb[0].mxu0
        %v1904 = vadd.f32 0.0, %v1903
        %v1905 = vpop.f32.mrb[0].mxu0
        %v1906 = vpop.f32.mrb[0].mxu0
        %v1907 = vadd.f32 0.0, %v1906
        %v1908 = vpop.f32.mrb[0].mxu0
        %1909 = vmatprep.mubr.bf16.mxu0 0
        %1910 = vmatmul.mubr.bf16.gmra.mrb[0].mxu0 %v1819
        %v1911 = vpop.f32.mrb[0].mxu0
        %v1912 = vadd.f32 0.0, %v1911
        %v1913 = vpop.f32.mrb[0].mxu0
        %v1914 = vpop.f32.mrb[0].mxu0
        %v1915 = vadd.f32 0.0, %v1914
        %v1916 = vpop.f32.mrb[0].mxu0
        %1917 = vmatprep.mubr.bf16.mxu0 0
        %1918 = vmatmul.mubr.bf16.gmra.mrb[0].mxu0 %v1820
        %v1919 = vpop.f32.mrb[0].mxu0
        %v1920 = vadd.f32 0.0, %v1919
        %v1921 = vpop.f32.mrb[0].mxu0
        %v1922 = vpop.f32.mrb[0].mxu0
        %v1923 = vadd.f32 0.0, %v1922
        %v1924 = vpop.f32.mrb[0].mxu0
        %1925 = vmatprep.mubr.bf16.mxu0 0
        %1926 = vmatmul.mubr.bf16.gmra.mrb[0].mxu0 %v1821
        %v1927 = vpop.f32.mrb[0].mxu0
        %v1928 = vadd.f32 0.0, %v1927
        %v1929 = vpop.f32.mrb[0].mxu0
        %v1930 = vpop.f32.mrb[0].mxu0
        %v1931 = vadd.f32 0.0, %v1930
        %v1932 = vpop.f32.mrb[0].mxu0
        %1933 = vmatprep.mubr.bf16.mxu0 0
        %1934 = vmatmul.mubr.bf16.gmra.mrb[0].mxu0 %v1822
        %v1935 = vpop.f32.mrb[0].mxu0
        %v1936 = vadd.f32 0.0, %v1935
        %v1937 = vpop.f32.mrb[0].mxu0
        %v1938 = vpop.f32.mrb[0].mxu0
        %v1939 = vadd.f32 0.0, %v1938
        %v1940 = vpop.f32.mrb[0].mxu0
        %1941 = vmatprep.mubr.bf16.mxu0 0
        %1942 = vmatmul.mubr.bf16.gmra.mrb[0].mxu0 %v1823
        %v1943 = vpop.f32.mrb[0].mxu0
        %v1944 = vadd.f32 0.0, %v1943
        %v1945 = vpop.f32.mrb[0].mxu0
        %v1946 = vpop.f32.mrb[0].mxu0
        %v1947 = vadd.f32 0.0, %v1946
        %v1948 = vpop.f32.mrb[0].mxu0
        %1949 = vmatprep.mubr.bf16.mxu0 0
        %1950 = vmatmul.mubr.bf16.gmra.mrb[0].mxu0 %v1824
        %v1951 = vpop.f32.mrb[0].mxu0
        %v1952 = vadd.f32 0.0, %v1951
        %v1953 = vpop.f32.mrb[0].mxu0
        %v1954 = vpop.f32.mrb[0].mxu0
        %v1955 = vadd.f32 0.0, %v1954
        %v1956 = vpop.f32.mrb[0].mxu0
        %1957 = vmatprep.mubr.bf16.mxu0 0
        %1958 = vmatmul.mubr.bf16.gmra.mrb[0].mxu0 %v1825
        %v1959 = vpop.f32.mrb[0].mxu0
        %v1960 = vadd.f32 0.0, %v1959
        %v1961 = vpop.f32.mrb[0].mxu0
        %v1962 = vpop.f32.mrb[0].mxu0
        %v1963 = vadd.f32 0.0, %v1962
        %v1964 = vpop.f32.mrb[0].mxu0
        %1965 = vmatprep.mubr.bf16.mxu0 0
        %1966 = vmatmul.mubr.bf16.gmra.mrb[0].mxu0 %v1826
        %v1967 = vpop.f32.mrb[0].mxu0
        %v1968 = vadd.f32 0.0, %v1967
        %v1969 = vpop.f32.mrb[0].mxu0
        %v1970 = vpop.f32.mrb[0].mxu0
        %v1971 = vadd.f32 0.0, %v1970
        %v1972 = vpop.f32.mrb[0].mxu0
        %1973 = vmatprep.mubr.bf16.mxu0 0
        %1974 = vmatmul.mubr.bf16.gmra.mrb[0].mxu0 %v1827
        %v1975 = vpop.f32.mrb[0].mxu0
        %v1976 = vadd.f32 0.0, %v1975
        %v1977 = vpop.f32.mrb[0].mxu0
        %v1978 = vpop.f32.mrb[0].mxu0
        %v1979 = vadd.f32 0.0, %v1978
        %v1980 = vpop.f32.mrb[0].mxu0
        %1981 = vmatprep.mubr.bf16.mxu0 0
        %1982 = vmatmul.mubr.bf16.gmra.mrb[0].mxu0 %v1828
        %v1983 = vpop.f32.mrb[0].mxu0
        %v1984 = vadd.f32 0.0, %v1983
        %v1985 = vpop.f32.mrb[0].mxu0
        %v1986 = vpop.f32.mrb[0].mxu0
        %v1987 = vadd.f32 0.0, %v1986
        %v1988 = vpop.f32.mrb[0].mxu0
        %1989 = vdwg.mxu0
        %2022 = vrot.lane.b32.xlu0 %v1126, 32
        %v2023 = vpop.permute.xlu0 %2022
        %2024 = vrot.lane.b32.xlu0 %v1129, 32
        %v2025 = vpop.permute.xlu0 %2024
        %2026 = vrot.lane.b32.xlu0 %v1134, 32
        %v2027 = vpop.permute.xlu0 %2026
        %2028 = vrot.lane.b32.xlu0 %v1137, 32
        %v2029 = vpop.permute.xlu0 %2028
        %2030 = vrot.lane.b32.xlu0 %v1142, 32
        %v2031 = vpop.permute.xlu0 %2030
        %2032 = vrot.lane.b32.xlu0 %v1145, 32
        %v2033 = vpop.permute.xlu0 %2032
        %2034 = vrot.lane.b32.xlu0 %v1150, 32
        %v2035 = vpop.permute.xlu0 %2034
        %2036 = vrot.lane.b32.xlu0 %v1153, 32
        %v2037 = vpop.permute.xlu0 %2036
        %2038 = vrot.lane.b32.xlu0 %v1158, 32
        %v2039 = vpop.permute.xlu0 %2038
        %2040 = vrot.lane.b32.xlu0 %v1161, 32
        %v2041 = vpop.permute.xlu0 %2040
        %2042 = vrot.lane.b32.xlu0 %v1166, 32
        %v2043 = vpop.permute.xlu0 %2042
        %2044 = vrot.lane.b32.xlu0 %v1169, 32
        %v2045 = vpop.permute.xlu0 %2044
        %2046 = vrot.lane.b32.xlu0 %v1174, 32
        %v2047 = vpop.permute.xlu0 %2046
        %2048 = vrot.lane.b32.xlu0 %v1177, 32
        %v2049 = vpop.permute.xlu0 %2048
        %2050 = vrot.lane.b32.xlu0 %v1182, 32
        %v2051 = vpop.permute.xlu0 %2050
        %2052 = vrot.lane.b32.xlu0 %v1185, 32
        %v2053 = vpop.permute.xlu0 %2052
        %2054 = vrot.lane.b32.xlu0 %v1190, 32
        %v2055 = vpop.permute.xlu0 %2054
        %2056 = vrot.lane.b32.xlu0 %v1193, 32
        %v2057 = vpop.permute.xlu0 %2056
        %2058 = vrot.lane.b32.xlu0 %v1198, 32
        %v2059 = vpop.permute.xlu0 %2058
        %2060 = vrot.lane.b32.xlu0 %v1201, 32
        %v2061 = vpop.permute.xlu0 %2060
        %2062 = vrot.lane.b32.xlu0 %v1206, 32
        %v2063 = vpop.permute.xlu0 %2062
        %2064 = vrot.lane.b32.xlu0 %v1209, 32
        %v2065 = vpop.permute.xlu0 %2064
        %2066 = vrot.lane.b32.xlu0 %v1214, 32
        %v2067 = vpop.permute.xlu0 %2066
        %2068 = vrot.lane.b32.xlu0 %v1217, 32
        %v2069 = vpop.permute.xlu0 %2068
        %2070 = vrot.lane.b32.xlu0 %v1222, 32
        %v2071 = vpop.permute.xlu0 %2070
        %2072 = vrot.lane.b32.xlu0 %v1225, 32
        %v2073 = vpop.permute.xlu0 %2072
        %2074 = vrot.lane.b32.xlu0 %v1230, 32
        %v2075 = vpop.permute.xlu0 %2074
        %2076 = vrot.lane.b32.xlu0 %v1233, 32
        %v2077 = vpop.permute.xlu0 %2076
        %2078 = vrot.lane.b32.xlu0 %v1238, 32
        %v2079 = vpop.permute.xlu0 %2078
        %2080 = vrot.lane.b32.xlu0 %v1241, 32
        %v2081 = vpop.permute.xlu0 %2080
        %2082 = vrot.lane.b32.xlu0 %v1246, 32
        %v2083 = vpop.permute.xlu0 %2082
        %2084 = vrot.lane.b32.xlu0 %v1249, 32
        %v2085 = vpop.permute.xlu0 %2084
        %2150 = vrot.lane.b32.xlu0 %v1495, 64
        %v2151 = vpop.permute.xlu0 %2150
        %2152 = vrot.lane.b32.xlu0 %v1498, 64
        %v2153 = vpop.permute.xlu0 %2152
        %2154 = vrot.lane.b32.xlu0 %v1503, 64
        %v2155 = vpop.permute.xlu0 %2154
        %2156 = vrot.lane.b32.xlu0 %v1506, 64
        %v2157 = vpop.permute.xlu0 %2156
        %2158 = vrot.lane.b32.xlu0 %v1511, 64
        %v2159 = vpop.permute.xlu0 %2158
        %2160 = vrot.lane.b32.xlu0 %v1514, 64
        %v2161 = vpop.permute.xlu0 %2160
        %2162 = vrot.lane.b32.xlu0 %v1519, 64
        %v2163 = vpop.permute.xlu0 %2162
        %2164 = vrot.lane.b32.xlu0 %v1522, 64
        %v2165 = vpop.permute.xlu0 %2164
        %2166 = vrot.lane.b32.xlu0 %v1527, 64
        %v2167 = vpop.permute.xlu0 %2166
        %2168 = vrot.lane.b32.xlu0 %v1530, 64
        %v2169 = vpop.permute.xlu0 %2168
        %2170 = vrot.lane.b32.xlu0 %v1535, 64
        %v2171 = vpop.permute.xlu0 %2170
        %2172 = vrot.lane.b32.xlu0 %v1538, 64
        %v2173 = vpop.permute.xlu0 %2172
        %2174 = vrot.lane.b32.xlu0 %v1543, 64
        %v2175 = vpop.permute.xlu0 %2174
        %2176 = vrot.lane.b32.xlu0 %v1546, 64
        %v2177 = vpop.permute.xlu0 %2176
        %2178 = vrot.lane.b32.xlu0 %v1551, 64
        %v2179 = vpop.permute.xlu0 %2178
        %2180 = vrot.lane.b32.xlu0 %v1554, 64
        %v2181 = vpop.permute.xlu0 %2180
        %2182 = vrot.lane.b32.xlu0 %v1559, 64
        %v2183 = vpop.permute.xlu0 %2182
        %2184 = vrot.lane.b32.xlu0 %v1562, 64
        %v2185 = vpop.permute.xlu0 %2184
        %2186 = vrot.lane.b32.xlu0 %v1567, 64
        %v2187 = vpop.permute.xlu0 %2186
        %2188 = vrot.lane.b32.xlu0 %v1570, 64
        %v2189 = vpop.permute.xlu0 %2188
        %2190 = vrot.lane.b32.xlu0 %v1575, 64
        %v2191 = vpop.permute.xlu0 %2190
        %2192 = vrot.lane.b32.xlu0 %v1578, 64
        %v2193 = vpop.permute.xlu0 %2192
        %2194 = vrot.lane.b32.xlu0 %v1583, 64
        %v2195 = vpop.permute.xlu0 %2194
        %2196 = vrot.lane.b32.xlu0 %v1586, 64
        %v2197 = vpop.permute.xlu0 %2196
        %2198 = vrot.lane.b32.xlu0 %v1591, 64
        %v2199 = vpop.permute.xlu0 %2198
        %2200 = vrot.lane.b32.xlu0 %v1594, 64
        %v2201 = vpop.permute.xlu0 %2200
        %2202 = vrot.lane.b32.xlu0 %v1599, 64
        %v2203 = vpop.permute.xlu0 %2202
        %2204 = vrot.lane.b32.xlu0 %v1602, 64
        %v2205 = vpop.permute.xlu0 %2204
        %2206 = vrot.lane.b32.xlu0 %v1607, 64
        %v2207 = vpop.permute.xlu0 %2206
        %2208 = vrot.lane.b32.xlu0 %v1610, 64
        %v2209 = vpop.permute.xlu0 %2208
        %2210 = vrot.lane.b32.xlu0 %v1615, 64
        %v2211 = vpop.permute.xlu0 %2210
        %2212 = vrot.lane.b32.xlu0 %v1618, 64
        %v2213 = vpop.permute.xlu0 %2212
        %2278 = vrot.lane.b32.xlu0 %v1864, 96
        %v2279 = vpop.permute.xlu0 %2278
        %2280 = vrot.lane.b32.xlu0 %v1867, 96
        %v2281 = vpop.permute.xlu0 %2280
        %2282 = vrot.lane.b32.xlu0 %v1872, 96
        %v2283 = vpop.permute.xlu0 %2282
        %2284 = vrot.lane.b32.xlu0 %v1875, 96
        %v2285 = vpop.permute.xlu0 %2284
        %2286 = vrot.lane.b32.xlu0 %v1880, 96
        %v2287 = vpop.permute.xlu0 %2286
        %2288 = vrot.lane.b32.xlu0 %v1883, 96
        %v2289 = vpop.permute.xlu0 %2288
        %2290 = vrot.lane.b32.xlu0 %v1888, 96
        %v2291 = vpop.permute.xlu0 %2290
        %2292 = vrot.lane.b32.xlu0 %v1891, 96
        %v2293 = vpop.permute.xlu0 %2292
        %2294 = vrot.lane.b32.xlu0 %v1896, 96
        %v2295 = vpop.permute.xlu0 %2294
        %2296 = vrot.lane.b32.xlu0 %v1899, 96
        %v2297 = vpop.permute.xlu0 %2296
        %2298 = vrot.lane.b32.xlu0 %v1904, 96
        %v2299 = vpop.permute.xlu0 %2298
        %2300 = vrot.lane.b32.xlu0 %v1907, 96
        %v2301 = vpop.permute.xlu0 %2300
        %2302 = vrot.lane.b32.xlu0 %v1912, 96
        %v2303 = vpop.permute.xlu0 %2302
        %2304 = vrot.lane.b32.xlu0 %v1915, 96
        %v2305 = vpop.permute.xlu0 %2304
        %2306 = vrot.lane.b32.xlu0 %v1920, 96
        %v2307 = vpop.permute.xlu0 %2306
        %2308 = vrot.lane.b32.xlu0 %v1923, 96
        %v2309 = vpop.permute.xlu0 %2308
        %2310 = vrot.lane.b32.xlu0 %v1928, 96
        %v2311 = vpop.permute.xlu0 %2310
        %2312 = vrot.lane.b32.xlu0 %v1931, 96
        %v2313 = vpop.permute.xlu0 %2312
        %2314 = vrot.lane.b32.xlu0 %v1936, 96
        %v2315 = vpop.permute.xlu0 %2314
        %2316 = vrot.lane.b32.xlu0 %v1939, 96
        %v2317 = vpop.permute.xlu0 %2316
        %2318 = vrot.lane.b32.xlu0 %v1944, 96
        %v2319 = vpop.permute.xlu0 %2318
        %2320 = vrot.lane.b32.xlu0 %v1947, 96
        %v2321 = vpop.permute.xlu0 %2320
        %2322 = vrot.lane.b32.xlu0 %v1952, 96
        %v2323 = vpop.permute.xlu0 %2322
        %2324 = vrot.lane.b32.xlu0 %v1955, 96
        %v2325 = vpop.permute.xlu0 %2324
        %2326 = vrot.lane.b32.xlu0 %v1960, 96
        %v2327 = vpop.permute.xlu0 %2326
        %2328 = vrot.lane.b32.xlu0 %v1963, 96
        %v2329 = vpop.permute.xlu0 %2328
        %2330 = vrot.lane.b32.xlu0 %v1968, 96
        %v2331 = vpop.permute.xlu0 %2330
        %2332 = vrot.lane.b32.xlu0 %v1971, 96
        %v2333 = vpop.permute.xlu0 %2332
        %2334 = vrot.lane.b32.xlu0 %v1976, 96
        %v2335 = vpop.permute.xlu0 %2334
        %2336 = vrot.lane.b32.xlu0 %v1979, 96
        %v2337 = vpop.permute.xlu0 %2336
        %2338 = vrot.lane.b32.xlu0 %v1984, 96
        %v2339 = vpop.permute.xlu0 %2338
        %2340 = vrot.lane.b32.xlu0 %v1987, 96
        %v2341 = vpop.permute.xlu0 %2340
        %vm2374 = vcmask 261120
        %v2375 = vsel %vm2374, %v757, %v2023
        %v2376 = vsel %vm2374, %v760, %v2025
        %v2377 = vsel %vm2374, %v765, %v2027
        %v2378 = vsel %vm2374, %v768, %v2029
        %v2379 = vsel %vm2374, %v773, %v2031
        %v2380 = vsel %vm2374, %v776, %v2033
        %v2381 = vsel %vm2374, %v781, %v2035
        %v2382 = vsel %vm2374, %v784, %v2037
        %v2383 = vsel %vm2374, %v789, %v2039
        %v2384 = vsel %vm2374, %v792, %v2041
        %v2385 = vsel %vm2374, %v797, %v2043
        %v2386 = vsel %vm2374, %v800, %v2045
        %v2387 = vsel %vm2374, %v805, %v2047
        %v2388 = vsel %vm2374, %v808, %v2049
        %v2389 = vsel %vm2374, %v813, %v2051
        %v2390 = vsel %vm2374, %v816, %v2053
        %v2391 = vsel %vm2374, %v821, %v2055
        %v2392 = vsel %vm2374, %v824, %v2057
        %v2393 = vsel %vm2374, %v829, %v2059
        %v2394 = vsel %vm2374, %v832, %v2061
        %v2395 = vsel %vm2374, %v837, %v2063
        %v2396 = vsel %vm2374, %v840, %v2065
        %v2397 = vsel %vm2374, %v845, %v2067
        %v2398 = vsel %vm2374, %v848, %v2069
        %v2399 = vsel %vm2374, %v853, %v2071
        %v2400 = vsel %vm2374, %v856, %v2073
        %v2401 = vsel %vm2374, %v861, %v2075
        %v2402 = vsel %vm2374, %v864, %v2077
        %v2403 = vsel %vm2374, %v869, %v2079
        %v2404 = vsel %vm2374, %v872, %v2081
        %v2405 = vsel %vm2374, %v877, %v2083
        %v2406 = vsel %vm2374, %v880, %v2085
        %vm2407 = vcmask 523264
        %v2408 = vsel %vm2407, %v2375, %v2151
        %v2409 = vsel %vm2407, %v2376, %v2153
        %v2410 = vsel %vm2407, %v2377, %v2155
        %v2411 = vsel %vm2407, %v2378, %v2157
        %v2412 = vsel %vm2407, %v2379, %v2159
        %v2413 = vsel %vm2407, %v2380, %v2161
        %v2414 = vsel %vm2407, %v2381, %v2163
        %v2415 = vsel %vm2407, %v2382, %v2165
        %v2416 = vsel %vm2407, %v2383, %v2167
        %v2417 = vsel %vm2407, %v2384, %v2169
        %v2418 = vsel %vm2407, %v2385, %v2171
        %v2419 = vsel %vm2407, %v2386, %v2173
        %v2420 = vsel %vm2407, %v2387, %v2175
        %v2421 = vsel %vm2407, %v2388, %v2177
        %v2422 = vsel %vm2407, %v2389, %v2179
        %v2423 = vsel %vm2407, %v2390, %v2181
        %v2424 = vsel %vm2407, %v2391, %v2183
        %v2425 = vsel %vm2407, %v2392, %v2185
        %v2426 = vsel %vm2407, %v2393, %v2187
        %v2427 = vsel %vm2407, %v2394, %v2189
        %v2428 = vsel %vm2407, %v2395, %v2191
        %v2429 = vsel %vm2407, %v2396, %v2193
        %v2430 = vsel %vm2407, %v2397, %v2195
        %v2431 = vsel %vm2407, %v2398, %v2197
        %v2432 = vsel %vm2407, %v2399, %v2199
        %v2433 = vsel %vm2407, %v2400, %v2201
        %v2434 = vsel %vm2407, %v2401, %v2203
        %v2435 = vsel %vm2407, %v2402, %v2205
        %v2436 = vsel %vm2407, %v2403, %v2207
        %v2437 = vsel %vm2407, %v2404, %v2209
        %v2438 = vsel %vm2407, %v2405, %v2211
        %v2439 = vsel %vm2407, %v2406, %v2213
        %vm2440 = vcmask 785408
        %v2441 = vsel %vm2440, %v2408, %v2279
        %v2442 = vsel %vm2440, %v2409, %v2281
        %v2443 = vsel %vm2440, %v2410, %v2283
        %v2444 = vsel %vm2440, %v2411, %v2285
        %v2445 = vsel %vm2440, %v2412, %v2287
        %v2446 = vsel %vm2440, %v2413, %v2289
        %v2447 = vsel %vm2440, %v2414, %v2291
        %v2448 = vsel %vm2440, %v2415, %v2293
        %v2449 = vsel %vm2440, %v2416, %v2295
        %v2450 = vsel %vm2440, %v2417, %v2297
        %v2451 = vsel %vm2440, %v2418, %v2299
        %v2452 = vsel %vm2440, %v2419, %v2301
        %v2453 = vsel %vm2440, %v2420, %v2303
        %v2454 = vsel %vm2440, %v2421, %v2305
        %v2455 = vsel %vm2440, %v2422, %v2307
        %v2456 = vsel %vm2440, %v2423, %v2309
        %v2457 = vsel %vm2440, %v2424, %v2311
        %v2458 = vsel %vm2440, %v2425, %v2313
        %v2459 = vsel %vm2440, %v2426, %v2315
        %v2460 = vsel %vm2440, %v2427, %v2317
        %v2461 = vsel %vm2440, %v2428, %v2319
        %v2462 = vsel %vm2440, %v2429, %v2321
        %v2463 = vsel %vm2440, %v2430, %v2323
        %v2464 = vsel %vm2440, %v2431, %v2325
        %v2465 = vsel %vm2440, %v2432, %v2327
        %v2466 = vsel %vm2440, %v2433, %v2329
        %v2467 = vsel %vm2440, %v2434, %v2331
        %v2468 = vsel %vm2440, %v2435, %v2333
        %v2469 = vsel %vm2440, %v2436, %v2335
        %v2470 = vsel %vm2440, %v2437, %v2337
        %v2471 = vsel %vm2440, %v2438, %v2339
        %v2472 = vsel %vm2440, %v2439, %v2341
        %v2473 = vpack.c.bf16 %v2442, %v2441
        %v2474 = vpack.c.bf16 %v2444, %v2443
        %v2475 = vpack.c.bf16 %v2446, %v2445
        %v2476 = vpack.c.bf16 %v2448, %v2447
        %v2477 = vpack.c.bf16 %v2450, %v2449
        %v2478 = vpack.c.bf16 %v2452, %v2451
        %v2479 = vpack.c.bf16 %v2454, %v2453
        %v2480 = vpack.c.bf16 %v2456, %v2455
        %v2481 = vpack.c.bf16 %v2458, %v2457
        %v2482 = vpack.c.bf16 %v2460, %v2459
        %v2483 = vpack.c.bf16 %v2462, %v2461
        %v2484 = vpack.c.bf16 %v2464, %v2463
        %v2485 = vpack.c.bf16 %v2466, %v2465
        %v2486 = vpack.c.bf16 %v2468, %v2467
        %v2487 = vpack.c.bf16 %v2470, %v2469
        %v2488 = vpack.c.bf16 %v2472, %v2471
        %v2489 = vld [vmem:[%s2] sm:$0xf]
        %v2490 = vld [vmem:[%s2 + $0x4] sm:$0xf]
        %v2491 = vld [vmem:[%s2 + $0x8] sm:$0xf]
        %v2492 = vld [vmem:[%s2 + $0xc] sm:$0xf]
        %v2493 = vld [vmem:[%s2 + $0x10] sm:$0xf]
        %v2494 = vld [vmem:[%s2 + $0x14] sm:$0xf]
        %v2495 = vld [vmem:[%s2 + $0x18] sm:$0xf]
        %v2496 = vld [vmem:[%s2 + $0x1c] sm:$0xf]
        %v2497 = vld [vmem:[%s2 + $0x20] sm:$0xf]
        %v2498 = vld [vmem:[%s2 + $0x24] sm:$0xf]
        %v2499 = vld [vmem:[%s2 + $0x28] sm:$0xf]
        %v2500 = vld [vmem:[%s2 + $0x2c] sm:$0xf]
        %v2501 = vld [vmem:[%s2 + $0x30] sm:$0xf]
        %v2502 = vld [vmem:[%s2 + $0x34] sm:$0xf]
        %v2503 = vld [vmem:[%s2 + $0x38] sm:$0xf]
        %v2504 = vld [vmem:[%s2 + $0x3c] sm:$0xf]
        %v2505 = vld [vmem:[%s3] sm:$0x1]
        %v2507 = vlaneseq
        %v2508 = vshrl.u32 %v2507, 7
        %v2509 = vsub.s32 0, %v2508
        %v2510 = vrot.slane %v2505, %v2509
        %v2528 = vunpack.c.l.b16 %v2489
        %v2529 = vunpack.c.l.b16 %v2490
        %v2530 = vunpack.c.l.b16 %v2491
        %v2531 = vunpack.c.l.b16 %v2492
        %v2532 = vunpack.c.l.b16 %v2493
        %v2533 = vunpack.c.l.b16 %v2494
        %v2534 = vunpack.c.l.b16 %v2495
        %v2535 = vunpack.c.l.b16 %v2496
        %v2536 = vunpack.c.l.b16 %v2497
        %v2537 = vunpack.c.l.b16 %v2498
        %v2538 = vunpack.c.l.b16 %v2499
        %v2539 = vunpack.c.l.b16 %v2500
        %v2540 = vunpack.c.l.b16 %v2501
        %v2541 = vunpack.c.l.b16 %v2502
        %v2542 = vunpack.c.l.b16 %v2503
        %v2543 = vunpack.c.l.b16 %v2504
        %v2544 = vpack.c.b16 %v2529, %v2528
        %v2545 = vpack.c.b16 %v2531, %v2530
        %v2546 = vpack.c.b16 %v2533, %v2532
        %v2547 = vpack.c.b16 %v2535, %v2534
        %v2548 = vpack.c.b16 %v2537, %v2536
        %v2549 = vpack.c.b16 %v2539, %v2538
        %v2550 = vpack.c.b16 %v2541, %v2540
        %v2551 = vpack.c.b16 %v2543, %v2542
        %2560 = vmatprep.subr.bf16.mxu0 0
        %2561 = vmatpush1.bf16.msra.mxu0 %v2544
        %2562 = vmatprep.subr.bf16.mxu0 0
        %2563 = vmatpush1.bf16.msra.mxu0 %v2545
        %2564 = vmatprep.subr.bf16.mxu0 0
        %2565 = vmatpush1.bf16.msra.mxu0 %v2546
        %2566 = vmatprep.subr.bf16.mxu0 0
        %2567 = vmatpush1.bf16.msra.mxu0 %v2547
        %2568 = vmatprep.subr.bf16.mxu0 0
        %2569 = vmatpush1.bf16.msra.mxu0 %v2548
        %2570 = vmatprep.subr.bf16.mxu0 0
        %2571 = vmatpush1.bf16.msra.mxu0 %v2549
        %2572 = vmatprep.subr.bf16.mxu0 0
        %2573 = vmatpush1.bf16.msra.mxu0 %v2550
        %2574 = vmatprep.subr.bf16.mxu0 0
        %2575 = vmatpush1.bf16.msra.mxu0 %v2551
        %2576 = vmatprep.subr.bf16.mxu0 0
        %2577 = vmatpush1.bf16.msra.mxu0 0
        %2578 = vmatprep.subr.bf16.mxu0 0
        %2579 = vmatpush1.bf16.msra.mxu0 0
        %2580 = vmatprep.subr.bf16.mxu0 0
        %2581 = vmatpush1.bf16.msra.mxu0 0
        %2582 = vmatprep.subr.bf16.mxu0 0
        %2583 = vmatpush1.bf16.msra.mxu0 0
        %2584 = vmatprep.subr.bf16.mxu0 0
        %2585 = vmatpush1.bf16.msra.mxu0 0
        %2586 = vmatprep.subr.bf16.mxu0 0
        %2587 = vmatpush1.bf16.msra.mxu0 0
        %2588 = vmatprep.subr.bf16.mxu0 0
        %2589 = vmatpush1.bf16.msra.mxu0 0
        %2590 = vmatprep.subr.bf16.mxu0 0
        %2591 = vmatpush1.bf16.msra.mxu0 0
        %2592 = vmatprep.mubr.bf16.mxu0 0
        %2593 = vmatmul.mubr.bf16.gmra.mrb[0].mxu0 %v2473
        %v2594 = vpop.f32.mrb[0].mxu0
        %v2595 = vadd.f32 %v2510, %v2594
        %v2596 = vpop.f32.mrb[0].mxu0
        %v2597 = vpop.f32.mrb[0].mxu0
        %v2598 = vadd.f32 %v2510, %v2597
        %v2599 = vpop.f32.mrb[0].mxu0
        %2600 = vmatprep.mubr.bf16.mxu0 0
        %2601 = vmatmul.mubr.bf16.gmra.mrb[0].mxu0 %v2474
        %v2602 = vpop.f32.mrb[0].mxu0
        %v2603 = vadd.f32 %v2510, %v2602
        %v2604 = vpop.f32.mrb[0].mxu0
        %v2605 = vpop.f32.mrb[0].mxu0
        %v2606 = vadd.f32 %v2510, %v2605
        %v2607 = vpop.f32.mrb[0].mxu0
        %2608 = vmatprep.mubr.bf16.mxu0 0
        %2609 = vmatmul.mubr.bf16.gmra.mrb[0].mxu0 %v2475
        %v2610 = vpop.f32.mrb[0].mxu0
        %v2611 = vadd.f32 %v2510, %v2610
        %v2612 = vpop.f32.mrb[0].mxu0
        %v2613 = vpop.f32.mrb[0].mxu0
        %v2614 = vadd.f32 %v2510, %v2613
        %v2615 = vpop.f32.mrb[0].mxu0
        %2616 = vmatprep.mubr.bf16.mxu0 0
        %2617 = vmatmul.mubr.bf16.gmra.mrb[0].mxu0 %v2476
        %v2618 = vpop.f32.mrb[0].mxu0
        %v2619 = vadd.f32 %v2510, %v2618
        %v2620 = vpop.f32.mrb[0].mxu0
        %v2621 = vpop.f32.mrb[0].mxu0
        %v2622 = vadd.f32 %v2510, %v2621
        %v2623 = vpop.f32.mrb[0].mxu0
        %2624 = vmatprep.mubr.bf16.mxu0 0
        %2625 = vmatmul.mubr.bf16.gmra.mrb[0].mxu0 %v2477
        %v2626 = vpop.f32.mrb[0].mxu0
        %v2627 = vadd.f32 %v2510, %v2626
        %v2628 = vpop.f32.mrb[0].mxu0
        %v2629 = vpop.f32.mrb[0].mxu0
        %v2630 = vadd.f32 %v2510, %v2629
        %v2631 = vpop.f32.mrb[0].mxu0
        %2632 = vmatprep.mubr.bf16.mxu0 0
        %2633 = vmatmul.mubr.bf16.gmra.mrb[0].mxu0 %v2478
        %v2634 = vpop.f32.mrb[0].mxu0
        %v2635 = vadd.f32 %v2510, %v2634
        %v2636 = vpop.f32.mrb[0].mxu0
        %v2637 = vpop.f32.mrb[0].mxu0
        %v2638 = vadd.f32 %v2510, %v2637
        %v2639 = vpop.f32.mrb[0].mxu0
        %2640 = vmatprep.mubr.bf16.mxu0 0
        %2641 = vmatmul.mubr.bf16.gmra.mrb[0].mxu0 %v2479
        %v2642 = vpop.f32.mrb[0].mxu0
        %v2643 = vadd.f32 %v2510, %v2642
        %v2644 = vpop.f32.mrb[0].mxu0
        %v2645 = vpop.f32.mrb[0].mxu0
        %v2646 = vadd.f32 %v2510, %v2645
        %v2647 = vpop.f32.mrb[0].mxu0
        %2648 = vmatprep.mubr.bf16.mxu0 0
        %2649 = vmatmul.mubr.bf16.gmra.mrb[0].mxu0 %v2480
        %v2650 = vpop.f32.mrb[0].mxu0
        %v2651 = vadd.f32 %v2510, %v2650
        %v2652 = vpop.f32.mrb[0].mxu0
        %v2653 = vpop.f32.mrb[0].mxu0
        %v2654 = vadd.f32 %v2510, %v2653
        %v2655 = vpop.f32.mrb[0].mxu0
        %2656 = vmatprep.mubr.bf16.mxu0 0
        %2657 = vmatmul.mubr.bf16.gmra.mrb[0].mxu0 %v2481
        %v2658 = vpop.f32.mrb[0].mxu0
        %v2659 = vadd.f32 %v2510, %v2658
        %v2660 = vpop.f32.mrb[0].mxu0
        %v2661 = vpop.f32.mrb[0].mxu0
        %v2662 = vadd.f32 %v2510, %v2661
        %v2663 = vpop.f32.mrb[0].mxu0
        %2664 = vmatprep.mubr.bf16.mxu0 0
        %2665 = vmatmul.mubr.bf16.gmra.mrb[0].mxu0 %v2482
        %v2666 = vpop.f32.mrb[0].mxu0
        %v2667 = vadd.f32 %v2510, %v2666
        %v2668 = vpop.f32.mrb[0].mxu0
        %v2669 = vpop.f32.mrb[0].mxu0
        %v2670 = vadd.f32 %v2510, %v2669
        %v2671 = vpop.f32.mrb[0].mxu0
        %2672 = vmatprep.mubr.bf16.mxu0 0
        %2673 = vmatmul.mubr.bf16.gmra.mrb[0].mxu0 %v2483
        %v2674 = vpop.f32.mrb[0].mxu0
        %v2675 = vadd.f32 %v2510, %v2674
        %v2676 = vpop.f32.mrb[0].mxu0
        %v2677 = vpop.f32.mrb[0].mxu0
        %v2678 = vadd.f32 %v2510, %v2677
        %v2679 = vpop.f32.mrb[0].mxu0
        %2680 = vmatprep.mubr.bf16.mxu0 0
        %2681 = vmatmul.mubr.bf16.gmra.mrb[0].mxu0 %v2484
        %v2682 = vpop.f32.mrb[0].mxu0
        %v2683 = vadd.f32 %v2510, %v2682
        %v2684 = vpop.f32.mrb[0].mxu0
        %v2685 = vpop.f32.mrb[0].mxu0
        %v2686 = vadd.f32 %v2510, %v2685
        %v2687 = vpop.f32.mrb[0].mxu0
        %2688 = vmatprep.mubr.bf16.mxu0 0
        %2689 = vmatmul.mubr.bf16.gmra.mrb[0].mxu0 %v2485
        %v2690 = vpop.f32.mrb[0].mxu0
        %v2691 = vadd.f32 %v2510, %v2690
        %v2692 = vpop.f32.mrb[0].mxu0
        %v2693 = vpop.f32.mrb[0].mxu0
        %v2694 = vadd.f32 %v2510, %v2693
        %v2695 = vpop.f32.mrb[0].mxu0
        %2696 = vmatprep.mubr.bf16.mxu0 0
        %2697 = vmatmul.mubr.bf16.gmra.mrb[0].mxu0 %v2486
        %v2698 = vpop.f32.mrb[0].mxu0
        %v2699 = vadd.f32 %v2510, %v2698
        %v2700 = vpop.f32.mrb[0].mxu0
        %v2701 = vpop.f32.mrb[0].mxu0
        %v2702 = vadd.f32 %v2510, %v2701
        %v2703 = vpop.f32.mrb[0].mxu0
        %2704 = vmatprep.mubr.bf16.mxu0 0
        %2705 = vmatmul.mubr.bf16.gmra.mrb[0].mxu0 %v2487
        %v2706 = vpop.f32.mrb[0].mxu0
        %v2707 = vadd.f32 %v2510, %v2706
        %v2708 = vpop.f32.mrb[0].mxu0
        %v2709 = vpop.f32.mrb[0].mxu0
        %v2710 = vadd.f32 %v2510, %v2709
        %v2711 = vpop.f32.mrb[0].mxu0
        %2712 = vmatprep.mubr.bf16.mxu0 0
        %2713 = vmatmul.mubr.bf16.gmra.mrb[0].mxu0 %v2488
        %v2714 = vpop.f32.mrb[0].mxu0
        %v2715 = vadd.f32 %v2510, %v2714
        %v2716 = vpop.f32.mrb[0].mxu0
        %v2717 = vpop.f32.mrb[0].mxu0
        %v2718 = vadd.f32 %v2510, %v2717
        %v2719 = vpop.f32.mrb[0].mxu0
        %2720 = vdwg.mxu0
        %v2721 = vmax.f32 %v2595, 0.0
        %v2722 = vmax.f32 %v2598, 0.0
        %v2723 = vmax.f32 %v2603, 0.0
        %v2724 = vmax.f32 %v2606, 0.0
        %v2725 = vmax.f32 %v2611, 0.0
        %v2726 = vmax.f32 %v2614, 0.0
        %v2727 = vmax.f32 %v2619, 0.0
        %v2728 = vmax.f32 %v2622, 0.0
        %v2729 = vmax.f32 %v2627, 0.0
        %v2730 = vmax.f32 %v2630, 0.0
        %v2731 = vmax.f32 %v2635, 0.0
        %v2732 = vmax.f32 %v2638, 0.0
        %v2733 = vmax.f32 %v2643, 0.0
        %v2734 = vmax.f32 %v2646, 0.0
        %v2735 = vmax.f32 %v2651, 0.0
        %v2736 = vmax.f32 %v2654, 0.0
        %v2737 = vmax.f32 %v2659, 0.0
        %v2738 = vmax.f32 %v2662, 0.0
        %v2739 = vmax.f32 %v2667, 0.0
        %v2740 = vmax.f32 %v2670, 0.0
        %v2741 = vmax.f32 %v2675, 0.0
        %v2742 = vmax.f32 %v2678, 0.0
        %v2743 = vmax.f32 %v2683, 0.0
        %v2744 = vmax.f32 %v2686, 0.0
        %v2745 = vmax.f32 %v2691, 0.0
        %v2746 = vmax.f32 %v2694, 0.0
        %v2747 = vmax.f32 %v2699, 0.0
        %v2748 = vmax.f32 %v2702, 0.0
        %v2749 = vmax.f32 %v2707, 0.0
        %v2750 = vmax.f32 %v2710, 0.0
        %v2751 = vmax.f32 %v2715, 0.0
        %v2752 = vmax.f32 %v2718, 0.0
        %v2753 = vpack.c.bf16 %v2722, %v2721
        %v2754 = vpack.c.bf16 %v2724, %v2723
        %v2755 = vpack.c.bf16 %v2726, %v2725
        %v2756 = vpack.c.bf16 %v2728, %v2727
        %v2757 = vpack.c.bf16 %v2730, %v2729
        %v2758 = vpack.c.bf16 %v2732, %v2731
        %v2759 = vpack.c.bf16 %v2734, %v2733
        %v2760 = vpack.c.bf16 %v2736, %v2735
        %v2761 = vpack.c.bf16 %v2738, %v2737
        %v2762 = vpack.c.bf16 %v2740, %v2739
        %v2763 = vpack.c.bf16 %v2742, %v2741
        %v2764 = vpack.c.bf16 %v2744, %v2743
        %v2765 = vpack.c.bf16 %v2746, %v2745
        %v2766 = vpack.c.bf16 %v2748, %v2747
        %v2767 = vpack.c.bf16 %v2750, %v2749
        %v2768 = vpack.c.bf16 %v2752, %v2751
        %v2769 = vld [vmem:[%s4] sm:$0xf]
        %v2770 = vld [vmem:[%s4 + $0x4] sm:$0xf]
        %v2771 = vld [vmem:[%s4 + $0x8] sm:$0xf]
        %v2772 = vld [vmem:[%s4 + $0xc] sm:$0xf]
        %v2773 = vld [vmem:[%s4 + $0x10] sm:$0xf]
        %v2774 = vld [vmem:[%s4 + $0x14] sm:$0xf]
        %v2775 = vld [vmem:[%s4 + $0x18] sm:$0xf]
        %v2776 = vld [vmem:[%s4 + $0x1c] sm:$0xf]
        %v2777 = vld [vmem:[%s4 + $0x20] sm:$0xf]
        %v2778 = vld [vmem:[%s4 + $0x24] sm:$0xf]
        %v2779 = vld [vmem:[%s4 + $0x28] sm:$0xf]
        %v2780 = vld [vmem:[%s4 + $0x2c] sm:$0xf]
        %v2781 = vld [vmem:[%s4 + $0x30] sm:$0xf]
        %v2782 = vld [vmem:[%s4 + $0x34] sm:$0xf]
        %v2783 = vld [vmem:[%s4 + $0x38] sm:$0xf]
        %v2784 = vld [vmem:[%s4 + $0x3c] sm:$0xf]
        %v2785 = vld [vmem:[%s5] sm:$0x1]
        %v2787 = vlaneseq
        %v2788 = vshrl.u32 %v2787, 7
        %v2789 = vsub.s32 0, %v2788
        %v2790 = vrot.slane %v2785, %v2789
        %v2808 = vunpack.c.l.b16 %v2769
        %v2809 = vunpack.c.l.b16 %v2770
        %v2810 = vunpack.c.l.b16 %v2771
        %v2811 = vunpack.c.l.b16 %v2772
        %v2812 = vunpack.c.l.b16 %v2773
        %v2813 = vunpack.c.l.b16 %v2774
        %v2814 = vunpack.c.l.b16 %v2775
        %v2815 = vunpack.c.l.b16 %v2776
        %v2816 = vunpack.c.l.b16 %v2777
        %v2817 = vunpack.c.l.b16 %v2778
        %v2818 = vunpack.c.l.b16 %v2779
        %v2819 = vunpack.c.l.b16 %v2780
        %v2820 = vunpack.c.l.b16 %v2781
        %v2821 = vunpack.c.l.b16 %v2782
        %v2822 = vunpack.c.l.b16 %v2783
        %v2823 = vunpack.c.l.b16 %v2784
        %v2824 = vpack.c.b16 %v2809, %v2808
        %v2825 = vpack.c.b16 %v2811, %v2810
        %v2826 = vpack.c.b16 %v2813, %v2812
        %v2827 = vpack.c.b16 %v2815, %v2814
        %v2828 = vpack.c.b16 %v2817, %v2816
        %v2829 = vpack.c.b16 %v2819, %v2818
        %v2830 = vpack.c.b16 %v2821, %v2820
        %v2831 = vpack.c.b16 %v2823, %v2822
        %2840 = vmatprep.subr.bf16.mxu0 0
        %2841 = vmatpush1.bf16.msra.mxu0 %v2824
        %2842 = vmatprep.subr.bf16.mxu0 0
        %2843 = vmatpush1.bf16.msra.mxu0 %v2825
        %2844 = vmatprep.subr.bf16.mxu0 0
        %2845 = vmatpush1.bf16.msra.mxu0 %v2826
        %2846 = vmatprep.subr.bf16.mxu0 0
        %2847 = vmatpush1.bf16.msra.mxu0 %v2827
        %2848 = vmatprep.subr.bf16.mxu0 0
        %2849 = vmatpush1.bf16.msra.mxu0 %v2828
        %2850 = vmatprep.subr.bf16.mxu0 0
        %2851 = vmatpush1.bf16.msra.mxu0 %v2829
        %2852 = vmatprep.subr.bf16.mxu0 0
        %2853 = vmatpush1.bf16.msra.mxu0 %v2830
        %2854 = vmatprep.subr.bf16.mxu0 0
        %2855 = vmatpush1.bf16.msra.mxu0 %v2831
        %2856 = vmatprep.subr.bf16.mxu0 0
        %2857 = vmatpush1.bf16.msra.mxu0 0
        %2858 = vmatprep.subr.bf16.mxu0 0
        %2859 = vmatpush1.bf16.msra.mxu0 0
        %2860 = vmatprep.subr.bf16.mxu0 0
        %2861 = vmatpush1.bf16.msra.mxu0 0
        %2862 = vmatprep.subr.bf16.mxu0 0
        %2863 = vmatpush1.bf16.msra.mxu0 0
        %2864 = vmatprep.subr.bf16.mxu0 0
        %2865 = vmatpush1.bf16.msra.mxu0 0
        %2866 = vmatprep.subr.bf16.mxu0 0
        %2867 = vmatpush1.bf16.msra.mxu0 0
        %2868 = vmatprep.subr.bf16.mxu0 0
        %2869 = vmatpush1.bf16.msra.mxu0 0
        %2870 = vmatprep.subr.bf16.mxu0 0
        %2871 = vmatpush1.bf16.msra.mxu0 0
        %2872 = vmatprep.mubr.bf16.mxu0 0
        %2873 = vmatmul.mubr.bf16.gmra.mrb[0].mxu0 %v2753
        %v2874 = vpop.f32.mrb[0].mxu0
        %v2875 = vadd.f32 %v2790, %v2874
        %v2876 = vpop.f32.mrb[0].mxu0
        %v2877 = vpop.f32.mrb[0].mxu0
        %v2878 = vadd.f32 %v2790, %v2877
        %v2879 = vpop.f32.mrb[0].mxu0
        %2880 = vmatprep.mubr.bf16.mxu0 0
        %2881 = vmatmul.mubr.bf16.gmra.mrb[0].mxu0 %v2754
        %v2882 = vpop.f32.mrb[0].mxu0
        %v2883 = vadd.f32 %v2790, %v2882
        %v2884 = vpop.f32.mrb[0].mxu0
        %v2885 = vpop.f32.mrb[0].mxu0
        %v2886 = vadd.f32 %v2790, %v2885
        %v2887 = vpop.f32.mrb[0].mxu0
        %2888 = vmatprep.mubr.bf16.mxu0 0
        %2889 = vmatmul.mubr.bf16.gmra.mrb[0].mxu0 %v2755
        %v2890 = vpop.f32.mrb[0].mxu0
        %v2891 = vadd.f32 %v2790, %v2890
        %v2892 = vpop.f32.mrb[0].mxu0
        %v2893 = vpop.f32.mrb[0].mxu0
        %v2894 = vadd.f32 %v2790, %v2893
        %v2895 = vpop.f32.mrb[0].mxu0
        %2896 = vmatprep.mubr.bf16.mxu0 0
        %2897 = vmatmul.mubr.bf16.gmra.mrb[0].mxu0 %v2756
        %v2898 = vpop.f32.mrb[0].mxu0
        %v2899 = vadd.f32 %v2790, %v2898
        %v2900 = vpop.f32.mrb[0].mxu0
        %v2901 = vpop.f32.mrb[0].mxu0
        %v2902 = vadd.f32 %v2790, %v2901
        %v2903 = vpop.f32.mrb[0].mxu0
        %2904 = vmatprep.mubr.bf16.mxu0 0
        %2905 = vmatmul.mubr.bf16.gmra.mrb[0].mxu0 %v2757
        %v2906 = vpop.f32.mrb[0].mxu0
        %v2907 = vadd.f32 %v2790, %v2906
        %v2908 = vpop.f32.mrb[0].mxu0
        %v2909 = vpop.f32.mrb[0].mxu0
        %v2910 = vadd.f32 %v2790, %v2909
        %v2911 = vpop.f32.mrb[0].mxu0
        %2912 = vmatprep.mubr.bf16.mxu0 0
        %2913 = vmatmul.mubr.bf16.gmra.mrb[0].mxu0 %v2758
        %v2914 = vpop.f32.mrb[0].mxu0
        %v2915 = vadd.f32 %v2790, %v2914
        %v2916 = vpop.f32.mrb[0].mxu0
        %v2917 = vpop.f32.mrb[0].mxu0
        %v2918 = vadd.f32 %v2790, %v2917
        %v2919 = vpop.f32.mrb[0].mxu0
        %2920 = vmatprep.mubr.bf16.mxu0 0
        %2921 = vmatmul.mubr.bf16.gmra.mrb[0].mxu0 %v2759
        %v2922 = vpop.f32.mrb[0].mxu0
        %v2923 = vadd.f32 %v2790, %v2922
        %v2924 = vpop.f32.mrb[0].mxu0
        %v2925 = vpop.f32.mrb[0].mxu0
        %v2926 = vadd.f32 %v2790, %v2925
        %v2927 = vpop.f32.mrb[0].mxu0
        %2928 = vmatprep.mubr.bf16.mxu0 0
        %2929 = vmatmul.mubr.bf16.gmra.mrb[0].mxu0 %v2760
        %v2930 = vpop.f32.mrb[0].mxu0
        %v2931 = vadd.f32 %v2790, %v2930
        %v2932 = vpop.f32.mrb[0].mxu0
        %v2933 = vpop.f32.mrb[0].mxu0
        %v2934 = vadd.f32 %v2790, %v2933
        %v2935 = vpop.f32.mrb[0].mxu0
        %2936 = vmatprep.mubr.bf16.mxu0 0
        %2937 = vmatmul.mubr.bf16.gmra.mrb[0].mxu0 %v2761
        %v2938 = vpop.f32.mrb[0].mxu0
        %v2939 = vadd.f32 %v2790, %v2938
        %v2940 = vpop.f32.mrb[0].mxu0
        %v2941 = vpop.f32.mrb[0].mxu0
        %v2942 = vadd.f32 %v2790, %v2941
        %v2943 = vpop.f32.mrb[0].mxu0
        %2944 = vmatprep.mubr.bf16.mxu0 0
        %2945 = vmatmul.mubr.bf16.gmra.mrb[0].mxu0 %v2762
        %v2946 = vpop.f32.mrb[0].mxu0
        %v2947 = vadd.f32 %v2790, %v2946
        %v2948 = vpop.f32.mrb[0].mxu0
        %v2949 = vpop.f32.mrb[0].mxu0
        %v2950 = vadd.f32 %v2790, %v2949
        %v2951 = vpop.f32.mrb[0].mxu0
        %2952 = vmatprep.mubr.bf16.mxu0 0
        %2953 = vmatmul.mubr.bf16.gmra.mrb[0].mxu0 %v2763
        %v2954 = vpop.f32.mrb[0].mxu0
        %v2955 = vadd.f32 %v2790, %v2954
        %v2956 = vpop.f32.mrb[0].mxu0
        %v2957 = vpop.f32.mrb[0].mxu0
        %v2958 = vadd.f32 %v2790, %v2957
        %v2959 = vpop.f32.mrb[0].mxu0
        %2960 = vmatprep.mubr.bf16.mxu0 0
        %2961 = vmatmul.mubr.bf16.gmra.mrb[0].mxu0 %v2764
        %v2962 = vpop.f32.mrb[0].mxu0
        %v2963 = vadd.f32 %v2790, %v2962
        %v2964 = vpop.f32.mrb[0].mxu0
        %v2965 = vpop.f32.mrb[0].mxu0
        %v2966 = vadd.f32 %v2790, %v2965
        %v2967 = vpop.f32.mrb[0].mxu0
        %2968 = vmatprep.mubr.bf16.mxu0 0
        %2969 = vmatmul.mubr.bf16.gmra.mrb[0].mxu0 %v2765
        %v2970 = vpop.f32.mrb[0].mxu0
        %v2971 = vadd.f32 %v2790, %v2970
        %v2972 = vpop.f32.mrb[0].mxu0
        %v2973 = vpop.f32.mrb[0].mxu0
        %v2974 = vadd.f32 %v2790, %v2973
        %v2975 = vpop.f32.mrb[0].mxu0
        %2976 = vmatprep.mubr.bf16.mxu0 0
        %2977 = vmatmul.mubr.bf16.gmra.mrb[0].mxu0 %v2766
        %v2978 = vpop.f32.mrb[0].mxu0
        %v2979 = vadd.f32 %v2790, %v2978
        %v2980 = vpop.f32.mrb[0].mxu0
        %v2981 = vpop.f32.mrb[0].mxu0
        %v2982 = vadd.f32 %v2790, %v2981
        %v2983 = vpop.f32.mrb[0].mxu0
        %2984 = vmatprep.mubr.bf16.mxu0 0
        %2985 = vmatmul.mubr.bf16.gmra.mrb[0].mxu0 %v2767
        %v2986 = vpop.f32.mrb[0].mxu0
        %v2987 = vadd.f32 %v2790, %v2986
        %v2988 = vpop.f32.mrb[0].mxu0
        %v2989 = vpop.f32.mrb[0].mxu0
        %v2990 = vadd.f32 %v2790, %v2989
        %v2991 = vpop.f32.mrb[0].mxu0
        %2992 = vmatprep.mubr.bf16.mxu0 0
        %2993 = vmatmul.mubr.bf16.gmra.mrb[0].mxu0 %v2768
        %v2994 = vpop.f32.mrb[0].mxu0
        %v2995 = vadd.f32 %v2790, %v2994
        %v2996 = vpop.f32.mrb[0].mxu0
        %v2997 = vpop.f32.mrb[0].mxu0
        %v2998 = vadd.f32 %v2790, %v2997
        %v2999 = vpop.f32.mrb[0].mxu0
        %3000 = vdwg.mxu0
        %v3001 = vmax.f32 %v2875, 0.0
        %v3002 = vmax.f32 %v2878, 0.0
        %v3003 = vmax.f32 %v2883, 0.0
        %v3004 = vmax.f32 %v2886, 0.0
        %v3005 = vmax.f32 %v2891, 0.0
        %v3006 = vmax.f32 %v2894, 0.0
        %v3007 = vmax.f32 %v2899, 0.0
        %v3008 = vmax.f32 %v2902, 0.0
        %v3009 = vmax.f32 %v2907, 0.0
        %v3010 = vmax.f32 %v2910, 0.0
        %v3011 = vmax.f32 %v2915, 0.0
        %v3012 = vmax.f32 %v2918, 0.0
        %v3013 = vmax.f32 %v2923, 0.0
        %v3014 = vmax.f32 %v2926, 0.0
        %v3015 = vmax.f32 %v2931, 0.0
        %v3016 = vmax.f32 %v2934, 0.0
        %v3017 = vmax.f32 %v2939, 0.0
        %v3018 = vmax.f32 %v2942, 0.0
        %v3019 = vmax.f32 %v2947, 0.0
        %v3020 = vmax.f32 %v2950, 0.0
        %v3021 = vmax.f32 %v2955, 0.0
        %v3022 = vmax.f32 %v2958, 0.0
        %v3023 = vmax.f32 %v2963, 0.0
        %v3024 = vmax.f32 %v2966, 0.0
        %v3025 = vmax.f32 %v2971, 0.0
        %v3026 = vmax.f32 %v2974, 0.0
        %v3027 = vmax.f32 %v2979, 0.0
        %v3028 = vmax.f32 %v2982, 0.0
        %v3029 = vmax.f32 %v2987, 0.0
        %v3030 = vmax.f32 %v2990, 0.0
        %v3031 = vmax.f32 %v2995, 0.0
        %v3032 = vmax.f32 %v2998, 0.0
        %v3033 = vpack.c.bf16 %v3002, %v3001
        %v3034 = vpack.c.bf16 %v3004, %v3003
        %v3035 = vpack.c.bf16 %v3006, %v3005
        %v3036 = vpack.c.bf16 %v3008, %v3007
        %v3037 = vpack.c.bf16 %v3010, %v3009
        %v3038 = vpack.c.bf16 %v3012, %v3011
        %v3039 = vpack.c.bf16 %v3014, %v3013
        %v3040 = vpack.c.bf16 %v3016, %v3015
        %v3041 = vpack.c.bf16 %v3018, %v3017
        %v3042 = vpack.c.bf16 %v3020, %v3019
        %v3043 = vpack.c.bf16 %v3022, %v3021
        %v3044 = vpack.c.bf16 %v3024, %v3023
        %v3045 = vpack.c.bf16 %v3026, %v3025
        %v3046 = vpack.c.bf16 %v3028, %v3027
        %v3047 = vpack.c.bf16 %v3030, %v3029
        %v3048 = vpack.c.bf16 %v3032, %v3031
        %v3049 = vld [vmem:[%s6] sm:$0xf]
        %v3050 = vld [vmem:[%s6 + $0x4] sm:$0xf]
        %v3051 = vld [vmem:[%s6 + $0x8] sm:$0xf]
        %v3052 = vld [vmem:[%s6 + $0xc] sm:$0xf]
        %v3053 = vld [vmem:[%s6 + $0x10] sm:$0xf]
        %v3054 = vld [vmem:[%s6 + $0x14] sm:$0xf]
        %v3055 = vld [vmem:[%s6 + $0x18] sm:$0xf]
        %v3056 = vld [vmem:[%s6 + $0x1c] sm:$0xf]
        %v3057 = vld [vmem:[%s6 + $0x20] sm:$0xf]
        %v3058 = vld [vmem:[%s6 + $0x24] sm:$0xf]
        %v3059 = vld [vmem:[%s6 + $0x28] sm:$0xf]
        %v3060 = vld [vmem:[%s6 + $0x2c] sm:$0xf]
        %v3061 = vld [vmem:[%s6 + $0x30] sm:$0xf]
        %v3062 = vld [vmem:[%s6 + $0x34] sm:$0xf]
        %v3063 = vld [vmem:[%s6 + $0x38] sm:$0xf]
        %v3064 = vld [vmem:[%s6 + $0x3c] sm:$0xf]
        %v3065 = vld [vmem:[%s7] sm:$0x1]
        %v3067 = vlaneseq
        %v3068 = vshrl.u32 %v3067, 7
        %v3069 = vsub.s32 0, %v3068
        %v3070 = vrot.slane %v3065, %v3069
        %v3088 = vunpack.c.l.b16 %v3049
        %v3089 = vunpack.c.l.b16 %v3050
        %v3090 = vunpack.c.l.b16 %v3051
        %v3091 = vunpack.c.l.b16 %v3052
        %v3092 = vunpack.c.l.b16 %v3053
        %v3093 = vunpack.c.l.b16 %v3054
        %v3094 = vunpack.c.l.b16 %v3055
        %v3095 = vunpack.c.l.b16 %v3056
        %v3096 = vunpack.c.l.b16 %v3057
        %v3097 = vunpack.c.l.b16 %v3058
        %v3098 = vunpack.c.l.b16 %v3059
        %v3099 = vunpack.c.l.b16 %v3060
        %v3100 = vunpack.c.l.b16 %v3061
        %v3101 = vunpack.c.l.b16 %v3062
        %v3102 = vunpack.c.l.b16 %v3063
        %v3103 = vunpack.c.l.b16 %v3064
        %v3104 = vpack.c.b16 %v3089, %v3088
        %v3105 = vpack.c.b16 %v3091, %v3090
        %v3106 = vpack.c.b16 %v3093, %v3092
        %v3107 = vpack.c.b16 %v3095, %v3094
        %v3108 = vpack.c.b16 %v3097, %v3096
        %v3109 = vpack.c.b16 %v3099, %v3098
        %v3110 = vpack.c.b16 %v3101, %v3100
        %v3111 = vpack.c.b16 %v3103, %v3102
        %3120 = vmatprep.subr.bf16.mxu0 0
        %3121 = vmatpush1.bf16.msra.mxu0 %v3104
        %3122 = vmatprep.subr.bf16.mxu0 0
        %3123 = vmatpush1.bf16.msra.mxu0 %v3105
        %3124 = vmatprep.subr.bf16.mxu0 0
        %3125 = vmatpush1.bf16.msra.mxu0 %v3106
        %3126 = vmatprep.subr.bf16.mxu0 0
        %3127 = vmatpush1.bf16.msra.mxu0 %v3107
        %3128 = vmatprep.subr.bf16.mxu0 0
        %3129 = vmatpush1.bf16.msra.mxu0 %v3108
        %3130 = vmatprep.subr.bf16.mxu0 0
        %3131 = vmatpush1.bf16.msra.mxu0 %v3109
        %3132 = vmatprep.subr.bf16.mxu0 0
        %3133 = vmatpush1.bf16.msra.mxu0 %v3110
        %3134 = vmatprep.subr.bf16.mxu0 0
        %3135 = vmatpush1.bf16.msra.mxu0 %v3111
        %3136 = vmatprep.subr.bf16.mxu0 0
        %3137 = vmatpush1.bf16.msra.mxu0 0
        %3138 = vmatprep.subr.bf16.mxu0 0
        %3139 = vmatpush1.bf16.msra.mxu0 0
        %3140 = vmatprep.subr.bf16.mxu0 0
        %3141 = vmatpush1.bf16.msra.mxu0 0
        %3142 = vmatprep.subr.bf16.mxu0 0
        %3143 = vmatpush1.bf16.msra.mxu0 0
        %3144 = vmatprep.subr.bf16.mxu0 0
        %3145 = vmatpush1.bf16.msra.mxu0 0
        %3146 = vmatprep.subr.bf16.mxu0 0
        %3147 = vmatpush1.bf16.msra.mxu0 0
        %3148 = vmatprep.subr.bf16.mxu0 0
        %3149 = vmatpush1.bf16.msra.mxu0 0
        %3150 = vmatprep.subr.bf16.mxu0 0
        %3151 = vmatpush1.bf16.msra.mxu0 0
        %3152 = vmatprep.mubr.bf16.mxu0 0
        %3153 = vmatmul.mubr.bf16.gmra.mrb[0].mxu0 %v3033
        %v3154 = vpop.f32.mrb[0].mxu0
        %v3155 = vadd.f32 %v3070, %v3154
        %v3156 = vpop.f32.mrb[0].mxu0
        %v3157 = vpop.f32.mrb[0].mxu0
        %v3158 = vadd.f32 %v3070, %v3157
        %v3159 = vpop.f32.mrb[0].mxu0
        %3160 = vmatprep.mubr.bf16.mxu0 0
        %3161 = vmatmul.mubr.bf16.gmra.mrb[0].mxu0 %v3034
        %v3162 = vpop.f32.mrb[0].mxu0
        %v3163 = vadd.f32 %v3070, %v3162
        %v3164 = vpop.f32.mrb[0].mxu0
        %v3165 = vpop.f32.mrb[0].mxu0
        %v3166 = vadd.f32 %v3070, %v3165
        %v3167 = vpop.f32.mrb[0].mxu0
        %3168 = vmatprep.mubr.bf16.mxu0 0
        %3169 = vmatmul.mubr.bf16.gmra.mrb[0].mxu0 %v3035
        %v3170 = vpop.f32.mrb[0].mxu0
        %v3171 = vadd.f32 %v3070, %v3170
        %v3172 = vpop.f32.mrb[0].mxu0
        %v3173 = vpop.f32.mrb[0].mxu0
        %v3174 = vadd.f32 %v3070, %v3173
        %v3175 = vpop.f32.mrb[0].mxu0
        %3176 = vmatprep.mubr.bf16.mxu0 0
        %3177 = vmatmul.mubr.bf16.gmra.mrb[0].mxu0 %v3036
        %v3178 = vpop.f32.mrb[0].mxu0
        %v3179 = vadd.f32 %v3070, %v3178
        %v3180 = vpop.f32.mrb[0].mxu0
        %v3181 = vpop.f32.mrb[0].mxu0
        %v3182 = vadd.f32 %v3070, %v3181
        %v3183 = vpop.f32.mrb[0].mxu0
        %3184 = vmatprep.mubr.bf16.mxu0 0
        %3185 = vmatmul.mubr.bf16.gmra.mrb[0].mxu0 %v3037
        %v3186 = vpop.f32.mrb[0].mxu0
        %v3187 = vadd.f32 %v3070, %v3186
        %v3188 = vpop.f32.mrb[0].mxu0
        %v3189 = vpop.f32.mrb[0].mxu0
        %v3190 = vadd.f32 %v3070, %v3189
        %v3191 = vpop.f32.mrb[0].mxu0
        %3192 = vmatprep.mubr.bf16.mxu0 0
        %3193 = vmatmul.mubr.bf16.gmra.mrb[0].mxu0 %v3038
        %v3194 = vpop.f32.mrb[0].mxu0
        %v3195 = vadd.f32 %v3070, %v3194
        %v3196 = vpop.f32.mrb[0].mxu0
        %v3197 = vpop.f32.mrb[0].mxu0
        %v3198 = vadd.f32 %v3070, %v3197
        %v3199 = vpop.f32.mrb[0].mxu0
        %3200 = vmatprep.mubr.bf16.mxu0 0
        %3201 = vmatmul.mubr.bf16.gmra.mrb[0].mxu0 %v3039
        %v3202 = vpop.f32.mrb[0].mxu0
        %v3203 = vadd.f32 %v3070, %v3202
        %v3204 = vpop.f32.mrb[0].mxu0
        %v3205 = vpop.f32.mrb[0].mxu0
        %v3206 = vadd.f32 %v3070, %v3205
        %v3207 = vpop.f32.mrb[0].mxu0
        %3208 = vmatprep.mubr.bf16.mxu0 0
        %3209 = vmatmul.mubr.bf16.gmra.mrb[0].mxu0 %v3040
        %v3210 = vpop.f32.mrb[0].mxu0
        %v3211 = vadd.f32 %v3070, %v3210
        %v3212 = vpop.f32.mrb[0].mxu0
        %v3213 = vpop.f32.mrb[0].mxu0
        %v3214 = vadd.f32 %v3070, %v3213
        %v3215 = vpop.f32.mrb[0].mxu0
        %3216 = vmatprep.mubr.bf16.mxu0 0
        %3217 = vmatmul.mubr.bf16.gmra.mrb[0].mxu0 %v3041
        %v3218 = vpop.f32.mrb[0].mxu0
        %v3219 = vadd.f32 %v3070, %v3218
        %v3220 = vpop.f32.mrb[0].mxu0
        %v3221 = vpop.f32.mrb[0].mxu0
        %v3222 = vadd.f32 %v3070, %v3221
        %v3223 = vpop.f32.mrb[0].mxu0
        %3224 = vmatprep.mubr.bf16.mxu0 0
        %3225 = vmatmul.mubr.bf16.gmra.mrb[0].mxu0 %v3042
        %v3226 = vpop.f32.mrb[0].mxu0
        %v3227 = vadd.f32 %v3070, %v3226
        %v3228 = vpop.f32.mrb[0].mxu0
        %v3229 = vpop.f32.mrb[0].mxu0
        %v3230 = vadd.f32 %v3070, %v3229
        %v3231 = vpop.f32.mrb[0].mxu0
        %3232 = vmatprep.mubr.bf16.mxu0 0
        %3233 = vmatmul.mubr.bf16.gmra.mrb[0].mxu0 %v3043
        %v3234 = vpop.f32.mrb[0].mxu0
        %v3235 = vadd.f32 %v3070, %v3234
        %v3236 = vpop.f32.mrb[0].mxu0
        %v3237 = vpop.f32.mrb[0].mxu0
        %v3238 = vadd.f32 %v3070, %v3237
        %v3239 = vpop.f32.mrb[0].mxu0
        %3240 = vmatprep.mubr.bf16.mxu0 0
        %3241 = vmatmul.mubr.bf16.gmra.mrb[0].mxu0 %v3044
        %v3242 = vpop.f32.mrb[0].mxu0
        %v3243 = vadd.f32 %v3070, %v3242
        %v3244 = vpop.f32.mrb[0].mxu0
        %v3245 = vpop.f32.mrb[0].mxu0
        %v3246 = vadd.f32 %v3070, %v3245
        %v3247 = vpop.f32.mrb[0].mxu0
        %3248 = vmatprep.mubr.bf16.mxu0 0
        %3249 = vmatmul.mubr.bf16.gmra.mrb[0].mxu0 %v3045
        %v3250 = vpop.f32.mrb[0].mxu0
        %v3251 = vadd.f32 %v3070, %v3250
        %v3252 = vpop.f32.mrb[0].mxu0
        %v3253 = vpop.f32.mrb[0].mxu0
        %v3254 = vadd.f32 %v3070, %v3253
        %v3255 = vpop.f32.mrb[0].mxu0
        %3256 = vmatprep.mubr.bf16.mxu0 0
        %3257 = vmatmul.mubr.bf16.gmra.mrb[0].mxu0 %v3046
        %v3258 = vpop.f32.mrb[0].mxu0
        %v3259 = vadd.f32 %v3070, %v3258
        %v3260 = vpop.f32.mrb[0].mxu0
        %v3261 = vpop.f32.mrb[0].mxu0
        %v3262 = vadd.f32 %v3070, %v3261
        %v3263 = vpop.f32.mrb[0].mxu0
        %3264 = vmatprep.mubr.bf16.mxu0 0
        %3265 = vmatmul.mubr.bf16.gmra.mrb[0].mxu0 %v3047
        %v3266 = vpop.f32.mrb[0].mxu0
        %v3267 = vadd.f32 %v3070, %v3266
        %v3268 = vpop.f32.mrb[0].mxu0
        %v3269 = vpop.f32.mrb[0].mxu0
        %v3270 = vadd.f32 %v3070, %v3269
        %v3271 = vpop.f32.mrb[0].mxu0
        %3272 = vmatprep.mubr.bf16.mxu0 0
        %3273 = vmatmul.mubr.bf16.gmra.mrb[0].mxu0 %v3048
        %v3274 = vpop.f32.mrb[0].mxu0
        %v3275 = vadd.f32 %v3070, %v3274
        %v3276 = vpop.f32.mrb[0].mxu0
        %v3277 = vpop.f32.mrb[0].mxu0
        %v3278 = vadd.f32 %v3070, %v3277
        %v3279 = vpop.f32.mrb[0].mxu0
        %3280 = vdwg.mxu0
        %v3281 = vmax.f32 %v3155, 0.0
        %v3282 = vmax.f32 %v3158, 0.0
        %v3283 = vmax.f32 %v3163, 0.0
        %v3284 = vmax.f32 %v3166, 0.0
        %v3285 = vmax.f32 %v3171, 0.0
        %v3286 = vmax.f32 %v3174, 0.0
        %v3287 = vmax.f32 %v3179, 0.0
        %v3288 = vmax.f32 %v3182, 0.0
        %v3289 = vmax.f32 %v3187, 0.0
        %v3290 = vmax.f32 %v3190, 0.0
        %v3291 = vmax.f32 %v3195, 0.0
        %v3292 = vmax.f32 %v3198, 0.0
        %v3293 = vmax.f32 %v3203, 0.0
        %v3294 = vmax.f32 %v3206, 0.0
        %v3295 = vmax.f32 %v3211, 0.0
        %v3296 = vmax.f32 %v3214, 0.0
        %v3297 = vmax.f32 %v3219, 0.0
        %v3298 = vmax.f32 %v3222, 0.0
        %v3299 = vmax.f32 %v3227, 0.0
        %v3300 = vmax.f32 %v3230, 0.0
        %v3301 = vmax.f32 %v3235, 0.0
        %v3302 = vmax.f32 %v3238, 0.0
        %v3303 = vmax.f32 %v3243, 0.0
        %v3304 = vmax.f32 %v3246, 0.0
        %v3305 = vmax.f32 %v3251, 0.0
        %v3306 = vmax.f32 %v3254, 0.0
        %v3307 = vmax.f32 %v3259, 0.0
        %v3308 = vmax.f32 %v3262, 0.0
        %v3309 = vmax.f32 %v3267, 0.0
        %v3310 = vmax.f32 %v3270, 0.0
        %v3311 = vmax.f32 %v3275, 0.0
        %v3312 = vmax.f32 %v3278, 0.0
        %v3313 = vpack.c.bf16 %v3282, %v3281
        %v3314 = vpack.c.bf16 %v3284, %v3283
        %v3315 = vpack.c.bf16 %v3286, %v3285
        %v3316 = vpack.c.bf16 %v3288, %v3287
        %v3317 = vpack.c.bf16 %v3290, %v3289
        %v3318 = vpack.c.bf16 %v3292, %v3291
        %v3319 = vpack.c.bf16 %v3294, %v3293
        %v3320 = vpack.c.bf16 %v3296, %v3295
        %v3321 = vpack.c.bf16 %v3298, %v3297
        %v3322 = vpack.c.bf16 %v3300, %v3299
        %v3323 = vpack.c.bf16 %v3302, %v3301
        %v3324 = vpack.c.bf16 %v3304, %v3303
        %v3325 = vpack.c.bf16 %v3306, %v3305
        %v3326 = vpack.c.bf16 %v3308, %v3307
        %v3327 = vpack.c.bf16 %v3310, %v3309
        %v3328 = vpack.c.bf16 %v3312, %v3311
        %v3329 = vld [vmem:[%s8] sm:$0xf]
        %v3330 = vld [vmem:[%s8 + $0x4] sm:$0xf]
        %v3331 = vld [vmem:[%s8 + $0x8] sm:$0xf]
        %v3332 = vld [vmem:[%s8 + $0xc] sm:$0xf]
        %v3333 = vld [vmem:[%s8 + $0x10] sm:$0xf]
        %v3334 = vld [vmem:[%s8 + $0x14] sm:$0xf]
        %v3335 = vld [vmem:[%s8 + $0x18] sm:$0xf]
        %v3336 = vld [vmem:[%s8 + $0x1c] sm:$0xf]
        %v3337 = vld [vmem:[%s8 + $0x20] sm:$0xf]
        %v3338 = vld [vmem:[%s8 + $0x24] sm:$0xf]
        %v3339 = vld [vmem:[%s8 + $0x28] sm:$0xf]
        %v3340 = vld [vmem:[%s8 + $0x2c] sm:$0xf]
        %v3341 = vld [vmem:[%s8 + $0x30] sm:$0xf]
        %v3342 = vld [vmem:[%s8 + $0x34] sm:$0xf]
        %v3343 = vld [vmem:[%s8 + $0x38] sm:$0xf]
        %v3344 = vld [vmem:[%s8 + $0x3c] sm:$0xf]
        %v3345 = vld [vmem:[%s9] sm:$0x1]
        %v3347 = vlaneseq
        %v3348 = vshrl.u32 %v3347, 7
        %v3349 = vsub.s32 0, %v3348
        %v3350 = vrot.slane %v3345, %v3349
        %v3368 = vunpack.c.l.b16 %v3329
        %v3369 = vunpack.c.l.b16 %v3330
        %v3370 = vunpack.c.l.b16 %v3331
        %v3371 = vunpack.c.l.b16 %v3332
        %v3372 = vunpack.c.l.b16 %v3333
        %v3373 = vunpack.c.l.b16 %v3334
        %v3374 = vunpack.c.l.b16 %v3335
        %v3375 = vunpack.c.l.b16 %v3336
        %v3376 = vunpack.c.l.b16 %v3337
        %v3377 = vunpack.c.l.b16 %v3338
        %v3378 = vunpack.c.l.b16 %v3339
        %v3379 = vunpack.c.l.b16 %v3340
        %v3380 = vunpack.c.l.b16 %v3341
        %v3381 = vunpack.c.l.b16 %v3342
        %v3382 = vunpack.c.l.b16 %v3343
        %v3383 = vunpack.c.l.b16 %v3344
        %v3384 = vpack.c.b16 %v3369, %v3368
        %v3385 = vpack.c.b16 %v3371, %v3370
        %v3386 = vpack.c.b16 %v3373, %v3372
        %v3387 = vpack.c.b16 %v3375, %v3374
        %v3388 = vpack.c.b16 %v3377, %v3376
        %v3389 = vpack.c.b16 %v3379, %v3378
        %v3390 = vpack.c.b16 %v3381, %v3380
        %v3391 = vpack.c.b16 %v3383, %v3382
        %3400 = vmatprep.subr.bf16.mxu0 0
        %3401 = vmatpush1.bf16.msra.mxu0 %v3384
        %3402 = vmatprep.subr.bf16.mxu0 0
        %3403 = vmatpush1.bf16.msra.mxu0 %v3385
        %3404 = vmatprep.subr.bf16.mxu0 0
        %3405 = vmatpush1.bf16.msra.mxu0 %v3386
        %3406 = vmatprep.subr.bf16.mxu0 0
        %3407 = vmatpush1.bf16.msra.mxu0 %v3387
        %3408 = vmatprep.subr.bf16.mxu0 0
        %3409 = vmatpush1.bf16.msra.mxu0 %v3388
        %3410 = vmatprep.subr.bf16.mxu0 0
        %3411 = vmatpush1.bf16.msra.mxu0 %v3389
        %3412 = vmatprep.subr.bf16.mxu0 0
        %3413 = vmatpush1.bf16.msra.mxu0 %v3390
        %3414 = vmatprep.subr.bf16.mxu0 0
        %3415 = vmatpush1.bf16.msra.mxu0 %v3391
        %3416 = vmatprep.subr.bf16.mxu0 0
        %3417 = vmatpush1.bf16.msra.mxu0 0
        %3418 = vmatprep.subr.bf16.mxu0 0
        %3419 = vmatpush1.bf16.msra.mxu0 0
        %3420 = vmatprep.subr.bf16.mxu0 0
        %3421 = vmatpush1.bf16.msra.mxu0 0
        %3422 = vmatprep.subr.bf16.mxu0 0
        %3423 = vmatpush1.bf16.msra.mxu0 0
        %3424 = vmatprep.subr.bf16.mxu0 0
        %3425 = vmatpush1.bf16.msra.mxu0 0
        %3426 = vmatprep.subr.bf16.mxu0 0
        %3427 = vmatpush1.bf16.msra.mxu0 0
        %3428 = vmatprep.subr.bf16.mxu0 0
        %3429 = vmatpush1.bf16.msra.mxu0 0
        %3430 = vmatprep.subr.bf16.mxu0 0
        %3431 = vmatpush1.bf16.msra.mxu0 0
        %3432 = vmatprep.mubr.bf16.mxu0 0
        %3433 = vmatmul.mubr.bf16.gmra.mrb[0].mxu0 %v3313
        %v3434 = vpop.f32.mrb[0].mxu0
        %v3435 = vadd.f32 %v3350, %v3434
        %v3436 = vpop.f32.mrb[0].mxu0
        %v3437 = vpop.f32.mrb[0].mxu0
        %v3438 = vadd.f32 %v3350, %v3437
        %v3439 = vpop.f32.mrb[0].mxu0
        %3440 = vmatprep.mubr.bf16.mxu0 0
        %3441 = vmatmul.mubr.bf16.gmra.mrb[0].mxu0 %v3314
        %v3442 = vpop.f32.mrb[0].mxu0
        %v3443 = vadd.f32 %v3350, %v3442
        %v3444 = vpop.f32.mrb[0].mxu0
        %v3445 = vpop.f32.mrb[0].mxu0
        %v3446 = vadd.f32 %v3350, %v3445
        %v3447 = vpop.f32.mrb[0].mxu0
        %3448 = vmatprep.mubr.bf16.mxu0 0
        %3449 = vmatmul.mubr.bf16.gmra.mrb[0].mxu0 %v3315
        %v3450 = vpop.f32.mrb[0].mxu0
        %v3451 = vadd.f32 %v3350, %v3450
        %v3452 = vpop.f32.mrb[0].mxu0
        %v3453 = vpop.f32.mrb[0].mxu0
        %v3454 = vadd.f32 %v3350, %v3453
        %v3455 = vpop.f32.mrb[0].mxu0
        %3456 = vmatprep.mubr.bf16.mxu0 0
        %3457 = vmatmul.mubr.bf16.gmra.mrb[0].mxu0 %v3316
        %v3458 = vpop.f32.mrb[0].mxu0
        %v3459 = vadd.f32 %v3350, %v3458
        %v3460 = vpop.f32.mrb[0].mxu0
        %v3461 = vpop.f32.mrb[0].mxu0
        %v3462 = vadd.f32 %v3350, %v3461
        %v3463 = vpop.f32.mrb[0].mxu0
        %3464 = vmatprep.mubr.bf16.mxu0 0
        %3465 = vmatmul.mubr.bf16.gmra.mrb[0].mxu0 %v3317
        %v3466 = vpop.f32.mrb[0].mxu0
        %v3467 = vadd.f32 %v3350, %v3466
        %v3468 = vpop.f32.mrb[0].mxu0
        %v3469 = vpop.f32.mrb[0].mxu0
        %v3470 = vadd.f32 %v3350, %v3469
        %v3471 = vpop.f32.mrb[0].mxu0
        %3472 = vmatprep.mubr.bf16.mxu0 0
        %3473 = vmatmul.mubr.bf16.gmra.mrb[0].mxu0 %v3318
        %v3474 = vpop.f32.mrb[0].mxu0
        %v3475 = vadd.f32 %v3350, %v3474
        %v3476 = vpop.f32.mrb[0].mxu0
        %v3477 = vpop.f32.mrb[0].mxu0
        %v3478 = vadd.f32 %v3350, %v3477
        %v3479 = vpop.f32.mrb[0].mxu0
        %3480 = vmatprep.mubr.bf16.mxu0 0
        %3481 = vmatmul.mubr.bf16.gmra.mrb[0].mxu0 %v3319
        %v3482 = vpop.f32.mrb[0].mxu0
        %v3483 = vadd.f32 %v3350, %v3482
        %v3484 = vpop.f32.mrb[0].mxu0
        %v3485 = vpop.f32.mrb[0].mxu0
        %v3486 = vadd.f32 %v3350, %v3485
        %v3487 = vpop.f32.mrb[0].mxu0
        %3488 = vmatprep.mubr.bf16.mxu0 0
        %3489 = vmatmul.mubr.bf16.gmra.mrb[0].mxu0 %v3320
        %v3490 = vpop.f32.mrb[0].mxu0
        %v3491 = vadd.f32 %v3350, %v3490
        %v3492 = vpop.f32.mrb[0].mxu0
        %v3493 = vpop.f32.mrb[0].mxu0
        %v3494 = vadd.f32 %v3350, %v3493
        %v3495 = vpop.f32.mrb[0].mxu0
        %3496 = vmatprep.mubr.bf16.mxu0 0
        %3497 = vmatmul.mubr.bf16.gmra.mrb[0].mxu0 %v3321
        %v3498 = vpop.f32.mrb[0].mxu0
        %v3499 = vadd.f32 %v3350, %v3498
        %v3500 = vpop.f32.mrb[0].mxu0
        %v3501 = vpop.f32.mrb[0].mxu0
        %v3502 = vadd.f32 %v3350, %v3501
        %v3503 = vpop.f32.mrb[0].mxu0
        %3504 = vmatprep.mubr.bf16.mxu0 0
        %3505 = vmatmul.mubr.bf16.gmra.mrb[0].mxu0 %v3322
        %v3506 = vpop.f32.mrb[0].mxu0
        %v3507 = vadd.f32 %v3350, %v3506
        %v3508 = vpop.f32.mrb[0].mxu0
        %v3509 = vpop.f32.mrb[0].mxu0
        %v3510 = vadd.f32 %v3350, %v3509
        %v3511 = vpop.f32.mrb[0].mxu0
        %3512 = vmatprep.mubr.bf16.mxu0 0
        %3513 = vmatmul.mubr.bf16.gmra.mrb[0].mxu0 %v3323
        %v3514 = vpop.f32.mrb[0].mxu0
        %v3515 = vadd.f32 %v3350, %v3514
        %v3516 = vpop.f32.mrb[0].mxu0
        %v3517 = vpop.f32.mrb[0].mxu0
        %v3518 = vadd.f32 %v3350, %v3517
        %v3519 = vpop.f32.mrb[0].mxu0
        %3520 = vmatprep.mubr.bf16.mxu0 0
        %3521 = vmatmul.mubr.bf16.gmra.mrb[0].mxu0 %v3324
        %v3522 = vpop.f32.mrb[0].mxu0
        %v3523 = vadd.f32 %v3350, %v3522
        %v3524 = vpop.f32.mrb[0].mxu0
        %v3525 = vpop.f32.mrb[0].mxu0
        %v3526 = vadd.f32 %v3350, %v3525
        %v3527 = vpop.f32.mrb[0].mxu0
        %3528 = vmatprep.mubr.bf16.mxu0 0
        %3529 = vmatmul.mubr.bf16.gmra.mrb[0].mxu0 %v3325
        %v3530 = vpop.f32.mrb[0].mxu0
        %v3531 = vadd.f32 %v3350, %v3530
        %v3532 = vpop.f32.mrb[0].mxu0
        %v3533 = vpop.f32.mrb[0].mxu0
        %v3534 = vadd.f32 %v3350, %v3533
        %v3535 = vpop.f32.mrb[0].mxu0
        %3536 = vmatprep.mubr.bf16.mxu0 0
        %3537 = vmatmul.mubr.bf16.gmra.mrb[0].mxu0 %v3326
        %v3538 = vpop.f32.mrb[0].mxu0
        %v3539 = vadd.f32 %v3350, %v3538
        %v3540 = vpop.f32.mrb[0].mxu0
        %v3541 = vpop.f32.mrb[0].mxu0
        %v3542 = vadd.f32 %v3350, %v3541
        %v3543 = vpop.f32.mrb[0].mxu0
        %3544 = vmatprep.mubr.bf16.mxu0 0
        %3545 = vmatmul.mubr.bf16.gmra.mrb[0].mxu0 %v3327
        %v3546 = vpop.f32.mrb[0].mxu0
        %v3547 = vadd.f32 %v3350, %v3546
        %v3548 = vpop.f32.mrb[0].mxu0
        %v3549 = vpop.f32.mrb[0].mxu0
        %v3550 = vadd.f32 %v3350, %v3549
        %v3551 = vpop.f32.mrb[0].mxu0
        %3552 = vmatprep.mubr.bf16.mxu0 0
        %3553 = vmatmul.mubr.bf16.gmra.mrb[0].mxu0 %v3328
        %v3554 = vpop.f32.mrb[0].mxu0
        %v3555 = vadd.f32 %v3350, %v3554
        %v3556 = vpop.f32.mrb[0].mxu0
        %v3557 = vpop.f32.mrb[0].mxu0
        %v3558 = vadd.f32 %v3350, %v3557
        %v3559 = vpop.f32.mrb[0].mxu0
        %3560 = vdwg.mxu0
        %v3561 = vmax.f32 %v3435, 0.0
        %v3562 = vmax.f32 %v3438, 0.0
        %v3563 = vmax.f32 %v3443, 0.0
        %v3564 = vmax.f32 %v3446, 0.0
        %v3565 = vmax.f32 %v3451, 0.0
        %v3566 = vmax.f32 %v3454, 0.0
        %v3567 = vmax.f32 %v3459, 0.0
        %v3568 = vmax.f32 %v3462, 0.0
        %v3569 = vmax.f32 %v3467, 0.0
        %v3570 = vmax.f32 %v3470, 0.0
        %v3571 = vmax.f32 %v3475, 0.0
        %v3572 = vmax.f32 %v3478, 0.0
        %v3573 = vmax.f32 %v3483, 0.0
        %v3574 = vmax.f32 %v3486, 0.0
        %v3575 = vmax.f32 %v3491, 0.0
        %v3576 = vmax.f32 %v3494, 0.0
        %v3577 = vmax.f32 %v3499, 0.0
        %v3578 = vmax.f32 %v3502, 0.0
        %v3579 = vmax.f32 %v3507, 0.0
        %v3580 = vmax.f32 %v3510, 0.0
        %v3581 = vmax.f32 %v3515, 0.0
        %v3582 = vmax.f32 %v3518, 0.0
        %v3583 = vmax.f32 %v3523, 0.0
        %v3584 = vmax.f32 %v3526, 0.0
        %v3585 = vmax.f32 %v3531, 0.0
        %v3586 = vmax.f32 %v3534, 0.0
        %v3587 = vmax.f32 %v3539, 0.0
        %v3588 = vmax.f32 %v3542, 0.0
        %v3589 = vmax.f32 %v3547, 0.0
        %v3590 = vmax.f32 %v3550, 0.0
        %v3591 = vmax.f32 %v3555, 0.0
        %v3592 = vmax.f32 %v3558, 0.0
        %v3593 = vpack.c.bf16 %v3562, %v3561
        %v3594 = vpack.c.bf16 %v3564, %v3563
        %v3595 = vpack.c.bf16 %v3566, %v3565
        %v3596 = vpack.c.bf16 %v3568, %v3567
        %v3597 = vpack.c.bf16 %v3570, %v3569
        %v3598 = vpack.c.bf16 %v3572, %v3571
        %v3599 = vpack.c.bf16 %v3574, %v3573
        %v3600 = vpack.c.bf16 %v3576, %v3575
        %v3601 = vpack.c.bf16 %v3578, %v3577
        %v3602 = vpack.c.bf16 %v3580, %v3579
        %v3603 = vpack.c.bf16 %v3582, %v3581
        %v3604 = vpack.c.bf16 %v3584, %v3583
        %v3605 = vpack.c.bf16 %v3586, %v3585
        %v3606 = vpack.c.bf16 %v3588, %v3587
        %v3607 = vpack.c.bf16 %v3590, %v3589
        %v3608 = vpack.c.bf16 %v3592, %v3591
        %v3609 = vld [vmem:[%s10] sm:$0xf]
        %v3610 = vld [vmem:[%s10 + $0x4] sm:$0xf]
        %v3611 = vld [vmem:[%s10 + $0x8] sm:$0xf]
        %v3612 = vld [vmem:[%s10 + $0xc] sm:$0xf]
        %v3613 = vld [vmem:[%s10 + $0x10] sm:$0xf]
        %v3614 = vld [vmem:[%s10 + $0x14] sm:$0xf]
        %v3615 = vld [vmem:[%s10 + $0x18] sm:$0xf]
        %v3616 = vld [vmem:[%s10 + $0x1c] sm:$0xf]
        %v3617 = vld [vmem:[%s10 + $0x20] sm:$0xf]
        %v3618 = vld [vmem:[%s10 + $0x24] sm:$0xf]
        %v3619 = vld [vmem:[%s10 + $0x28] sm:$0xf]
        %v3620 = vld [vmem:[%s10 + $0x2c] sm:$0xf]
        %v3621 = vld [vmem:[%s10 + $0x30] sm:$0xf]
        %v3622 = vld [vmem:[%s10 + $0x34] sm:$0xf]
        %v3623 = vld [vmem:[%s10 + $0x38] sm:$0xf]
        %v3624 = vld [vmem:[%s10 + $0x3c] sm:$0xf]
        %v3625 = vld [vmem:[%s11] sm:$0x1]
        %v3627 = vlaneseq
        %v3628 = vshrl.u32 %v3627, 7
        %v3629 = vsub.s32 0, %v3628
        %v3630 = vrot.slane %v3625, %v3629
        %v3648 = vunpack.c.l.b16 %v3609
        %v3649 = vunpack.c.l.b16 %v3610
        %v3650 = vunpack.c.l.b16 %v3611
        %v3651 = vunpack.c.l.b16 %v3612
        %v3652 = vunpack.c.l.b16 %v3613
        %v3653 = vunpack.c.l.b16 %v3614
        %v3654 = vunpack.c.l.b16 %v3615
        %v3655 = vunpack.c.l.b16 %v3616
        %v3656 = vunpack.c.l.b16 %v3617
        %v3657 = vunpack.c.l.b16 %v3618
        %v3658 = vunpack.c.l.b16 %v3619
        %v3659 = vunpack.c.l.b16 %v3620
        %v3660 = vunpack.c.l.b16 %v3621
        %v3661 = vunpack.c.l.b16 %v3622
        %v3662 = vunpack.c.l.b16 %v3623
        %v3663 = vunpack.c.l.b16 %v3624
        %v3664 = vpack.c.b16 %v3649, %v3648
        %v3665 = vpack.c.b16 %v3651, %v3650
        %v3666 = vpack.c.b16 %v3653, %v3652
        %v3667 = vpack.c.b16 %v3655, %v3654
        %v3668 = vpack.c.b16 %v3657, %v3656
        %v3669 = vpack.c.b16 %v3659, %v3658
        %v3670 = vpack.c.b16 %v3661, %v3660
        %v3671 = vpack.c.b16 %v3663, %v3662
        %3680 = vmatprep.subr.bf16.mxu0 0
        %3681 = vmatpush1.bf16.msra.mxu0 %v3664
        %3682 = vmatprep.subr.bf16.mxu0 0
        %3683 = vmatpush1.bf16.msra.mxu0 %v3665
        %3684 = vmatprep.subr.bf16.mxu0 0
        %3685 = vmatpush1.bf16.msra.mxu0 %v3666
        %3686 = vmatprep.subr.bf16.mxu0 0
        %3687 = vmatpush1.bf16.msra.mxu0 %v3667
        %3688 = vmatprep.subr.bf16.mxu0 0
        %3689 = vmatpush1.bf16.msra.mxu0 %v3668
        %3690 = vmatprep.subr.bf16.mxu0 0
        %3691 = vmatpush1.bf16.msra.mxu0 %v3669
        %3692 = vmatprep.subr.bf16.mxu0 0
        %3693 = vmatpush1.bf16.msra.mxu0 %v3670
        %3694 = vmatprep.subr.bf16.mxu0 0
        %3695 = vmatpush1.bf16.msra.mxu0 %v3671
        %3696 = vmatprep.subr.bf16.mxu0 0
        %3697 = vmatpush1.bf16.msra.mxu0 0
        %3698 = vmatprep.subr.bf16.mxu0 0
        %3699 = vmatpush1.bf16.msra.mxu0 0
        %3700 = vmatprep.subr.bf16.mxu0 0
        %3701 = vmatpush1.bf16.msra.mxu0 0
        %3702 = vmatprep.subr.bf16.mxu0 0
        %3703 = vmatpush1.bf16.msra.mxu0 0
        %3704 = vmatprep.subr.bf16.mxu0 0
        %3705 = vmatpush1.bf16.msra.mxu0 0
        %3706 = vmatprep.subr.bf16.mxu0 0
        %3707 = vmatpush1.bf16.msra.mxu0 0
        %3708 = vmatprep.subr.bf16.mxu0 0
        %3709 = vmatpush1.bf16.msra.mxu0 0
        %3710 = vmatprep.subr.bf16.mxu0 0
        %3711 = vmatpush1.bf16.msra.mxu0 0
        %3712 = vmatprep.mubr.bf16.mxu0 0
        %3713 = vmatmul.mubr.bf16.gmra.mrb[0].mxu0 %v3593
        %v3714 = vpop.f32.mrb[0].mxu0
        %v3715 = vadd.f32 %v3630, %v3714
        %v3716 = vpop.f32.mrb[0].mxu0
        %v3717 = vpop.f32.mrb[0].mxu0
        %v3718 = vadd.f32 %v3630, %v3717
        %v3719 = vpop.f32.mrb[0].mxu0
        %3720 = vmatprep.mubr.bf16.mxu0 0
        %3721 = vmatmul.mubr.bf16.gmra.mrb[0].mxu0 %v3594
        %v3722 = vpop.f32.mrb[0].mxu0
        %v3723 = vadd.f32 %v3630, %v3722
        %v3724 = vpop.f32.mrb[0].mxu0
        %v3725 = vpop.f32.mrb[0].mxu0
        %v3726 = vadd.f32 %v3630, %v3725
        %v3727 = vpop.f32.mrb[0].mxu0
        %3728 = vmatprep.mubr.bf16.mxu0 0
        %3729 = vmatmul.mubr.bf16.gmra.mrb[0].mxu0 %v3595
        %v3730 = vpop.f32.mrb[0].mxu0
        %v3731 = vadd.f32 %v3630, %v3730
        %v3732 = vpop.f32.mrb[0].mxu0
        %v3733 = vpop.f32.mrb[0].mxu0
        %v3734 = vadd.f32 %v3630, %v3733
        %v3735 = vpop.f32.mrb[0].mxu0
        %3736 = vmatprep.mubr.bf16.mxu0 0
        %3737 = vmatmul.mubr.bf16.gmra.mrb[0].mxu0 %v3596
        %v3738 = vpop.f32.mrb[0].mxu0
        %v3739 = vadd.f32 %v3630, %v3738
        %v3740 = vpop.f32.mrb[0].mxu0
        %v3741 = vpop.f32.mrb[0].mxu0
        %v3742 = vadd.f32 %v3630, %v3741
        %v3743 = vpop.f32.mrb[0].mxu0
        %3744 = vmatprep.mubr.bf16.mxu0 0
        %3745 = vmatmul.mubr.bf16.gmra.mrb[0].mxu0 %v3597
        %v3746 = vpop.f32.mrb[0].mxu0
        %v3747 = vadd.f32 %v3630, %v3746
        %v3748 = vpop.f32.mrb[0].mxu0
        %v3749 = vpop.f32.mrb[0].mxu0
        %v3750 = vadd.f32 %v3630, %v3749
        %v3751 = vpop.f32.mrb[0].mxu0
        %3752 = vmatprep.mubr.bf16.mxu0 0
        %3753 = vmatmul.mubr.bf16.gmra.mrb[0].mxu0 %v3598
        %v3754 = vpop.f32.mrb[0].mxu0
        %v3755 = vadd.f32 %v3630, %v3754
        %v3756 = vpop.f32.mrb[0].mxu0
        %v3757 = vpop.f32.mrb[0].mxu0
        %v3758 = vadd.f32 %v3630, %v3757
        %v3759 = vpop.f32.mrb[0].mxu0
        %3760 = vmatprep.mubr.bf16.mxu0 0
        %3761 = vmatmul.mubr.bf16.gmra.mrb[0].mxu0 %v3599
        %v3762 = vpop.f32.mrb[0].mxu0
        %v3763 = vadd.f32 %v3630, %v3762
        %v3764 = vpop.f32.mrb[0].mxu0
        %v3765 = vpop.f32.mrb[0].mxu0
        %v3766 = vadd.f32 %v3630, %v3765
        %v3767 = vpop.f32.mrb[0].mxu0
        %3768 = vmatprep.mubr.bf16.mxu0 0
        %3769 = vmatmul.mubr.bf16.gmra.mrb[0].mxu0 %v3600
        %v3770 = vpop.f32.mrb[0].mxu0
        %v3771 = vadd.f32 %v3630, %v3770
        %v3772 = vpop.f32.mrb[0].mxu0
        %v3773 = vpop.f32.mrb[0].mxu0
        %v3774 = vadd.f32 %v3630, %v3773
        %v3775 = vpop.f32.mrb[0].mxu0
        %3776 = vmatprep.mubr.bf16.mxu0 0
        %3777 = vmatmul.mubr.bf16.gmra.mrb[0].mxu0 %v3601
        %v3778 = vpop.f32.mrb[0].mxu0
        %v3779 = vadd.f32 %v3630, %v3778
        %v3780 = vpop.f32.mrb[0].mxu0
        %v3781 = vpop.f32.mrb[0].mxu0
        %v3782 = vadd.f32 %v3630, %v3781
        %v3783 = vpop.f32.mrb[0].mxu0
        %3784 = vmatprep.mubr.bf16.mxu0 0
        %3785 = vmatmul.mubr.bf16.gmra.mrb[0].mxu0 %v3602
        %v3786 = vpop.f32.mrb[0].mxu0
        %v3787 = vadd.f32 %v3630, %v3786
        %v3788 = vpop.f32.mrb[0].mxu0
        %v3789 = vpop.f32.mrb[0].mxu0
        %v3790 = vadd.f32 %v3630, %v3789
        %v3791 = vpop.f32.mrb[0].mxu0
        %3792 = vmatprep.mubr.bf16.mxu0 0
        %3793 = vmatmul.mubr.bf16.gmra.mrb[0].mxu0 %v3603
        %v3794 = vpop.f32.mrb[0].mxu0
        %v3795 = vadd.f32 %v3630, %v3794
        %v3796 = vpop.f32.mrb[0].mxu0
        %v3797 = vpop.f32.mrb[0].mxu0
        %v3798 = vadd.f32 %v3630, %v3797
        %v3799 = vpop.f32.mrb[0].mxu0
        %3800 = vmatprep.mubr.bf16.mxu0 0
        %3801 = vmatmul.mubr.bf16.gmra.mrb[0].mxu0 %v3604
        %v3802 = vpop.f32.mrb[0].mxu0
        %v3803 = vadd.f32 %v3630, %v3802
        %v3804 = vpop.f32.mrb[0].mxu0
        %v3805 = vpop.f32.mrb[0].mxu0
        %v3806 = vadd.f32 %v3630, %v3805
        %v3807 = vpop.f32.mrb[0].mxu0
        %3808 = vmatprep.mubr.bf16.mxu0 0
        %3809 = vmatmul.mubr.bf16.gmra.mrb[0].mxu0 %v3605
        %v3810 = vpop.f32.mrb[0].mxu0
        %v3811 = vadd.f32 %v3630, %v3810
        %v3812 = vpop.f32.mrb[0].mxu0
        %v3813 = vpop.f32.mrb[0].mxu0
        %v3814 = vadd.f32 %v3630, %v3813
        %v3815 = vpop.f32.mrb[0].mxu0
        %3816 = vmatprep.mubr.bf16.mxu0 0
        %3817 = vmatmul.mubr.bf16.gmra.mrb[0].mxu0 %v3606
        %v3818 = vpop.f32.mrb[0].mxu0
        %v3819 = vadd.f32 %v3630, %v3818
        %v3820 = vpop.f32.mrb[0].mxu0
        %v3821 = vpop.f32.mrb[0].mxu0
        %v3822 = vadd.f32 %v3630, %v3821
        %v3823 = vpop.f32.mrb[0].mxu0
        %3824 = vmatprep.mubr.bf16.mxu0 0
        %3825 = vmatmul.mubr.bf16.gmra.mrb[0].mxu0 %v3607
        %v3826 = vpop.f32.mrb[0].mxu0
        %v3827 = vadd.f32 %v3630, %v3826
        %v3828 = vpop.f32.mrb[0].mxu0
        %v3829 = vpop.f32.mrb[0].mxu0
        %v3830 = vadd.f32 %v3630, %v3829
        %v3831 = vpop.f32.mrb[0].mxu0
        %3832 = vmatprep.mubr.bf16.mxu0 0
        %3833 = vmatmul.mubr.bf16.gmra.mrb[0].mxu0 %v3608
        %v3834 = vpop.f32.mrb[0].mxu0
        %v3835 = vadd.f32 %v3630, %v3834
        %v3836 = vpop.f32.mrb[0].mxu0
        %v3837 = vpop.f32.mrb[0].mxu0
        %v3838 = vadd.f32 %v3630, %v3837
        %v3839 = vpop.f32.mrb[0].mxu0
        %3840 = vdwg.mxu0
        %3841 = vmax.xlane.f32.xlu0 %v3715
        %v3842 = vpop.xlane.xlu0 %3841
        %3843 = vmax.xlane.f32.xlu0 %v3718
        %v3844 = vpop.xlane.xlu0 %3843
        %3845 = vmax.xlane.f32.xlu0 %v3723
        %v3846 = vpop.xlane.xlu0 %3845
        %3847 = vmax.xlane.f32.xlu0 %v3726
        %v3848 = vpop.xlane.xlu0 %3847
        %3849 = vmax.xlane.f32.xlu0 %v3731
        %v3850 = vpop.xlane.xlu0 %3849
        %3851 = vmax.xlane.f32.xlu0 %v3734
        %v3852 = vpop.xlane.xlu0 %3851
        %3853 = vmax.xlane.f32.xlu0 %v3739
        %v3854 = vpop.xlane.xlu0 %3853
        %3855 = vmax.xlane.f32.xlu0 %v3742
        %v3856 = vpop.xlane.xlu0 %3855
        %3857 = vmax.xlane.f32.xlu0 %v3747
        %v3858 = vpop.xlane.xlu0 %3857
        %3859 = vmax.xlane.f32.xlu0 %v3750
        %v3860 = vpop.xlane.xlu0 %3859
        %3861 = vmax.xlane.f32.xlu0 %v3755
        %v3862 = vpop.xlane.xlu0 %3861
        %3863 = vmax.xlane.f32.xlu0 %v3758
        %v3864 = vpop.xlane.xlu0 %3863
        %3865 = vmax.xlane.f32.xlu0 %v3763
        %v3866 = vpop.xlane.xlu0 %3865
        %3867 = vmax.xlane.f32.xlu0 %v3766
        %v3868 = vpop.xlane.xlu0 %3867
        %3869 = vmax.xlane.f32.xlu0 %v3771
        %v3870 = vpop.xlane.xlu0 %3869
        %3871 = vmax.xlane.f32.xlu0 %v3774
        %v3872 = vpop.xlane.xlu0 %3871
        %3873 = vmax.xlane.f32.xlu0 %v3779
        %v3874 = vpop.xlane.xlu0 %3873
        %3875 = vmax.xlane.f32.xlu0 %v3782
        %v3876 = vpop.xlane.xlu0 %3875
        %3877 = vmax.xlane.f32.xlu0 %v3787
        %v3878 = vpop.xlane.xlu0 %3877
        %3879 = vmax.xlane.f32.xlu0 %v3790
        %v3880 = vpop.xlane.xlu0 %3879
        %3881 = vmax.xlane.f32.xlu0 %v3795
        %v3882 = vpop.xlane.xlu0 %3881
        %3883 = vmax.xlane.f32.xlu0 %v3798
        %v3884 = vpop.xlane.xlu0 %3883
        %3885 = vmax.xlane.f32.xlu0 %v3803
        %v3886 = vpop.xlane.xlu0 %3885
        %3887 = vmax.xlane.f32.xlu0 %v3806
        %v3888 = vpop.xlane.xlu0 %3887
        %3889 = vmax.xlane.f32.xlu0 %v3811
        %v3890 = vpop.xlane.xlu0 %3889
        %3891 = vmax.xlane.f32.xlu0 %v3814
        %v3892 = vpop.xlane.xlu0 %3891
        %3893 = vmax.xlane.f32.xlu0 %v3819
        %v3894 = vpop.xlane.xlu0 %3893
        %3895 = vmax.xlane.f32.xlu0 %v3822
        %v3896 = vpop.xlane.xlu0 %3895
        %3897 = vmax.xlane.f32.xlu0 %v3827
        %v3898 = vpop.xlane.xlu0 %3897
        %3899 = vmax.xlane.f32.xlu0 %v3830
        %v3900 = vpop.xlane.xlu0 %3899
        %3901 = vmax.xlane.f32.xlu0 %v3835
        %v3902 = vpop.xlane.xlu0 %3901
        %3903 = vmax.xlane.f32.xlu0 %v3838
        %v3904 = vpop.xlane.xlu0 %3903
        %v3905 = vsub.f32 %v3715, %v3842
        %v3906 = vsub.f32 %v3718, %v3844
        %v3907 = vsub.f32 %v3723, %v3846
        %v3908 = vsub.f32 %v3726, %v3848
        %v3909 = vsub.f32 %v3731, %v3850
        %v3910 = vsub.f32 %v3734, %v3852
        %v3911 = vsub.f32 %v3739, %v3854
        %v3912 = vsub.f32 %v3742, %v3856
        %v3913 = vsub.f32 %v3747, %v3858
        %v3914 = vsub.f32 %v3750, %v3860
        %v3915 = vsub.f32 %v3755, %v3862
        %v3916 = vsub.f32 %v3758, %v3864
        %v3917 = vsub.f32 %v3763, %v3866
        %v3918 = vsub.f32 %v3766, %v3868
        %v3919 = vsub.f32 %v3771, %v3870
        %v3920 = vsub.f32 %v3774, %v3872
        %v3921 = vsub.f32 %v3779, %v3874
        %v3922 = vsub.f32 %v3782, %v3876
        %v3923 = vsub.f32 %v3787, %v3878
        %v3924 = vsub.f32 %v3790, %v3880
        %v3925 = vsub.f32 %v3795, %v3882
        %v3926 = vsub.f32 %v3798, %v3884
        %v3927 = vsub.f32 %v3803, %v3886
        %v3928 = vsub.f32 %v3806, %v3888
        %v3929 = vsub.f32 %v3811, %v3890
        %v3930 = vsub.f32 %v3814, %v3892
        %v3931 = vsub.f32 %v3819, %v3894
        %v3932 = vsub.f32 %v3822, %v3896
        %v3933 = vsub.f32 %v3827, %v3898
        %v3934 = vsub.f32 %v3830, %v3900
        %v3935 = vsub.f32 %v3835, %v3902
        %v3936 = vsub.f32 %v3838, %v3904
        %v3937 = vmul.f32 %v3905, 1.442695
        %v3938 = vpow.pop %v3937
        %v3939 = vmul.f32 %v3906, 1.442695
        %v3940 = vpow.pop %v3939
        %v3941 = vmul.f32 %v3907, 1.442695
        %v3942 = vpow.pop %v3941
        %v3943 = vmul.f32 %v3908, 1.442695
        %v3944 = vpow.pop %v3943
        %v3945 = vmul.f32 %v3909, 1.442695
        %v3946 = vpow.pop %v3945
        %v3947 = vmul.f32 %v3910, 1.442695
        %v3948 = vpow.pop %v3947
        %v3949 = vmul.f32 %v3911, 1.442695
        %v3950 = vpow.pop %v3949
        %v3951 = vmul.f32 %v3912, 1.442695
        %v3952 = vpow.pop %v3951
        %v3953 = vmul.f32 %v3913, 1.442695
        %v3954 = vpow.pop %v3953
        %v3955 = vmul.f32 %v3914, 1.442695
        %v3956 = vpow.pop %v3955
        %v3957 = vmul.f32 %v3915, 1.442695
        %v3958 = vpow.pop %v3957
        %v3959 = vmul.f32 %v3916, 1.442695
        %v3960 = vpow.pop %v3959
        %v3961 = vmul.f32 %v3917, 1.442695
        %v3962 = vpow.pop %v3961
        %v3963 = vmul.f32 %v3918, 1.442695
        %v3964 = vpow.pop %v3963
        %v3965 = vmul.f32 %v3919, 1.442695
        %v3966 = vpow.pop %v3965
        %v3967 = vmul.f32 %v3920, 1.442695
        %v3968 = vpow.pop %v3967
        %v3969 = vmul.f32 %v3921, 1.442695
        %v3970 = vpow.pop %v3969
        %v3971 = vmul.f32 %v3922, 1.442695
        %v3972 = vpow.pop %v3971
        %v3973 = vmul.f32 %v3923, 1.442695
        %v3974 = vpow.pop %v3973
        %v3975 = vmul.f32 %v3924, 1.442695
        %v3976 = vpow.pop %v3975
        %v3977 = vmul.f32 %v3925, 1.442695
        %v3978 = vpow.pop %v3977
        %v3979 = vmul.f32 %v3926, 1.442695
        %v3980 = vpow.pop %v3979
        %v3981 = vmul.f32 %v3927, 1.442695
        %v3982 = vpow.pop %v3981
        %v3983 = vmul.f32 %v3928, 1.442695
        %v3984 = vpow.pop %v3983
        %v3985 = vmul.f32 %v3929, 1.442695
        %v3986 = vpow.pop %v3985
        %v3987 = vmul.f32 %v3930, 1.442695
        %v3988 = vpow.pop %v3987
        %v3989 = vmul.f32 %v3931, 1.442695
        %v3990 = vpow.pop %v3989
        %v3991 = vmul.f32 %v3932, 1.442695
        %v3992 = vpow.pop %v3991
        %v3993 = vmul.f32 %v3933, 1.442695
        %v3994 = vpow.pop %v3993
        %v3995 = vmul.f32 %v3934, 1.442695
        %v3996 = vpow.pop %v3995
        %v3997 = vmul.f32 %v3935, 1.442695
        %v3998 = vpow.pop %v3997
        %v3999 = vmul.f32 %v3936, 1.442695
        %v4000 = vpow.pop %v3999
        %4001 = vadd.xlane.f32.xlu0 %v3938
        %v4002 = vpop.xlane.xlu0 %4001
        %4003 = vadd.xlane.f32.xlu0 %v3940
        %v4004 = vpop.xlane.xlu0 %4003
        %4005 = vadd.xlane.f32.xlu0 %v3942
        %v4006 = vpop.xlane.xlu0 %4005
        %4007 = vadd.xlane.f32.xlu0 %v3944
        %v4008 = vpop.xlane.xlu0 %4007
        %4009 = vadd.xlane.f32.xlu0 %v3946
        %v4010 = vpop.xlane.xlu0 %4009
        %4011 = vadd.xlane.f32.xlu0 %v3948
        %v4012 = vpop.xlane.xlu0 %4011
        %4013 = vadd.xlane.f32.xlu0 %v3950
        %v4014 = vpop.xlane.xlu0 %4013
        %4015 = vadd.xlane.f32.xlu0 %v3952
        %v4016 = vpop.xlane.xlu0 %4015
        %4017 = vadd.xlane.f32.xlu0 %v3954
        %v4018 = vpop.xlane.xlu0 %4017
        %4019 = vadd.xlane.f32.xlu0 %v3956
        %v4020 = vpop.xlane.xlu0 %4019
        %4021 = vadd.xlane.f32.xlu0 %v3958
        %v4022 = vpop.xlane.xlu0 %4021
        %4023 = vadd.xlane.f32.xlu0 %v3960
        %v4024 = vpop.xlane.xlu0 %4023
        %4025 = vadd.xlane.f32.xlu0 %v3962
        %v4026 = vpop.xlane.xlu0 %4025
        %4027 = vadd.xlane.f32.xlu0 %v3964
        %v4028 = vpop.xlane.xlu0 %4027
        %4029 = vadd.xlane.f32.xlu0 %v3966
        %v4030 = vpop.xlane.xlu0 %4029
        %4031 = vadd.xlane.f32.xlu0 %v3968
        %v4032 = vpop.xlane.xlu0 %4031
        %4033 = vadd.xlane.f32.xlu0 %v3970
        %v4034 = vpop.xlane.xlu0 %4033
        %4035 = vadd.xlane.f32.xlu0 %v3972
        %v4036 = vpop.xlane.xlu0 %4035
        %4037 = vadd.xlane.f32.xlu0 %v3974
        %v4038 = vpop.xlane.xlu0 %4037
        %4039 = vadd.xlane.f32.xlu0 %v3976
        %v4040 = vpop.xlane.xlu0 %4039
        %4041 = vadd.xlane.f32.xlu0 %v3978
        %v4042 = vpop.xlane.xlu0 %4041
        %4043 = vadd.xlane.f32.xlu0 %v3980
        %v4044 = vpop.xlane.xlu0 %4043
        %4045 = vadd.xlane.f32.xlu0 %v3982
        %v4046 = vpop.xlane.xlu0 %4045
        %4047 = vadd.xlane.f32.xlu0 %v3984
        %v4048 = vpop.xlane.xlu0 %4047
        %4049 = vadd.xlane.f32.xlu0 %v3986
        %v4050 = vpop.xlane.xlu0 %4049
        %4051 = vadd.xlane.f32.xlu0 %v3988
        %v4052 = vpop.xlane.xlu0 %4051
        %4053 = vadd.xlane.f32.xlu0 %v3990
        %v4054 = vpop.xlane.xlu0 %4053
        %4055 = vadd.xlane.f32.xlu0 %v3992
        %v4056 = vpop.xlane.xlu0 %4055
        %4057 = vadd.xlane.f32.xlu0 %v3994
        %v4058 = vpop.xlane.xlu0 %4057
        %4059 = vadd.xlane.f32.xlu0 %v3996
        %v4060 = vpop.xlane.xlu0 %4059
        %4061 = vadd.xlane.f32.xlu0 %v3998
        %v4062 = vpop.xlane.xlu0 %4061
        %4063 = vadd.xlane.f32.xlu0 %v4000
        %v4064 = vpop.xlane.xlu0 %4063
        %v4065 = vlog2.pop %v4002
        %v4066 = vmul.f32 %v4065, 0.6931472
        %v4067 = vlog2.pop %v4004
        %v4068 = vmul.f32 %v4067, 0.6931472
        %v4069 = vlog2.pop %v4006
        %v4070 = vmul.f32 %v4069, 0.6931472
        %v4071 = vlog2.pop %v4008
        %v4072 = vmul.f32 %v4071, 0.6931472
        %v4073 = vlog2.pop %v4010
        %v4074 = vmul.f32 %v4073, 0.6931472
        %v4075 = vlog2.pop %v4012
        %v4076 = vmul.f32 %v4075, 0.6931472
        %v4077 = vlog2.pop %v4014
        %v4078 = vmul.f32 %v4077, 0.6931472
        %v4079 = vlog2.pop %v4016
        %v4080 = vmul.f32 %v4079, 0.6931472
        %v4081 = vlog2.pop %v4018
        %v4082 = vmul.f32 %v4081, 0.6931472
        %v4083 = vlog2.pop %v4020
        %v4084 = vmul.f32 %v4083, 0.6931472
        %v4085 = vlog2.pop %v4022
        %v4086 = vmul.f32 %v4085, 0.6931472
        %v4087 = vlog2.pop %v4024
        %v4088 = vmul.f32 %v4087, 0.6931472
        %v4089 = vlog2.pop %v4026
        %v4090 = vmul.f32 %v4089, 0.6931472
        %v4091 = vlog2.pop %v4028
        %v4092 = vmul.f32 %v4091, 0.6931472
        %v4093 = vlog2.pop %v4030
        %v4094 = vmul.f32 %v4093, 0.6931472
        %v4095 = vlog2.pop %v4032
        %v4096 = vmul.f32 %v4095, 0.6931472
        %v4097 = vlog2.pop %v4034
        %v4098 = vmul.f32 %v4097, 0.6931472
        %v4099 = vlog2.pop %v4036
        %v4100 = vmul.f32 %v4099, 0.6931472
        %v4101 = vlog2.pop %v4038
        %v4102 = vmul.f32 %v4101, 0.6931472
        %v4103 = vlog2.pop %v4040
        %v4104 = vmul.f32 %v4103, 0.6931472
        %v4105 = vlog2.pop %v4042
        %v4106 = vmul.f32 %v4105, 0.6931472
        %v4107 = vlog2.pop %v4044
        %v4108 = vmul.f32 %v4107, 0.6931472
        %v4109 = vlog2.pop %v4046
        %v4110 = vmul.f32 %v4109, 0.6931472
        %v4111 = vlog2.pop %v4048
        %v4112 = vmul.f32 %v4111, 0.6931472
        %v4113 = vlog2.pop %v4050
        %v4114 = vmul.f32 %v4113, 0.6931472
        %v4115 = vlog2.pop %v4052
        %v4116 = vmul.f32 %v4115, 0.6931472
        %v4117 = vlog2.pop %v4054
        %v4118 = vmul.f32 %v4117, 0.6931472
        %v4119 = vlog2.pop %v4056
        %v4120 = vmul.f32 %v4119, 0.6931472
        %v4121 = vlog2.pop %v4058
        %v4122 = vmul.f32 %v4121, 0.6931472
        %v4123 = vlog2.pop %v4060
        %v4124 = vmul.f32 %v4123, 0.6931472
        %v4125 = vlog2.pop %v4062
        %v4126 = vmul.f32 %v4125, 0.6931472
        %v4127 = vlog2.pop %v4064
        %v4128 = vmul.f32 %v4127, 0.6931472
        %v4129 = vsub.f32 %v3905, %v4066
        %v4130 = vsub.f32 %v3906, %v4068
        %v4131 = vsub.f32 %v3907, %v4070
        %v4132 = vsub.f32 %v3908, %v4072
        %v4133 = vsub.f32 %v3909, %v4074
        %v4134 = vsub.f32 %v3910, %v4076
        %v4135 = vsub.f32 %v3911, %v4078
        %v4136 = vsub.f32 %v3912, %v4080
        %v4137 = vsub.f32 %v3913, %v4082
        %v4138 = vsub.f32 %v3914, %v4084
        %v4139 = vsub.f32 %v3915, %v4086
        %v4140 = vsub.f32 %v3916, %v4088
        %v4141 = vsub.f32 %v3917, %v4090
        %v4142 = vsub.f32 %v3918, %v4092
        %v4143 = vsub.f32 %v3919, %v4094
        %v4144 = vsub.f32 %v3920, %v4096
        %v4145 = vsub.f32 %v3921, %v4098
        %v4146 = vsub.f32 %v3922, %v4100
        %v4147 = vsub.f32 %v3923, %v4102
        %v4148 = vsub.f32 %v3924, %v4104
        %v4149 = vsub.f32 %v3925, %v4106
        %v4150 = vsub.f32 %v3926, %v4108
        %v4151 = vsub.f32 %v3927, %v4110
        %v4152 = vsub.f32 %v3928, %v4112
        %v4153 = vsub.f32 %v3929, %v4114
        %v4154 = vsub.f32 %v3930, %v4116
        %v4155 = vsub.f32 %v3931, %v4118
        %v4156 = vsub.f32 %v3932, %v4120
        %v4157 = vsub.f32 %v3933, %v4122
        %v4158 = vsub.f32 %v3934, %v4124
        %v4159 = vsub.f32 %v3935, %v4126
        %v4160 = vsub.f32 %v3936, %v4128
        %4161 = vst [vmem:[%s407] sm:$0xff] %v4129
        %4162 = vst [vmem:[%s407 + $0x8] sm:$0xff] %v4130
        %4163 = vst [vmem:[%s407 + $0x10] sm:$0xff] %v4131
        %4164 = vst [vmem:[%s407 + $0x18] sm:$0xff] %v4132
        %4165 = vst [vmem:[%s407 + $0x20] sm:$0xff] %v4133
        %4166 = vst [vmem:[%s407 + $0x28] sm:$0xff] %v4134
        %4167 = vst [vmem:[%s407 + $0x30] sm:$0xff] %v4135
        %4168 = vst [vmem:[%s407 + $0x38] sm:$0xff] %v4136
        %4169 = vst [vmem:[%s407 + $0x40] sm:$0xff] %v4137
        %4170 = vst [vmem:[%s407 + $0x48] sm:$0xff] %v4138
        %4171 = vst [vmem:[%s407 + $0x50] sm:$0xff] %v4139
        %4172 = vst [vmem:[%s407 + $0x58] sm:$0xff] %v4140
        %4173 = vst [vmem:[%s407 + $0x60] sm:$0xff] %v4141
        %4174 = vst [vmem:[%s407 + $0x68] sm:$0xff] %v4142
        %4175 = vst [vmem:[%s407 + $0x70] sm:$0xff] %v4143
        %4176 = vst [vmem:[%s407 + $0x78] sm:$0xff] %v4144
        %4177 = vst [vmem:[%s407 + $0x80] sm:$0xff] %v4145
        %4178 = vst [vmem:[%s407 + $0x88] sm:$0xff] %v4146
        %4179 = vst [vmem:[%s407 + $0x90] sm:$0xff] %v4147
        %4180 = vst [vmem:[%s407 + $0x98] sm:$0xff] %v4148
        %4181 = vst [vmem:[%s407 + $0xa0] sm:$0xff] %v4149
        %4182 = vst [vmem:[%s407 + $0xa8] sm:$0xff] %v4150
        %4183 = vst [vmem:[%s407 + $0xb0] sm:$0xff] %v4151
        %4184 = vst [vmem:[%s407 + $0xb8] sm:$0xff] %v4152
        %4185 = vst [vmem:[%s407 + $0xc0] sm:$0xff] %v4153
        %4186 = vst [vmem:[%s407 + $0xc8] sm:$0xff] %v4154
        %4187 = vst [vmem:[%s407 + $0xd0] sm:$0xff] %v4155
        %4188 = vst [vmem:[%s407 + $0xd8] sm:$0xff] %v4156
        %4189 = vst [vmem:[%s407 + $0xe0] sm:$0xff] %v4157
        %4190 = vst [vmem:[%s407 + $0xe8] sm:$0xff] %v4158
        %4191 = vst [vmem:[%s407 + $0xf0] sm:$0xff] %v4159
        %4192 = vst [vmem:[%s407 + $0xf8] sm:$0xff] %v4160
        %s4193 = sand.u32 %s291, 1
        %s4194 = scalar_lea.sflag [#allocation3], %s4193
        %s4195 = sand.u32 %s291, 1
        %s4196 = smul.addr %s4195, 256
        %s4197 = scalar_lea.vmem [#allocation2], %s4196
        // Predicated region
        $region69: #{cbow_forward.1} parent=67 // pred_check
          %p4198 = pneg %p301
        $region70: #{cbow_forward.1} parent=67 // pred_check_branch
          %4200 = sbr.rel (%p4198) target = $region72
        $region71: #{cbow_forward.1} parent=67 // pred_region
          %s4201 = smul.u32 32, %s26
          %s4203 = ssub.s32 4096, 4096
          %4204 = vsyncadd %s4194, %s4203
          %s4205 = smul.addr %s4201, 128
          %s4206 = scalar_lea.hbm %s12, %s4205
          %s4207 = sshll.u32 %s4197, 4
          %s4208 = int_to_ptr.vmem [resolvable:$true] %s4207
          %4213 = dma.vmem_to_hbm [thread:$0]  %s4208, 4096, %s4206, %s4194, 128, 128, 8
        $region72: #{cbow_forward.1} parent=67 // pred_fallthru
          _
      $region68: #{cbow_forward.1} parent=5 // pred_fallthru
        _
      %p4214 = scmp.le.s32.totalorder 2, %s21
      // Predicated region
      $region73: #{cbow_forward.1} parent=5 // pred_check
        %p4215 = pneg %p4214
      $region74: #{cbow_forward.1} parent=5 // pred_check_branch
        %4217 = sbr.rel (%p4215) target = $region76
      $region75: #{cbow_forward.1} parent=5 // pred_region
        %s4218 = ssub.s32 %s21, 2
        // Predicated region
        $region77: #{cbow_forward.1} parent=75 // pred_check
          %p4219 = pneg %p307
        $region78: #{cbow_forward.1} parent=75 // pred_check_branch
          %4221 = sbr.rel (%p4219) target = $region80
        $region79: #{cbow_forward.1} parent=75 // pred_region
          %s4222 = sand.u32 %s292, 1
          %s4223 = scalar_lea.sflag [#allocation3], %s4222
          %s4224 = sand.u32 %s292, 1
          %s4225 = smul.addr %s4224, 256
          %s4226 = scalar_lea.vmem [#allocation2], %s4225
          %4227 = dma.done %s4223, 4096
        $region80: #{cbow_forward.1} parent=75 // pred_fallthru
          _
      $region76: #{cbow_forward.1} parent=5 // pred_fallthru
        _
    $region6: #{cbow_forward.1} parent=1 // loop_footer
      %s25 = sadd.s32 1, %s21
    $region7: #{cbow_forward.1} parent=1 // loop_footer_branch
      %20 = sbr.rel target = $region3
    $region8: #{cbow_forward.1} parent=1 // loop_exit
      _
    %4228 = vsyncpa [#allocation3], 1
    %s4229 = scalar_lea.sflag [#allocation3], 1
    %4230 = vsyncpa %s4229, 1

</llo_original>
